<compile_context>
chip_gen: v7x
topology: tpu7x:2x2x1
jax: 0.10.0
libtpu: 0.0.40
codegen_flags: <defaults>
</compile_context>

<pallas_src>
import functools

import jax
import jax.numpy as jnp
from jax.experimental import pallas as pl
from jax.experimental.pallas import tpu as pltpu

LATENT_DIM = 128
BN_EPS = 1e-5
TILE_M = 256                 # row tile for large-M layers
MXU_DTYPE = jnp.bfloat16     # MXU input dtype (accumulation stays f32)


# ---------------------------------------------------------------------------
# Pallas kernel: fused matmul + bias + activation
# ---------------------------------------------------------------------------
def _fused_matmul_kernel(x_ref, w_ref, b_ref, o_ref, *, act):
    y = jnp.dot(x_ref[...], w_ref[...], preferred_element_type=jnp.float32)
    y = y + b_ref[...]                       # folded bias (+ folded BN shift)
    if act == "leaky_relu":
        y = jnp.where(y > 0, y, 0.2 * y)     # LeakyReLU(0.2) per the spec
    elif act == "relu":
        y = jnp.maximum(y, 0.0)
    elif act == "tanh":
        y = jnp.tanh(y)
    o_ref[...] = y.astype(o_ref.dtype)


def fused_matmul(x, w, b, act="none", out_dtype=jnp.float32):
    """act(x @ w + b); b broadcasts over rows.  No K/N padding."""
    M, K = x.shape
    N = w.shape[1]
    if M > TILE_M:
        tile_m = TILE_M
        Mp = pl.cdiv(M, tile_m) * tile_m
        if Mp != M:
            x = jnp.pad(x, ((0, Mp - M), (0, 0)))
    else:
        tile_m, Mp = M, M

    xc = x.astype(MXU_DTYPE)
    wc = w.astype(MXU_DTYPE)
    b2 = b.reshape(1, N).astype(jnp.float32)

    out = pl.pallas_call(
        functools.partial(_fused_matmul_kernel, act=act),
        out_shape=jax.ShapeDtypeStruct((Mp, N), out_dtype),
        grid=(Mp // tile_m,),
        in_specs=[
            pl.BlockSpec((tile_m, K), lambda i: (i, 0)),
            pl.BlockSpec((K, N), lambda i: (0, 0)),
            pl.BlockSpec((1, N), lambda i: (0, 0)),
        ],
        out_specs=pl.BlockSpec((tile_m, N), lambda i: (i, 0)),
        compiler_params=pltpu.CompilerParams(
            dimension_semantics=("parallel",)),
    )(xc, wc, b2)
    return out[:M] if Mp != M else out


# ---------------------------------------------------------------------------
# Host-side glue: im2col, conv, sub-pixel conv-transpose, BN folding
# ---------------------------------------------------------------------------
def im2col(x_nhwc, k, stride, pad_lo, pad_hi):
    N, H, W, C = x_nhwc.shape
    xp = jnp.pad(x_nhwc, ((0, 0), (pad_lo, pad_hi), (pad_lo, pad_hi), (0, 0)))
    Ho = (H + pad_lo + pad_hi - k) // stride + 1
    Wo = (W + pad_lo + pad_hi - k) // stride + 1
    cols = []
    for di in range(k):
        for dj in range(k):
            cols.append(xp[:, di:di + Ho * stride:stride,
                           dj:dj + Wo * stride:stride, :])
    patches = jnp.concatenate(cols, axis=-1)          # feature order (di, dj, C)
    return patches.reshape(N * Ho * Wo, k * k * C), (N, Ho, Wo)


def conv2d(x_nhwc, w_oihw, b, stride, pad, act, out_dtype=MXU_DTYPE):
    Cout, _, k, _ = w_oihw.shape
    patches, (N, Ho, Wo) = im2col(x_nhwc, k, stride, pad, pad)
    wmat = jnp.transpose(w_oihw, (2, 3, 1, 0)).reshape(-1, Cout)  # (kh,kw,Cin,Cout)
    y = fused_matmul(patches, wmat, b, act, out_dtype=out_dtype)
    return y.reshape(N, Ho, Wo, Cout)


# (output_parity r, window_offset a) -> kernel tap index; (0, 1) contributes nothing.
_TAP = {(0, 0): 1, (1, 0): 2, (1, 1): 0}


def _subpixel_weight(w_iohw, bias):
    """ConvTranspose2d(k=3, s=2, p=1, op=1) as one k=2 stride-1 matmul.

    Rows ordered (a, b, Cin) to match im2col(k=2, pad=(0,1)); columns ordered
    (r, c, Cout) where (r, c) is the output sub-pixel (depth-to-space after).
    """
    Cin, Cout = w_iohw.shape[0], w_iohw.shape[1]
    Wm = jnp.zeros((2, 2, Cin, 2, 2, Cout), w_iohw.dtype)
    for a in (0, 1):
        for bb in (0, 1):
            for r in (0, 1):
                for c in (0, 1):
                    di = _TAP.get((r, a))
                    dj = _TAP.get((c, bb))
                    if di is None or dj is None:
                        continue
                    Wm = Wm.at[a, bb, :, r, c, :].set(w_iohw[:, :, di, dj])
    return Wm.reshape(4 * Cin, 4 * Cout), jnp.tile(bias, 4)


def conv_transpose2d_s2(x_nhwc, w_iohw, b, act, out_dtype=MXU_DTYPE):
    N, H, W, _ = x_nhwc.shape
    Cout = w_iohw.shape[1]
    patches, _ = im2col(x_nhwc, 2, 1, 0, 1)            # (N*H*W, 4*Cin)
    wmat, bvec = _subpixel_weight(w_iohw, b)
    y = fused_matmul(patches, wmat, bvec, act, out_dtype=out_dtype)
    y = y.reshape(N, H, W, 2, 2, Cout)                 # (n, ti, tj, r, c, cout)
    return jnp.transpose(y, (0, 1, 3, 2, 4, 5)).reshape(N, 2 * H, 2 * W, Cout)


def _bn_scale_shift(bn):
    s = bn["gamma"] / jnp.sqrt(bn["var"] + BN_EPS)
    t = bn["beta"] - bn["mean"] * s
    return s, t


def fold_bn_conv(w_oihw, b, bn):
    s, t = _bn_scale_shift(bn)
    return w_oihw * s[:, None, None, None], b * s + t


def fold_bn_deconv(w_iohw, b, bn):
    s, t = _bn_scale_shift(bn)
    return w_iohw * s[None, :, None, None], b * s + t


# ---------------------------------------------------------------------------
# Parameter construction (deterministic)
# ---------------------------------------------------------------------------
def init_params(key):
    it = iter(jax.random.split(key, 40))   # 38 draws needed
    p = {}

    def w(shape, scale=0.05):
        return scale * jax.random.normal(next(it), shape, jnp.float32)

    def bn(c):
        return dict(
            gamma=1.0 + 0.1 * jax.random.normal(next(it), (c,), jnp.float32),
            beta=0.1 * jax.random.normal(next(it), (c,), jnp.float32),
            mean=0.1 * jax.random.normal(next(it), (c,), jnp.float32),
            var=0.5 + jax.random.uniform(next(it), (c,), jnp.float32),
        )

    # encoder convs (Conv2d weight: (Cout, Cin, k, k))
    p["e1_w"], p["e1_b"], p["e1_bn"] = w((32, 3, 3, 3)), w((32,)), bn(32)
    p["e2_w"], p["e2_b"], p["e2_bn"] = w((64, 32, 3, 3)), w((64,)), bn(64)
    p["e3_w"], p["e3_b"], p["e3_bn"] = w((128, 64, 3, 3)), w((128,)), bn(128)
    # fc heads (Linear weight: (out, in))
    p["mu_w"], p["mu_b"] = w((LATENT_DIM, 128 * 4 * 4)), w((LATENT_DIM,))
    p["lv_w"], p["lv_b"] = w((LATENT_DIM, 128 * 4 * 4)), w((LATENT_DIM,))
    p["di_w"], p["di_b"] = w((128 * 4 * 4, LATENT_DIM)), w((128 * 4 * 4,))
    # decoder conv-transposes (ConvTranspose2d weight: (Cin, Cout, k, k))
    p["d1_w"], p["d1_b"], p["d1_bn"] = w((128, 64, 3, 3)), w((64,)), bn(64)
    p["d2_w"], p["d2_b"], p["d2_bn"] = w((64, 32, 3, 3)), w((32,)), bn(32)
    p["d3_w"], p["d3_b"] = w((32, 3, 3, 3)), w((3,))
    return p


# ---------------------------------------------------------------------------
# VAE forward (eval-mode semantics)
# ---------------------------------------------------------------------------
def vae_forward(params, x_nchw):
    p = params
    # NCHW -> NHWC; cast to MXU dtype once so every im2col intermediate is bf16.
    x = jnp.transpose(x_nchw, (0, 2, 3, 1)).astype(MXU_DTYPE)

    # encoder (BN folded into conv weights/bias); intermediates stay bf16
    w, b = fold_bn_conv(p["e1_w"], p["e1_b"], p["e1_bn"])
    x = conv2d(x, w, b, 2, 1, "leaky_relu")                 # (N,16,16,32)
    w, b = fold_bn_conv(p["e2_w"], p["e2_b"], p["e2_bn"])
    x = conv2d(x, w, b, 2, 1, "leaky_relu")                 # (N,8,8,64)
    w, b = fold_bn_conv(p["e3_w"], p["e3_b"], p["e3_bn"])
    x = conv2d(x, w, b, 2, 1, "leaky_relu")                 # (N,4,4,128)

    # flatten in PyTorch NCHW order
    n = x.shape[0]
    flat = jnp.transpose(x, (0, 3, 1, 2)).reshape(n, -1)    # (N, 2048)

    # merged mu / logvar heads: one matmul with N = 256, f32 user-facing output
    head_w = jnp.concatenate([p["mu_w"], p["lv_w"]], axis=0).T   # (2048, 256)
    head_b = jnp.concatenate([p["mu_b"], p["lv_b"]])
    head = fused_matmul(flat, head_w, head_b, out_dtype=jnp.float32)
    mu, logvar = head[:, :LATENT_DIM], head[:, LATENT_DIM:]
    z = mu                                                  # eval-mode reparameterize

    # decoder
    h = fused_matmul(z, p["di_w"].T, p["di_b"],
                     out_dtype=MXU_DTYPE)                   # (N, 2048)
    h = jnp.transpose(h.reshape(n, 128, 4, 4), (0, 2, 3, 1))  # NHWC (N,4,4,128)

    w, b = fold_bn_deconv(p["d1_w"], p["d1_b"], p["d1_bn"])
    h = conv_transpose2d_s2(h, w, b, "relu")                # (N,8,8,64)
    w, b = fold_bn_deconv(p["d2_w"], p["d2_b"], p["d2_bn"])
    h = conv_transpose2d_s2(h, w, b, "relu")                # (N,16,16,32)
    h = conv_transpose2d_s2(h, p["d3_w"], p["d3_b"], "tanh",
                            out_dtype=jnp.float32)          # (N,32,32,3)

    x_rec = jnp.transpose(h, (0, 3, 1, 2))                  # NHWC -> NCHW
    return x_rec, mu, logvar


if __name__ == "__main__":
    key = jax.random.PRNGKey(0)
    pkey, xkey = jax.random.split(key)
    params = init_params(pkey)
    # 32x32 input so three stride-2 convs reach the 4x4 map the FC heads expect.
    x = jax.random.normal(xkey, (2, 3, 32, 32), jnp.float32)

    fwd = jax.jit(vae_forward)
    x_rec, mu, logvar = fwd(params, x)
    jax.block_until_ready((x_rec, mu, logvar))

    assert x_rec.shape == (2, 3, 32, 32), x_rec.shape
    assert mu.shape == (2, LATENT_DIM), mu.shape
    assert logvar.shape == (2, LATENT_DIM), logvar.shape
    assert x_rec.dtype == jnp.float32 and mu.dtype == jnp.float32
    assert bool(jnp.all(jnp.isfinite(x_rec)))
    assert bool(jnp.all(jnp.isfinite(mu)))
    assert bool(jnp.all(jnp.isfinite(logvar)))
    print("KERNEL_OK")
</pallas_src>

<mosaic_0001>
module attributes {stable_mosaic.version = 11 : i64} {
  func.func @_fused_matmul_kernel(%arg0: i32, %arg1: memref<256x27xbf16, #tpu.memory_space<vmem>>, %arg2: memref<27x32xbf16, #tpu.memory_space<vmem>>, %arg3: memref<1x32xf32, #tpu.memory_space<vmem>>, %arg4: memref<256x32xbf16, #tpu.memory_space<vmem>>) attributes {dimension_semantics = [#tpu.dimension_semantics<parallel>], iteration_bounds = array<i64: 2>, scalar_prefetch = 0 : i64, scratch_operands = 0 : i64, tpu.core_type = #tpu.core_type<tc>, window_params = [{transform_indices = @transform_0, window_bounds = array<i64: 256, 27>}, {pipeline_mode = #tpu.pipeline_mode<synchronous>, transform_indices = @transform_1, window_bounds = array<i64: 27, 32>}, {pipeline_mode = #tpu.pipeline_mode<synchronous>, transform_indices = @transform_2, window_bounds = array<i64: 1, 32>}, {transform_indices = @transform_3, window_bounds = array<i64: 256, 32>}]} {
    %c0 = arith.constant 0 : index
    %c0_0 = arith.constant 0 : index
    %0 = vector.load %arg1[%c0, %c0_0] : memref<256x27xbf16, #tpu.memory_space<vmem>>, vector<256x27xbf16>
    %c0_1 = arith.constant 0 : index
    %c0_2 = arith.constant 0 : index
    %1 = vector.load %arg2[%c0_1, %c0_2] : memref<27x32xbf16, #tpu.memory_space<vmem>>, vector<27x32xbf16>
    %cst = arith.constant dense<0.000000e+00> : vector<256x32xf32>
    %2 = tpu.matmul %0, %1, %cst {dimension_numbers = #tpu.dot_dimension_numbers<[1], [0], [0], [1], [0, 0, 1, 1], [], []>} : vector<256x27xbf16>, vector<27x32xbf16>, vector<256x32xf32> -> vector<256x32xf32>
    %c0_3 = arith.constant 0 : index
    %c0_4 = arith.constant 0 : index
    %3 = vector.load %arg3[%c0_3, %c0_4] : memref<1x32xf32, #tpu.memory_space<vmem>>, vector<1x32xf32>
    %4 = vector.broadcast %3 : vector<1x32xf32> to vector<256x32xf32>
    %5 = arith.addf %2, %4 : vector<256x32xf32>
    %cst_5 = arith.constant 0.000000e+00 : f32
    %6 = vector.broadcast %cst_5 : f32 to vector<256x32xf32>
    %7 = arith.cmpf ogt, %5, %6 : vector<256x32xf32>
    %cst_6 = arith.constant 2.000000e-01 : f32
    %8 = vector.broadcast %cst_6 : f32 to vector<256x32xf32>
    %9 = arith.mulf %8, %5 : vector<256x32xf32>
    %10 = arith.select %7, %5, %9 : vector<256x32xi1>, vector<256x32xf32>
    %11 = arith.truncf %10 : vector<256x32xf32> to vector<256x32xbf16>
    %c0_7 = arith.constant 0 : index
    %c0_8 = arith.constant 0 : index
    %12 = vector.load %arg4[%c0_7, %c0_8] : memref<256x32xbf16, #tpu.memory_space<vmem>>, vector<256x32xbf16>
    tpu.vector_store %arg4[%c0_7, %c0_8], %11 {strides = array<i32>} : memref<256x32xbf16, #tpu.memory_space<vmem>>, vector<256x32xbf16>,
    return
  }
  func.func @transform_0(%arg0: i32) -> (i32, i32) {
    %c0_i32 = arith.constant 0 : i32
    %c0_i32_0 = arith.constant 0 : i32
    return %arg0, %c0_i32 : i32, i32
  }
  func.func @transform_1(%arg0: i32) -> (i32, i32) {
    %c0_i32 = arith.constant 0 : i32
    %c0_i32_0 = arith.constant 0 : i32
    %c0_i32_1 = arith.constant 0 : i32
    return %c0_i32, %c0_i32_0 : i32, i32
  }
  func.func @transform_2(%arg0: i32) -> (i32, i32) {
    %c0_i32 = arith.constant 0 : i32
    %c0_i32_0 = arith.constant 0 : i32
    %c0_i32_1 = arith.constant 0 : i32
    return %c0_i32, %c0_i32_0 : i32, i32
  }
  func.func @transform_3(%arg0: i32) -> (i32, i32) {
    %c0_i32 = arith.constant 0 : i32
    %c0_i32_0 = arith.constant 0 : i32
    return %arg0, %c0_i32 : i32, i32
  }
}

module attributes {stable_mosaic.version = 11 : i64} {
  func.func @_fused_matmul_kernel(%arg0: i32, %arg1: memref<128x288xbf16, #tpu.memory_space<vmem>>, %arg2: memref<288x64xbf16, #tpu.memory_space<vmem>>, %arg3: memref<1x64xf32, #tpu.memory_space<vmem>>, %arg4: memref<128x64xbf16, #tpu.memory_space<vmem>>) attributes {dimension_semantics = [#tpu.dimension_semantics<parallel>], iteration_bounds = array<i64: 1>, scalar_prefetch = 0 : i64, scratch_operands = 0 : i64, tpu.core_type = #tpu.core_type<tc>, window_params = [{transform_indices = @transform_0, window_bounds = array<i64: 128, 288>}, {pipeline_mode = #tpu.pipeline_mode<synchronous>, transform_indices = @transform_1, window_bounds = array<i64: 288, 64>}, {pipeline_mode = #tpu.pipeline_mode<synchronous>, transform_indices = @transform_2, window_bounds = array<i64: 1, 64>}, {transform_indices = @transform_3, window_bounds = array<i64: 128, 64>}]} {
    %c0 = arith.constant 0 : index
    %c0_0 = arith.constant 0 : index
    %0 = vector.load %arg1[%c0, %c0_0] : memref<128x288xbf16, #tpu.memory_space<vmem>>, vector<128x288xbf16>
    %c0_1 = arith.constant 0 : index
    %c0_2 = arith.constant 0 : index
    %1 = vector.load %arg2[%c0_1, %c0_2] : memref<288x64xbf16, #tpu.memory_space<vmem>>, vector<288x64xbf16>
    %cst = arith.constant dense<0.000000e+00> : vector<128x64xf32>
    %2 = tpu.matmul %0, %1, %cst {dimension_numbers = #tpu.dot_dimension_numbers<[1], [0], [0], [1], [0, 0, 1, 1], [], []>} : vector<128x288xbf16>, vector<288x64xbf16>, vector<128x64xf32> -> vector<128x64xf32>
    %c0_3 = arith.constant 0 : index
    %c0_4 = arith.constant 0 : index
    %3 = vector.load %arg3[%c0_3, %c0_4] : memref<1x64xf32, #tpu.memory_space<vmem>>, vector<1x64xf32>
    %4 = vector.broadcast %3 : vector<1x64xf32> to vector<128x64xf32>
    %5 = arith.addf %2, %4 : vector<128x64xf32>
    %cst_5 = arith.constant 0.000000e+00 : f32
    %6 = vector.broadcast %cst_5 : f32 to vector<128x64xf32>
    %7 = arith.cmpf ogt, %5, %6 : vector<128x64xf32>
    %cst_6 = arith.constant 2.000000e-01 : f32
    %8 = vector.broadcast %cst_6 : f32 to vector<128x64xf32>
    %9 = arith.mulf %8, %5 : vector<128x64xf32>
    %10 = arith.select %7, %5, %9 : vector<128x64xi1>, vector<128x64xf32>
    %11 = arith.truncf %10 : vector<128x64xf32> to vector<128x64xbf16>
    %c0_7 = arith.constant 0 : index
    %c0_8 = arith.constant 0 : index
    %12 = vector.load %arg4[%c0_7, %c0_8] : memref<128x64xbf16, #tpu.memory_space<vmem>>, vector<128x64xbf16>
    tpu.vector_store %arg4[%c0_7, %c0_8], %11 {strides = array<i32>} : memref<128x64xbf16, #tpu.memory_space<vmem>>, vector<128x64xbf16>,
    return
  }
  func.func @transform_0(%arg0: i32) -> (i32, i32) {
    %c0_i32 = arith.constant 0 : i32
    %c0_i32_0 = arith.constant 0 : i32
    return %arg0, %c0_i32 : i32, i32
  }
  func.func @transform_1(%arg0: i32) -> (i32, i32) {
    %c0_i32 = arith.constant 0 : i32
    %c0_i32_0 = arith.constant 0 : i32
    %c0_i32_1 = arith.constant 0 : i32
    return %c0_i32, %c0_i32_0 : i32, i32
  }
  func.func @transform_2(%arg0: i32) -> (i32, i32) {
    %c0_i32 = arith.constant 0 : i32
    %c0_i32_0 = arith.constant 0 : i32
    %c0_i32_1 = arith.constant 0 : i32
    return %c0_i32, %c0_i32_0 : i32, i32
  }
  func.func @transform_3(%arg0: i32) -> (i32, i32) {
    %c0_i32 = arith.constant 0 : i32
    %c0_i32_0 = arith.constant 0 : i32
    return %arg0, %c0_i32 : i32, i32
  }
}

module attributes {stable_mosaic.version = 11 : i64} {
  func.func @_fused_matmul_kernel(%arg0: i32, %arg1: memref<32x576xbf16, #tpu.memory_space<vmem>>, %arg2: memref<576x128xbf16, #tpu.memory_space<vmem>>, %arg3: memref<1x128xf32, #tpu.memory_space<vmem>>, %arg4: memref<32x128xbf16, #tpu.memory_space<vmem>>) attributes {dimension_semantics = [#tpu.dimension_semantics<parallel>], iteration_bounds = array<i64: 1>, scalar_prefetch = 0 : i64, scratch_operands = 0 : i64, tpu.core_type = #tpu.core_type<tc>, window_params = [{transform_indices = @transform_0, window_bounds = array<i64: 32, 576>}, {pipeline_mode = #tpu.pipeline_mode<synchronous>, transform_indices = @transform_1, window_bounds = array<i64: 576, 128>}, {pipeline_mode = #tpu.pipeline_mode<synchronous>, transform_indices = @transform_2, window_bounds = array<i64: 1, 128>}, {transform_indices = @transform_3, window_bounds = array<i64: 32, 128>}]} {
    %c0 = arith.constant 0 : index
    %c0_0 = arith.constant 0 : index
    %0 = vector.load %arg1[%c0, %c0_0] : memref<32x576xbf16, #tpu.memory_space<vmem>>, vector<32x576xbf16>
    %c0_1 = arith.constant 0 : index
    %c0_2 = arith.constant 0 : index
    %1 = vector.load %arg2[%c0_1, %c0_2] : memref<576x128xbf16, #tpu.memory_space<vmem>>, vector<576x128xbf16>
    %cst = arith.constant dense<0.000000e+00> : vector<32x128xf32>
    %2 = tpu.matmul %0, %1, %cst {dimension_numbers = #tpu.dot_dimension_numbers<[1], [0], [0], [1], [0, 0, 1, 1], [], []>} : vector<32x576xbf16>, vector<576x128xbf16>, vector<32x128xf32> -> vector<32x128xf32>
    %c0_3 = arith.constant 0 : index
    %c0_4 = arith.constant 0 : index
    %3 = vector.load %arg3[%c0_3, %c0_4] : memref<1x128xf32, #tpu.memory_space<vmem>>, vector<1x128xf32>
    %4 = vector.broadcast %3 : vector<1x128xf32> to vector<32x128xf32>
    %5 = arith.addf %2, %4 : vector<32x128xf32>
    %cst_5 = arith.constant 0.000000e+00 : f32
    %6 = vector.broadcast %cst_5 : f32 to vector<32x128xf32>
    %7 = arith.cmpf ogt, %5, %6 : vector<32x128xf32>
    %cst_6 = arith.constant 2.000000e-01 : f32
    %8 = vector.broadcast %cst_6 : f32 to vector<32x128xf32>
    %9 = arith.mulf %8, %5 : vector<32x128xf32>
    %10 = arith.select %7, %5, %9 : vector<32x128xi1>, vector<32x128xf32>
    %11 = arith.truncf %10 : vector<32x128xf32> to vector<32x128xbf16>
    %c0_7 = arith.constant 0 : index
    %c0_8 = arith.constant 0 : index
    %12 = vector.load %arg4[%c0_7, %c0_8] : memref<32x128xbf16, #tpu.memory_space<vmem>>, vector<32x128xbf16>
    tpu.vector_store %arg4[%c0_7, %c0_8], %11 {strides = array<i32>} : memref<32x128xbf16, #tpu.memory_space<vmem>>, vector<32x128xbf16>,
    return
  }
  func.func @transform_0(%arg0: i32) -> (i32, i32) {
    %c0_i32 = arith.constant 0 : i32
    %c0_i32_0 = arith.constant 0 : i32
    return %arg0, %c0_i32 : i32, i32
  }
  func.func @transform_1(%arg0: i32) -> (i32, i32) {
    %c0_i32 = arith.constant 0 : i32
    %c0_i32_0 = arith.constant 0 : i32
    %c0_i32_1 = arith.constant 0 : i32
    return %c0_i32, %c0_i32_0 : i32, i32
  }
  func.func @transform_2(%arg0: i32) -> (i32, i32) {
    %c0_i32 = arith.constant 0 : i32
    %c0_i32_0 = arith.constant 0 : i32
    %c0_i32_1 = arith.constant 0 : i32
    return %c0_i32, %c0_i32_0 : i32, i32
  }
  func.func @transform_3(%arg0: i32) -> (i32, i32) {
    %c0_i32 = arith.constant 0 : i32
    %c0_i32_0 = arith.constant 0 : i32
    return %arg0, %c0_i32 : i32, i32
  }
}

module attributes {stable_mosaic.version = 11 : i64} {
  func.func @_fused_matmul_kernel(%arg0: i32, %arg1: memref<2x2048xbf16, #tpu.memory_space<vmem>>, %arg2: memref<2048x256xbf16, #tpu.memory_space<vmem>>, %arg3: memref<1x256xf32, #tpu.memory_space<vmem>>, %arg4: memref<2x256xf32, #tpu.memory_space<vmem>>) attributes {dimension_semantics = [#tpu.dimension_semantics<parallel>], iteration_bounds = array<i64: 1>, scalar_prefetch = 0 : i64, scratch_operands = 0 : i64, tpu.core_type = #tpu.core_type<tc>, window_params = [{transform_indices = @transform_0, window_bounds = array<i64: 2, 2048>}, {pipeline_mode = #tpu.pipeline_mode<synchronous>, transform_indices = @transform_1, window_bounds = array<i64: 2048, 256>}, {pipeline_mode = #tpu.pipeline_mode<synchronous>, transform_indices = @transform_2, window_bounds = array<i64: 1, 256>}, {transform_indices = @transform_3, window_bounds = array<i64: 2, 256>}]} {
    %c0 = arith.constant 0 : index
    %c0_0 = arith.constant 0 : index
    %0 = vector.load %arg1[%c0, %c0_0] : memref<2x2048xbf16, #tpu.memory_space<vmem>>, vector<2x2048xbf16>
    %c0_1 = arith.constant 0 : index
    %c0_2 = arith.constant 0 : index
    %1 = vector.load %arg2[%c0_1, %c0_2] : memref<2048x256xbf16, #tpu.memory_space<vmem>>, vector<2048x256xbf16>
    %cst = arith.constant dense<0.000000e+00> : vector<2x256xf32>
    %2 = tpu.matmul %0, %1, %cst {dimension_numbers = #tpu.dot_dimension_numbers<[1], [0], [0], [1], [0, 0, 1, 1], [], []>} : vector<2x2048xbf16>, vector<2048x256xbf16>, vector<2x256xf32> -> vector<2x256xf32>
    %c0_3 = arith.constant 0 : index
    %c0_4 = arith.constant 0 : index
    %3 = vector.load %arg3[%c0_3, %c0_4] : memref<1x256xf32, #tpu.memory_space<vmem>>, vector<1x256xf32>
    %4 = vector.broadcast %3 : vector<1x256xf32> to vector<2x256xf32>
    %5 = arith.addf %2, %4 : vector<2x256xf32>
    %c0_5 = arith.constant 0 : index
    %c0_6 = arith.constant 0 : index
    %6 = vector.load %arg4[%c0_5, %c0_6] : memref<2x256xf32, #tpu.memory_space<vmem>>, vector<2x256xf32>
    tpu.vector_store %arg4[%c0_5, %c0_6], %5 {strides = array<i32>} : memref<2x256xf32, #tpu.memory_space<vmem>>, vector<2x256xf32>,
    return
  }
  func.func @transform_0(%arg0: i32) -> (i32, i32) {
    %c0_i32 = arith.constant 0 : i32
    %c0_i32_0 = arith.constant 0 : i32
    return %arg0, %c0_i32 : i32, i32
  }
  func.func @transform_1(%arg0: i32) -> (i32, i32) {
    %c0_i32 = arith.constant 0 : i32
    %c0_i32_0 = arith.constant 0 : i32
    %c0_i32_1 = arith.constant 0 : i32
    return %c0_i32, %c0_i32_0 : i32, i32
  }
  func.func @transform_2(%arg0: i32) -> (i32, i32) {
    %c0_i32 = arith.constant 0 : i32
    %c0_i32_0 = arith.constant 0 : i32
    %c0_i32_1 = arith.constant 0 : i32
    return %c0_i32, %c0_i32_0 : i32, i32
  }
  func.func @transform_3(%arg0: i32) -> (i32, i32) {
    %c0_i32 = arith.constant 0 : i32
    %c0_i32_0 = arith.constant 0 : i32
    return %arg0, %c0_i32 : i32, i32
  }
}

module attributes {stable_mosaic.version = 11 : i64} {
  func.func @_fused_matmul_kernel(%arg0: i32, %arg1: memref<2x128xbf16, #tpu.memory_space<vmem>>, %arg2: memref<128x2048xbf16, #tpu.memory_space<vmem>>, %arg3: memref<1x2048xf32, #tpu.memory_space<vmem>>, %arg4: memref<2x2048xbf16, #tpu.memory_space<vmem>>) attributes {dimension_semantics = [#tpu.dimension_semantics<parallel>], iteration_bounds = array<i64: 1>, scalar_prefetch = 0 : i64, scratch_operands = 0 : i64, tpu.core_type = #tpu.core_type<tc>, window_params = [{transform_indices = @transform_0, window_bounds = array<i64: 2, 128>}, {pipeline_mode = #tpu.pipeline_mode<synchronous>, transform_indices = @transform_1, window_bounds = array<i64: 128, 2048>}, {pipeline_mode = #tpu.pipeline_mode<synchronous>, transform_indices = @transform_2, window_bounds = array<i64: 1, 2048>}, {transform_indices = @transform_3, window_bounds = array<i64: 2, 2048>}]} {
    %c0 = arith.constant 0 : index
    %c0_0 = arith.constant 0 : index
    %0 = vector.load %arg1[%c0, %c0_0] : memref<2x128xbf16, #tpu.memory_space<vmem>>, vector<2x128xbf16>
    %c0_1 = arith.constant 0 : index
    %c0_2 = arith.constant 0 : index
    %1 = vector.load %arg2[%c0_1, %c0_2] : memref<128x2048xbf16, #tpu.memory_space<vmem>>, vector<128x2048xbf16>
    %cst = arith.constant dense<0.000000e+00> : vector<2x2048xf32>
    %2 = tpu.matmul %0, %1, %cst {dimension_numbers = #tpu.dot_dimension_numbers<[1], [0], [0], [1], [0, 0, 1, 1], [], []>} : vector<2x128xbf16>, vector<128x2048xbf16>, vector<2x2048xf32> -> vector<2x2048xf32>
    %c0_3 = arith.constant 0 : index
    %c0_4 = arith.constant 0 : index
    %3 = vector.load %arg3[%c0_3, %c0_4] : memref<1x2048xf32, #tpu.memory_space<vmem>>, vector<1x2048xf32>
    %4 = vector.broadcast %3 : vector<1x2048xf32> to vector<2x2048xf32>
    %5 = arith.addf %2, %4 : vector<2x2048xf32>
    %6 = arith.truncf %5 : vector<2x2048xf32> to vector<2x2048xbf16>
    %c0_5 = arith.constant 0 : index
    %c0_6 = arith.constant 0 : index
    %7 = vector.load %arg4[%c0_5, %c0_6] : memref<2x2048xbf16, #tpu.memory_space<vmem>>, vector<2x2048xbf16>
    tpu.vector_store %arg4[%c0_5, %c0_6], %6 {strides = array<i32>} : memref<2x2048xbf16, #tpu.memory_space<vmem>>, vector<2x2048xbf16>,
    return
  }
  func.func @transform_0(%arg0: i32) -> (i32, i32) {
    %c0_i32 = arith.constant 0 : i32
    %c0_i32_0 = arith.constant 0 : i32
    return %arg0, %c0_i32 : i32, i32
  }
  func.func @transform_1(%arg0: i32) -> (i32, i32) {
    %c0_i32 = arith.constant 0 : i32
    %c0_i32_0 = arith.constant 0 : i32
    %c0_i32_1 = arith.constant 0 : i32
    return %c0_i32, %c0_i32_0 : i32, i32
  }
  func.func @transform_2(%arg0: i32) -> (i32, i32) {
    %c0_i32 = arith.constant 0 : i32
    %c0_i32_0 = arith.constant 0 : i32
    %c0_i32_1 = arith.constant 0 : i32
    return %c0_i32, %c0_i32_0 : i32, i32
  }
  func.func @transform_3(%arg0: i32) -> (i32, i32) {
    %c0_i32 = arith.constant 0 : i32
    %c0_i32_0 = arith.constant 0 : i32
    return %arg0, %c0_i32 : i32, i32
  }
}

module attributes {stable_mosaic.version = 11 : i64} {
  func.func @_fused_matmul_kernel(%arg0: i32, %arg1: memref<32x512xbf16, #tpu.memory_space<vmem>>, %arg2: memref<512x256xbf16, #tpu.memory_space<vmem>>, %arg3: memref<1x256xf32, #tpu.memory_space<vmem>>, %arg4: memref<32x256xbf16, #tpu.memory_space<vmem>>) attributes {dimension_semantics = [#tpu.dimension_semantics<parallel>], iteration_bounds = array<i64: 1>, scalar_prefetch = 0 : i64, scratch_operands = 0 : i64, tpu.core_type = #tpu.core_type<tc>, window_params = [{transform_indices = @transform_0, window_bounds = array<i64: 32, 512>}, {pipeline_mode = #tpu.pipeline_mode<synchronous>, transform_indices = @transform_1, window_bounds = array<i64: 512, 256>}, {pipeline_mode = #tpu.pipeline_mode<synchronous>, transform_indices = @transform_2, window_bounds = array<i64: 1, 256>}, {transform_indices = @transform_3, window_bounds = array<i64: 32, 256>}]} {
    %c0 = arith.constant 0 : index
    %c0_0 = arith.constant 0 : index
    %0 = vector.load %arg1[%c0, %c0_0] : memref<32x512xbf16, #tpu.memory_space<vmem>>, vector<32x512xbf16>
    %c0_1 = arith.constant 0 : index
    %c0_2 = arith.constant 0 : index
    %1 = vector.load %arg2[%c0_1, %c0_2] : memref<512x256xbf16, #tpu.memory_space<vmem>>, vector<512x256xbf16>
    %cst = arith.constant dense<0.000000e+00> : vector<32x256xf32>
    %2 = tpu.matmul %0, %1, %cst {dimension_numbers = #tpu.dot_dimension_numbers<[1], [0], [0], [1], [0, 0, 1, 1], [], []>} : vector<32x512xbf16>, vector<512x256xbf16>, vector<32x256xf32> -> vector<32x256xf32>
    %c0_3 = arith.constant 0 : index
    %c0_4 = arith.constant 0 : index
    %3 = vector.load %arg3[%c0_3, %c0_4] : memref<1x256xf32, #tpu.memory_space<vmem>>, vector<1x256xf32>
    %4 = vector.broadcast %3 : vector<1x256xf32> to vector<32x256xf32>
    %5 = arith.addf %2, %4 : vector<32x256xf32>
    %cst_5 = arith.constant 0.000000e+00 : f32
    %6 = vector.broadcast %cst_5 : f32 to vector<32x256xf32>
    %7 = arith.maximumf %5, %6 : vector<32x256xf32>
    %8 = arith.truncf %7 : vector<32x256xf32> to vector<32x256xbf16>
    %c0_6 = arith.constant 0 : index
    %c0_7 = arith.constant 0 : index
    %9 = vector.load %arg4[%c0_6, %c0_7] : memref<32x256xbf16, #tpu.memory_space<vmem>>, vector<32x256xbf16>
    tpu.vector_store %arg4[%c0_6, %c0_7], %8 {strides = array<i32>} : memref<32x256xbf16, #tpu.memory_space<vmem>>, vector<32x256xbf16>,
    return
  }
  func.func @transform_0(%arg0: i32) -> (i32, i32) {
    %c0_i32 = arith.constant 0 : i32
    %c0_i32_0 = arith.constant 0 : i32
    return %arg0, %c0_i32 : i32, i32
  }
  func.func @transform_1(%arg0: i32) -> (i32, i32) {
    %c0_i32 = arith.constant 0 : i32
    %c0_i32_0 = arith.constant 0 : i32
    %c0_i32_1 = arith.constant 0 : i32
    return %c0_i32, %c0_i32_0 : i32, i32
  }
  func.func @transform_2(%arg0: i32) -> (i32, i32) {
    %c0_i32 = arith.constant 0 : i32
    %c0_i32_0 = arith.constant 0 : i32
    %c0_i32_1 = arith.constant 0 : i32
    return %c0_i32, %c0_i32_0 : i32, i32
  }
  func.func @transform_3(%arg0: i32) -> (i32, i32) {
    %c0_i32 = arith.constant 0 : i32
    %c0_i32_0 = arith.constant 0 : i32
    return %arg0, %c0_i32 : i32, i32
  }
}

module attributes {stable_mosaic.version = 11 : i64} {
  func.func @_fused_matmul_kernel(%arg0: i32, %arg1: memref<128x256xbf16, #tpu.memory_space<vmem>>, %arg2: memref<256x128xbf16, #tpu.memory_space<vmem>>, %arg3: memref<1x128xf32, #tpu.memory_space<vmem>>, %arg4: memref<128x128xbf16, #tpu.memory_space<vmem>>) attributes {dimension_semantics = [#tpu.dimension_semantics<parallel>], iteration_bounds = array<i64: 1>, scalar_prefetch = 0 : i64, scratch_operands = 0 : i64, tpu.core_type = #tpu.core_type<tc>, window_params = [{transform_indices = @transform_0, window_bounds = array<i64: 128, 256>}, {pipeline_mode = #tpu.pipeline_mode<synchronous>, transform_indices = @transform_1, window_bounds = array<i64: 256, 128>}, {pipeline_mode = #tpu.pipeline_mode<synchronous>, transform_indices = @transform_2, window_bounds = array<i64: 1, 128>}, {transform_indices = @transform_3, window_bounds = array<i64: 128, 128>}]} {
    %c0 = arith.constant 0 : index
    %c0_0 = arith.constant 0 : index
    %0 = vector.load %arg1[%c0, %c0_0] : memref<128x256xbf16, #tpu.memory_space<vmem>>, vector<128x256xbf16>
    %c0_1 = arith.constant 0 : index
    %c0_2 = arith.constant 0 : index
    %1 = vector.load %arg2[%c0_1, %c0_2] : memref<256x128xbf16, #tpu.memory_space<vmem>>, vector<256x128xbf16>
    %cst = arith.constant dense<0.000000e+00> : vector<128x128xf32>
    %2 = tpu.matmul %0, %1, %cst {dimension_numbers = #tpu.dot_dimension_numbers<[1], [0], [0], [1], [0, 0, 1, 1], [], []>} : vector<128x256xbf16>, vector<256x128xbf16>, vector<128x128xf32> -> vector<128x128xf32>
    %c0_3 = arith.constant 0 : index
    %c0_4 = arith.constant 0 : index
    %3 = vector.load %arg3[%c0_3, %c0_4] : memref<1x128xf32, #tpu.memory_space<vmem>>, vector<1x128xf32>
    %4 = vector.broadcast %3 : vector<1x128xf32> to vector<128x128xf32>
    %5 = arith.addf %2, %4 : vector<128x128xf32>
    %cst_5 = arith.constant 0.000000e+00 : f32
    %6 = vector.broadcast %cst_5 : f32 to vector<128x128xf32>
    %7 = arith.maximumf %5, %6 : vector<128x128xf32>
    %8 = arith.truncf %7 : vector<128x128xf32> to vector<128x128xbf16>
    %c0_6 = arith.constant 0 : index
    %c0_7 = arith.constant 0 : index
    %9 = vector.load %arg4[%c0_6, %c0_7] : memref<128x128xbf16, #tpu.memory_space<vmem>>, vector<128x128xbf16>
    tpu.vector_store %arg4[%c0_6, %c0_7], %8 {strides = array<i32>} : memref<128x128xbf16, #tpu.memory_space<vmem>>, vector<128x128xbf16>,
    return
  }
  func.func @transform_0(%arg0: i32) -> (i32, i32) {
    %c0_i32 = arith.constant 0 : i32
    %c0_i32_0 = arith.constant 0 : i32
    return %arg0, %c0_i32 : i32, i32
  }
  func.func @transform_1(%arg0: i32) -> (i32, i32) {
    %c0_i32 = arith.constant 0 : i32
    %c0_i32_0 = arith.constant 0 : i32
    %c0_i32_1 = arith.constant 0 : i32
    return %c0_i32, %c0_i32_0 : i32, i32
  }
  func.func @transform_2(%arg0: i32) -> (i32, i32) {
    %c0_i32 = arith.constant 0 : i32
    %c0_i32_0 = arith.constant 0 : i32
    %c0_i32_1 = arith.constant 0 : i32
    return %c0_i32, %c0_i32_0 : i32, i32
  }
  func.func @transform_3(%arg0: i32) -> (i32, i32) {
    %c0_i32 = arith.constant 0 : i32
    %c0_i32_0 = arith.constant 0 : i32
    return %arg0, %c0_i32 : i32, i32
  }
}

module attributes {stable_mosaic.version = 11 : i64} {
  func.func @_fused_matmul_kernel(%arg0: i32, %arg1: memref<256x128xbf16, #tpu.memory_space<vmem>>, %arg2: memref<128x12xbf16, #tpu.memory_space<vmem>>, %arg3: memref<1x12xf32, #tpu.memory_space<vmem>>, %arg4: memref<256x12xf32, #tpu.memory_space<vmem>>) attributes {dimension_semantics = [#tpu.dimension_semantics<parallel>], iteration_bounds = array<i64: 2>, scalar_prefetch = 0 : i64, scratch_operands = 0 : i64, tpu.core_type = #tpu.core_type<tc>, window_params = [{transform_indices = @transform_0, window_bounds = array<i64: 256, 128>}, {pipeline_mode = #tpu.pipeline_mode<synchronous>, transform_indices = @transform_1, window_bounds = array<i64: 128, 12>}, {pipeline_mode = #tpu.pipeline_mode<synchronous>, transform_indices = @transform_2, window_bounds = array<i64: 1, 12>}, {transform_indices = @transform_3, window_bounds = array<i64: 256, 12>}]} {
    %c0 = arith.constant 0 : index
    %c0_0 = arith.constant 0 : index
    %0 = vector.load %arg1[%c0, %c0_0] : memref<256x128xbf16, #tpu.memory_space<vmem>>, vector<256x128xbf16>
    %c0_1 = arith.constant 0 : index
    %c0_2 = arith.constant 0 : index
    %1 = vector.load %arg2[%c0_1, %c0_2] : memref<128x12xbf16, #tpu.memory_space<vmem>>, vector<128x12xbf16>
    %cst = arith.constant dense<0.000000e+00> : vector<256x12xf32>
    %2 = tpu.matmul %0, %1, %cst {dimension_numbers = #tpu.dot_dimension_numbers<[1], [0], [0], [1], [0, 0, 1, 1], [], []>} : vector<256x128xbf16>, vector<128x12xbf16>, vector<256x12xf32> -> vector<256x12xf32>
    %c0_3 = arith.constant 0 : index
    %c0_4 = arith.constant 0 : index
    %3 = vector.load %arg3[%c0_3, %c0_4] : memref<1x12xf32, #tpu.memory_space<vmem>>, vector<1x12xf32>
    %4 = vector.broadcast %3 : vector<1x12xf32> to vector<256x12xf32>
    %5 = arith.addf %2, %4 : vector<256x12xf32>
    %6 = math.tanh %5 : vector<256x12xf32>
    %c0_5 = arith.constant 0 : index
    %c0_6 = arith.constant 0 : index
    %7 = vector.load %arg4[%c0_5, %c0_6] : memref<256x12xf32, #tpu.memory_space<vmem>>, vector<256x12xf32>
    tpu.vector_store %arg4[%c0_5, %c0_6], %6 {strides = array<i32>} : memref<256x12xf32, #tpu.memory_space<vmem>>, vector<256x12xf32>,
    return
  }
  func.func @transform_0(%arg0: i32) -> (i32, i32) {
    %c0_i32 = arith.constant 0 : i32
    %c0_i32_0 = arith.constant 0 : i32
    return %arg0, %c0_i32 : i32, i32
  }
  func.func @transform_1(%arg0: i32) -> (i32, i32) {
    %c0_i32 = arith.constant 0 : i32
    %c0_i32_0 = arith.constant 0 : i32
    %c0_i32_1 = arith.constant 0 : i32
    return %c0_i32, %c0_i32_0 : i32, i32
  }
  func.func @transform_2(%arg0: i32) -> (i32, i32) {
    %c0_i32 = arith.constant 0 : i32
    %c0_i32_0 = arith.constant 0 : i32
    %c0_i32_1 = arith.constant 0 : i32
    return %c0_i32, %c0_i32_0 : i32, i32
  }
  func.func @transform_3(%arg0: i32) -> (i32, i32) {
    %c0_i32 = arith.constant 0 : i32
    %c0_i32_0 = arith.constant 0 : i32
    return %arg0, %c0_i32 : i32, i32
  }
}

</mosaic_0001>

<llo_original>
// kernel: vae_forward.8
$region0: #{vae_forward.8}
  #allocation0 [shape = 'u32[]', space=smem, size = 0x4, offset = 0x4, fixed_abs, tag = 'smem constant byte address 0x4 - core index']
  #allocation1 [shape = 'u32[144,128]{1,0:T(1,128)}', space=vmem, size = 0x12000, scoped, tag = 'internal scratch']
  %s0 = inlined_call_operand.vmem [shape: bf16[512,27], index: 0, kind: input, shape index: {}]
  %s1 = inlined_call_operand.vmem [shape: bf16[27,32], index: 1, kind: input, shape index: {}]
  %s2 = inlined_call_operand.vmem [shape: f32[1,32], index: 2, kind: input, shape index: {}]
  %s3 = inlined_call_operand.vmem [shape: bf16[512,32], index: 3, kind: output, shape index: {}]
  %s4 = sld [smem:[#allocation0]]
  $region45: #{vae_forward.8} parent=0
    _
  %s6 = ssub.s32 1, %s4
  %s7 = scalar_select 0, %s6, %s4
  loop: start=0, step=1, limit=4
  $region2: #{vae_forward.8} parent=0 // loop_pre_header
    _
  $region3: #{vae_forward.8} parent=0 // loop_header
    %s9 = sphi 0, %s13
    %p10 = scmp.ge.s32.totalorder %s9, 4
    %s19 = sphi 0, %s21
    %s22 = sphi 0, %s19
    %s23 = sphi 0, %s22
    %s39 = sphi 0, %s23
    %s43 = sphi 0, %s43
    %s45 = sphi 0, %s43
    %s46 = sphi 0, %s45
    %s60 = sphi 0, %s46
    %s64 = sphi 0, %s64
    %s66 = sphi 0, %s64
    %s67 = sphi 0, %s66
    %s81 = sphi 0, %s67
    %s87 = sphi 0, %s89
    %s90 = sphi 0, %s87
    %s91 = sphi 0, %s90
    %s107 = sphi 0, %s91
  $region4: #{vae_forward.8} parent=0 // loop_header_branch
    %12 = sbr.rel (%p10) target = $region8
  $region5: #{vae_forward.8} parent=0 // loop_body
    %s14 = ssub.s32 %s9, 1
    %s15 = ssub.s32 %s9, 2
    %s16 = sadd.s32 %s9, 1
    %s17 = ssub.s32 %s9, %s16
    %p18 = scmp.eq.s32.totalorder %s17, 0
    %s20 = sadd.s32 %s19, 1
    %s21 = scalar_select %p18, %s19, %s20
    %p24 = pneg %p18
    %p25 = scmp.eq.s32.totalorder %s9, 1
    %p26 = por %p24, %p25
    %p27 = scmp.ne.s32.totalorder %s19, %s22
    %p28 = scmp.eq.s32.totalorder %s9, 0
    %p29 = por %p27, %p28
    %p30 = scmp.ne.s32.totalorder %s19, %s22
    %p31 = scmp.eq.s32.totalorder %s14, 1
    %p32 = por %p30, %p31
    %p33 = scmp.ne.s32.totalorder %s22, %s23
    %p34 = scmp.eq.s32.totalorder %s14, 0
    %p35 = por %p33, %p34
    %p36 = scmp.ne.s32.totalorder %s22, %s23
    %p37 = scmp.eq.s32.totalorder %s15, 1
    %p38 = por %p36, %p37
    %p40 = scmp.ne.s32.totalorder %s23, %s39
    %p41 = scmp.eq.s32.totalorder %s15, 0
    %p42 = por %p40, %p41
    %s44 = sadd.s32 %s43, 1
    %p47 = scmp.eq.s32.totalorder %s9, 1
    %p48 = scmp.ne.s32.totalorder %s43, %s45
    %p49 = scmp.eq.s32.totalorder %s9, 0
    %p50 = por %p48, %p49
    %p51 = scmp.ne.s32.totalorder %s43, %s45
    %p52 = scmp.eq.s32.totalorder %s14, 1
    %p53 = por %p51, %p52
    %p54 = scmp.ne.s32.totalorder %s45, %s46
    %p55 = scmp.eq.s32.totalorder %s14, 0
    %p56 = por %p54, %p55
    %p57 = scmp.ne.s32.totalorder %s45, %s46
    %p58 = scmp.eq.s32.totalorder %s15, 1
    %p59 = por %p57, %p58
    %p61 = scmp.ne.s32.totalorder %s46, %s60
    %p62 = scmp.eq.s32.totalorder %s15, 0
    %p63 = por %p61, %p62
    %s65 = sadd.s32 %s64, 1
    %p68 = scmp.eq.s32.totalorder %s9, 1
    %p69 = scmp.ne.s32.totalorder %s64, %s66
    %p70 = scmp.eq.s32.totalorder %s9, 0
    %p71 = por %p69, %p70
    %p72 = scmp.ne.s32.totalorder %s64, %s66
    %p73 = scmp.eq.s32.totalorder %s14, 1
    %p74 = por %p72, %p73
    %p75 = scmp.ne.s32.totalorder %s66, %s67
    %p76 = scmp.eq.s32.totalorder %s14, 0
    %p77 = por %p75, %p76
    %p78 = scmp.ne.s32.totalorder %s66, %s67
    %p79 = scmp.eq.s32.totalorder %s15, 1
    %p80 = por %p78, %p79
    %p82 = scmp.ne.s32.totalorder %s67, %s81
    %p83 = scmp.eq.s32.totalorder %s15, 0
    %p84 = por %p82, %p83
    %s85 = ssub.s32 %s9, %s16
    %p86 = scmp.eq.s32.totalorder %s85, 0
    %s88 = sadd.s32 %s87, 1
    %s89 = scalar_select %p86, %s87, %s88
    %p92 = pneg %p86
    %p93 = scmp.eq.s32.totalorder %s9, 1
    %p94 = por %p92, %p93
    %p95 = scmp.ne.s32.totalorder %s87, %s90
    %p96 = scmp.eq.s32.totalorder %s9, 0
    %p97 = por %p95, %p96
    %p98 = scmp.ne.s32.totalorder %s87, %s90
    %p99 = scmp.eq.s32.totalorder %s14, 1
    %p100 = por %p98, %p99
    %p101 = scmp.ne.s32.totalorder %s90, %s91
    %p102 = scmp.eq.s32.totalorder %s14, 0
    %p103 = por %p101, %p102
    %p104 = scmp.ne.s32.totalorder %s90, %s91
    %p105 = scmp.eq.s32.totalorder %s15, 1
    %p106 = por %p104, %p105
    %p108 = scmp.ne.s32.totalorder %s91, %s107
    %p109 = scmp.eq.s32.totalorder %s15, 0
    %p110 = por %p108, %p109
    %p111 = scmp.le.s32.totalorder 1, %s9
    %p112 = scmp.lt.s32.totalorder %s9, 3
    %p113 = pnand %p111, %p112
    %p114 = pneg %p113
    // Predicated region
    $region9: #{vae_forward.8} parent=5 // pred_check
      _
    $region10: #{vae_forward.8} parent=5 // pred_check_branch
      %116 = sbr.rel (%p113) target = $region12
    $region11: #{vae_forward.8} parent=5 // pred_region
      %s117 = ssub.s32 %s9, 1
      // Predicated region
      $region13: #{vae_forward.8} parent=11 // pred_check
        %p118 = pneg %p56
      $region14: #{vae_forward.8} parent=11 // pred_check_branch
        %120 = sbr.rel (%p118) target = $region16
      $region15: #{vae_forward.8} parent=11 // pred_region
        _
      $region16: #{vae_forward.8} parent=11 // pred_fallthru
        _
      // Predicated region
      $region17: #{vae_forward.8} parent=11 // pred_check
        %p121 = pneg %p77
      $region18: #{vae_forward.8} parent=11 // pred_check_branch
        %123 = sbr.rel (%p121) target = $region20
      $region19: #{vae_forward.8} parent=11 // pred_region
        _
      $region20: #{vae_forward.8} parent=11 // pred_fallthru
        _
    $region12: #{vae_forward.8} parent=5 // pred_fallthru
      _
    %p124 = scmp.lt.s32.totalorder %s9, 2
    // Predicated region
    $region21: #{vae_forward.8} parent=5 // pred_check
      %p125 = pneg %p124
    $region22: #{vae_forward.8} parent=5 // pred_check_branch
      %127 = sbr.rel (%p125) target = $region24
    $region23: #{vae_forward.8} parent=5 // pred_region
      // Predicated region
      $region25: #{vae_forward.8} parent=23 // pred_check
        %p128 = pneg %p29
      $region26: #{vae_forward.8} parent=23 // pred_check_branch
        %130 = sbr.rel (%p128) target = $region28
      $region27: #{vae_forward.8} parent=23 // pred_region
        %s131 = smul.u32 32, %s9
        %p132 = scmp.lt.s32.totalorder %s131, 63
        %s133 = scalar_select %p132, %s131, 63
        %s134 = smul.addr %s133, 4
        %s135 = scalar_lea.vmem %s0, %s134
        %s136 = smul.u32 32, %s9
      $region28: #{vae_forward.8} parent=23 // pred_fallthru
        _
    $region24: #{vae_forward.8} parent=5 // pred_fallthru
      _
    %p137 = scmp.le.s32.totalorder 1, %s9
    %p138 = scmp.lt.s32.totalorder %s9, 3
    %p139 = pnand %p137, %p138
    %p140 = pneg %p139
    // Predicated region
    $region29: #{vae_forward.8} parent=5 // pred_check
      _
    $region30: #{vae_forward.8} parent=5 // pred_check_branch
      %142 = sbr.rel (%p139) target = $region32
    $region31: #{vae_forward.8} parent=5 // pred_region
      %s143 = ssub.s32 %s9, 1
      %s144 = smul.u32 32, %s14
      %p145 = scmp.lt.s32.totalorder %s144, 63
      %s146 = scalar_select %p145, %s144, 63
      %s147 = smul.addr %s146, 4
      %s148 = scalar_lea.vmem %s0, %s147
      %p149 = pneg %p35
      %p150 = pneg %p32
      %p151 = pneg %p56
      %p152 = pneg %p53
      %p153 = pneg %p77
      %p154 = pneg %p74
      %p155 = pneg %p103
      %p156 = pneg %p100
      %s157 = smul.u32 32, %s14
      %p158 = scmp.lt.s32.totalorder %s157, 63
      %s159 = scalar_select %p158, %s157, 63
      %s160 = smul.addr %s159, 4
      %s161 = scalar_lea.vmem %s3, %s160
      %s162 = smul.u32 32, %s14
      %p163 = scmp.lt.s32.totalorder %s162, 63
      %s164 = scalar_select %p163, %s162, 63
      %s165 = smul.addr %s164, 4
      %s166 = scalar_lea.vmem %s0, %s165
      %s167 = smul.u32 32, %s14
      %s168 = smul.u32 32, %s14
      %p169 = scmp.lt.s32.totalorder %s168, 63
      %s170 = scalar_select %p169, %s168, 63
      %s171 = smul.addr %s170, 4
      %s172 = scalar_lea.vmem %s3, %s171
      %s173 = smul.u32 32, %s14
      %v175 = vld [vmem:[%s166] sm:$0xf]
      %v176 = vld [vmem:[%s166 + $0x4] sm:$0xf]
      %v177 = vld [vmem:[%s166 + $0x8] sm:$0xf]
      %v178 = vld [vmem:[%s166 + $0xc] sm:$0xf]
      %v179 = vld [vmem:[%s166 + $0x10] sm:$0xf]
      %v180 = vld [vmem:[%s166 + $0x14] sm:$0xf]
      %v181 = vld [vmem:[%s166 + $0x18] sm:$0xf]
      %v182 = vld [vmem:[%s166 + $0x1c] sm:$0xf]
      %v183 = vld [vmem:[%s166 + $0x20] sm:$0xf]
      %v184 = vld [vmem:[%s166 + $0x24] sm:$0xf]
      %v185 = vld [vmem:[%s166 + $0x28] sm:$0xf]
      %v186 = vld [vmem:[%s166 + $0x2c] sm:$0xf]
      %v187 = vld [vmem:[%s166 + $0x30] sm:$0xf]
      %v188 = vld [vmem:[%s166 + $0x34] sm:$0xf]
      %v189 = vld [vmem:[%s166 + $0x38] sm:$0xf]
      %v190 = vld [vmem:[%s166 + $0x3c] sm:$0xf]
      %v191 = vld [vmem:[%s166 + $0x40] sm:$0xf]
      %v192 = vld [vmem:[%s166 + $0x44] sm:$0xf]
      %v193 = vld [vmem:[%s166 + $0x48] sm:$0xf]
      %v194 = vld [vmem:[%s166 + $0x4c] sm:$0xf]
      %v195 = vld [vmem:[%s166 + $0x50] sm:$0xf]
      %v196 = vld [vmem:[%s166 + $0x54] sm:$0xf]
      %v197 = vld [vmem:[%s166 + $0x58] sm:$0xf]
      %v198 = vld [vmem:[%s166 + $0x5c] sm:$0xf]
      %v199 = vld [vmem:[%s166 + $0x60] sm:$0xf]
      %v200 = vld [vmem:[%s166 + $0x64] sm:$0xf]
      %v201 = vld [vmem:[%s166 + $0x68] sm:$0xf]
      %v202 = vld [vmem:[%s166 + $0x6c] sm:$0xf]
      %v203 = vld [vmem:[%s166 + $0x70] sm:$0xf]
      %v204 = vld [vmem:[%s166 + $0x74] sm:$0xf]
      %v205 = vld [vmem:[%s166 + $0x78] sm:$0xf]
      %v206 = vld [vmem:[%s166 + $0x7c] sm:$0xf]
      %v207 = vld [vmem:[%s1] sm:$0xf]
      %v208 = vld [vmem:[%s1 + $0x4] sm:$0xf]
      %v209 = vld [vmem:[%s1 + $0x8] sm:$0xf]
      %v210 = vld [vmem:[%s1 + $0xc] sm:$0x3]
      %v211 = vld [vmem:[%s2] sm:$0x1]
      %v213 = vlaneseq
      %v214 = vshrl.u32 %v213, 7
      %v215 = vsub.s32 0, %v214
      %v216 = vrot.slane %v211, %v215
      %v250 = vunpack.c.l.b16 %v175
      %v251 = vunpack.c.l.b16 %v176
      %v252 = vunpack.c.l.b16 %v177
      %v253 = vunpack.c.l.b16 %v178
      %v254 = vunpack.c.l.b16 %v179
      %v255 = vunpack.c.l.b16 %v180
      %v256 = vunpack.c.l.b16 %v181
      %v257 = vunpack.c.l.b16 %v182
      %v258 = vunpack.c.l.b16 %v183
      %v259 = vunpack.c.l.b16 %v184
      %v260 = vunpack.c.l.b16 %v185
      %v261 = vunpack.c.l.b16 %v186
      %v262 = vunpack.c.l.b16 %v187
      %v263 = vunpack.c.l.b16 %v188
      %v264 = vunpack.c.l.b16 %v189
      %v265 = vunpack.c.l.b16 %v190
      %v266 = vunpack.c.l.b16 %v191
      %v267 = vunpack.c.l.b16 %v192
      %v268 = vunpack.c.l.b16 %v193
      %v269 = vunpack.c.l.b16 %v194
      %v270 = vunpack.c.l.b16 %v195
      %v271 = vunpack.c.l.b16 %v196
      %v272 = vunpack.c.l.b16 %v197
      %v273 = vunpack.c.l.b16 %v198
      %v274 = vunpack.c.l.b16 %v199
      %v275 = vunpack.c.l.b16 %v200
      %v276 = vunpack.c.l.b16 %v201
      %v277 = vunpack.c.l.b16 %v202
      %v278 = vunpack.c.l.b16 %v203
      %v279 = vunpack.c.l.b16 %v204
      %v280 = vunpack.c.l.b16 %v205
      %v281 = vunpack.c.l.b16 %v206
      %v282 = vpack.c.b16 %v251, %v250
      %v283 = vpack.c.b16 %v253, %v252
      %v284 = vpack.c.b16 %v255, %v254
      %v285 = vpack.c.b16 %v257, %v256
      %v286 = vpack.c.b16 %v259, %v258
      %v287 = vpack.c.b16 %v261, %v260
      %v288 = vpack.c.b16 %v263, %v262
      %v289 = vpack.c.b16 %v265, %v264
      %v290 = vpack.c.b16 %v267, %v266
      %v291 = vpack.c.b16 %v269, %v268
      %v292 = vpack.c.b16 %v271, %v270
      %v293 = vpack.c.b16 %v273, %v272
      %v294 = vpack.c.b16 %v275, %v274
      %v295 = vpack.c.b16 %v277, %v276
      %v296 = vpack.c.b16 %v279, %v278
      %v297 = vpack.c.b16 %v281, %v280
      %v302 = vunpack.c.l.b16 %v207
      %v303 = vunpack.c.l.b16 %v208
      %v304 = vunpack.c.l.b16 %v209
      %v305 = vunpack.c.l.b16 %v210
      %v306 = vpack.c.b16 %v303, %v302
      %v307 = vpack.c.b16 %v305, %v304
      %vm309 = vcmask 220160
      %v311 = vsel %vm309, %v282, 0
      %v314 = vsel %vm309, %v283, 0
      %v317 = vsel %vm309, %v284, 0
      %v320 = vsel %vm309, %v285, 0
      %v323 = vsel %vm309, %v286, 0
      %v326 = vsel %vm309, %v287, 0
      %v329 = vsel %vm309, %v288, 0
      %v332 = vsel %vm309, %v289, 0
      %v335 = vsel %vm309, %v290, 0
      %v338 = vsel %vm309, %v291, 0
      %v341 = vsel %vm309, %v292, 0
      %v344 = vsel %vm309, %v293, 0
      %v347 = vsel %vm309, %v294, 0
      %v350 = vsel %vm309, %v295, 0
      %v353 = vsel %vm309, %v296, 0
      %v356 = vsel %vm309, %v297, 0
      %vm358 = vcmask 1044480
      %vm359 = vcmask 1045504
      %v360 = vsel %vm358, 4294967295, 65535
      %v361 = vsel %vm359, %v360, 0
      %v363 = vand.u32 %v307, %v361
      %365 = vmatprep.subr.bf16.mxu0 0
      %366 = vmatpush1.bf16.msra.mxu0 %v306
      %367 = vmatprep.subr.bf16.mxu0 0
      %368 = vmatpush1.bf16.msra.mxu0 %v363
      %369 = vmatprep.subr.bf16.mxu0 0
      %370 = vmatpush1.bf16.msra.mxu0 0
      %371 = vmatprep.subr.bf16.mxu0 0
      %372 = vmatpush1.bf16.msra.mxu0 0
      %373 = vmatprep.subr.bf16.mxu0 0
      %374 = vmatpush1.bf16.msra.mxu0 0
      %375 = vmatprep.subr.bf16.mxu0 0
      %376 = vmatpush1.bf16.msra.mxu0 0
      %377 = vmatprep.subr.bf16.mxu0 0
      %378 = vmatpush1.bf16.msra.mxu0 0
      %379 = vmatprep.subr.bf16.mxu0 0
      %380 = vmatpush1.bf16.msra.mxu0 0
      %381 = vmatprep.subr.bf16.mxu0 0
      %382 = vmatpush1.bf16.msra.mxu0 0
      %383 = vmatprep.subr.bf16.mxu0 0
      %384 = vmatpush1.bf16.msra.mxu0 0
      %385 = vmatprep.subr.bf16.mxu0 0
      %386 = vmatpush1.bf16.msra.mxu0 0
      %387 = vmatprep.subr.bf16.mxu0 0
      %388 = vmatpush1.bf16.msra.mxu0 0
      %389 = vmatprep.subr.bf16.mxu0 0
      %390 = vmatpush1.bf16.msra.mxu0 0
      %391 = vmatprep.subr.bf16.mxu0 0
      %392 = vmatpush1.bf16.msra.mxu0 0
      %393 = vmatprep.subr.bf16.mxu0 0
      %394 = vmatpush1.bf16.msra.mxu0 0
      %395 = vmatprep.subr.bf16.mxu0 0
      %396 = vmatpush1.bf16.msra.mxu0 0
      %397 = vmatprep.mubr.bf16.mxu0 0
      %398 = vmatmul.mubr.bf16.gmra.mrb[0].mxu0 %v311
      %v399 = vpop.f32.mrb[0].mxu0
      %v400 = vadd.f32 %v216, %v399
      %v401 = vpop.f32.mrb[0].mxu0
      %v402 = vpop.f32.mrb[0].mxu0
      %v403 = vadd.f32 %v216, %v402
      %v404 = vpop.f32.mrb[0].mxu0
      %405 = vmatprep.mubr.bf16.mxu0 0
      %406 = vmatmul.mubr.bf16.gmra.mrb[0].mxu0 %v314
      %v407 = vpop.f32.mrb[0].mxu0
      %v408 = vadd.f32 %v216, %v407
      %v409 = vpop.f32.mrb[0].mxu0
      %v410 = vpop.f32.mrb[0].mxu0
      %v411 = vadd.f32 %v216, %v410
      %v412 = vpop.f32.mrb[0].mxu0
      %413 = vmatprep.mubr.bf16.mxu0 0
      %414 = vmatmul.mubr.bf16.gmra.mrb[0].mxu0 %v317
      %v415 = vpop.f32.mrb[0].mxu0
      %v416 = vadd.f32 %v216, %v415
      %v417 = vpop.f32.mrb[0].mxu0
      %v418 = vpop.f32.mrb[0].mxu0
      %v419 = vadd.f32 %v216, %v418
      %v420 = vpop.f32.mrb[0].mxu0
      %421 = vmatprep.mubr.bf16.mxu0 0
      %422 = vmatmul.mubr.bf16.gmra.mrb[0].mxu0 %v320
      %v423 = vpop.f32.mrb[0].mxu0
      %v424 = vadd.f32 %v216, %v423
      %v425 = vpop.f32.mrb[0].mxu0
      %v426 = vpop.f32.mrb[0].mxu0
      %v427 = vadd.f32 %v216, %v426
      %v428 = vpop.f32.mrb[0].mxu0
      %429 = vmatprep.mubr.bf16.mxu0 0
      %430 = vmatmul.mubr.bf16.gmra.mrb[0].mxu0 %v323
      %v431 = vpop.f32.mrb[0].mxu0
      %v432 = vadd.f32 %v216, %v431
      %v433 = vpop.f32.mrb[0].mxu0
      %v434 = vpop.f32.mrb[0].mxu0
      %v435 = vadd.f32 %v216, %v434
      %v436 = vpop.f32.mrb[0].mxu0
      %437 = vmatprep.mubr.bf16.mxu0 0
      %438 = vmatmul.mubr.bf16.gmra.mrb[0].mxu0 %v326
      %v439 = vpop.f32.mrb[0].mxu0
      %v440 = vadd.f32 %v216, %v439
      %v441 = vpop.f32.mrb[0].mxu0
      %v442 = vpop.f32.mrb[0].mxu0
      %v443 = vadd.f32 %v216, %v442
      %v444 = vpop.f32.mrb[0].mxu0
      %445 = vmatprep.mubr.bf16.mxu0 0
      %446 = vmatmul.mubr.bf16.gmra.mrb[0].mxu0 %v329
      %v447 = vpop.f32.mrb[0].mxu0
      %v448 = vadd.f32 %v216, %v447
      %v449 = vpop.f32.mrb[0].mxu0
      %v450 = vpop.f32.mrb[0].mxu0
      %v451 = vadd.f32 %v216, %v450
      %v452 = vpop.f32.mrb[0].mxu0
      %453 = vmatprep.mubr.bf16.mxu0 0
      %454 = vmatmul.mubr.bf16.gmra.mrb[0].mxu0 %v332
      %v455 = vpop.f32.mrb[0].mxu0
      %v456 = vadd.f32 %v216, %v455
      %v457 = vpop.f32.mrb[0].mxu0
      %v458 = vpop.f32.mrb[0].mxu0
      %v459 = vadd.f32 %v216, %v458
      %v460 = vpop.f32.mrb[0].mxu0
      %461 = vmatprep.mubr.bf16.mxu0 0
      %462 = vmatmul.mubr.bf16.gmra.mrb[0].mxu0 %v335
      %v463 = vpop.f32.mrb[0].mxu0
      %v464 = vadd.f32 %v216, %v463
      %v465 = vpop.f32.mrb[0].mxu0
      %v466 = vpop.f32.mrb[0].mxu0
      %v467 = vadd.f32 %v216, %v466
      %v468 = vpop.f32.mrb[0].mxu0
      %469 = vmatprep.mubr.bf16.mxu0 0
      %470 = vmatmul.mubr.bf16.gmra.mrb[0].mxu0 %v338
      %v471 = vpop.f32.mrb[0].mxu0
      %v472 = vadd.f32 %v216, %v471
      %v473 = vpop.f32.mrb[0].mxu0
      %v474 = vpop.f32.mrb[0].mxu0
      %v475 = vadd.f32 %v216, %v474
      %v476 = vpop.f32.mrb[0].mxu0
      %477 = vmatprep.mubr.bf16.mxu0 0
      %478 = vmatmul.mubr.bf16.gmra.mrb[0].mxu0 %v341
      %v479 = vpop.f32.mrb[0].mxu0
      %v480 = vadd.f32 %v216, %v479
      %v481 = vpop.f32.mrb[0].mxu0
      %v482 = vpop.f32.mrb[0].mxu0
      %v483 = vadd.f32 %v216, %v482
      %v484 = vpop.f32.mrb[0].mxu0
      %485 = vmatprep.mubr.bf16.mxu0 0
      %486 = vmatmul.mubr.bf16.gmra.mrb[0].mxu0 %v344
      %v487 = vpop.f32.mrb[0].mxu0
      %v488 = vadd.f32 %v216, %v487
      %v489 = vpop.f32.mrb[0].mxu0
      %v490 = vpop.f32.mrb[0].mxu0
      %v491 = vadd.f32 %v216, %v490
      %v492 = vpop.f32.mrb[0].mxu0
      %493 = vmatprep.mubr.bf16.mxu0 0
      %494 = vmatmul.mubr.bf16.gmra.mrb[0].mxu0 %v347
      %v495 = vpop.f32.mrb[0].mxu0
      %v496 = vadd.f32 %v216, %v495
      %v497 = vpop.f32.mrb[0].mxu0
      %v498 = vpop.f32.mrb[0].mxu0
      %v499 = vadd.f32 %v216, %v498
      %v500 = vpop.f32.mrb[0].mxu0
      %501 = vmatprep.mubr.bf16.mxu0 0
      %502 = vmatmul.mubr.bf16.gmra.mrb[0].mxu0 %v350
      %v503 = vpop.f32.mrb[0].mxu0
      %v504 = vadd.f32 %v216, %v503
      %v505 = vpop.f32.mrb[0].mxu0
      %v506 = vpop.f32.mrb[0].mxu0
      %v507 = vadd.f32 %v216, %v506
      %v508 = vpop.f32.mrb[0].mxu0
      %509 = vmatprep.mubr.bf16.mxu0 0
      %510 = vmatmul.mubr.bf16.gmra.mrb[0].mxu0 %v353
      %v511 = vpop.f32.mrb[0].mxu0
      %v512 = vadd.f32 %v216, %v511
      %v513 = vpop.f32.mrb[0].mxu0
      %v514 = vpop.f32.mrb[0].mxu0
      %v515 = vadd.f32 %v216, %v514
      %v516 = vpop.f32.mrb[0].mxu0
      %517 = vmatprep.mubr.bf16.mxu0 0
      %518 = vmatmul.mubr.bf16.gmra.mrb[0].mxu0 %v356
      %v519 = vpop.f32.mrb[0].mxu0
      %v520 = vadd.f32 %v216, %v519
      %v521 = vpop.f32.mrb[0].mxu0
      %v522 = vpop.f32.mrb[0].mxu0
      %v523 = vadd.f32 %v216, %v522
      %v524 = vpop.f32.mrb[0].mxu0
      %525 = vdwg.mxu0
      %vm526 = vcmp.gt.f32.partialorder %v400, 0.0
      %vm527 = vcmp.gt.f32.partialorder %v403, 0.0
      %vm528 = vcmp.gt.f32.partialorder %v408, 0.0
      %vm529 = vcmp.gt.f32.partialorder %v411, 0.0
      %vm530 = vcmp.gt.f32.partialorder %v416, 0.0
      %vm531 = vcmp.gt.f32.partialorder %v419, 0.0
      %vm532 = vcmp.gt.f32.partialorder %v424, 0.0
      %vm533 = vcmp.gt.f32.partialorder %v427, 0.0
      %vm534 = vcmp.gt.f32.partialorder %v432, 0.0
      %vm535 = vcmp.gt.f32.partialorder %v435, 0.0
      %vm536 = vcmp.gt.f32.partialorder %v440, 0.0
      %vm537 = vcmp.gt.f32.partialorder %v443, 0.0
      %vm538 = vcmp.gt.f32.partialorder %v448, 0.0
      %vm539 = vcmp.gt.f32.partialorder %v451, 0.0
      %vm540 = vcmp.gt.f32.partialorder %v456, 0.0
      %vm541 = vcmp.gt.f32.partialorder %v459, 0.0
      %vm542 = vcmp.gt.f32.partialorder %v464, 0.0
      %vm543 = vcmp.gt.f32.partialorder %v467, 0.0
      %vm544 = vcmp.gt.f32.partialorder %v472, 0.0
      %vm545 = vcmp.gt.f32.partialorder %v475, 0.0
      %vm546 = vcmp.gt.f32.partialorder %v480, 0.0
      %vm547 = vcmp.gt.f32.partialorder %v483, 0.0
      %vm548 = vcmp.gt.f32.partialorder %v488, 0.0
      %vm549 = vcmp.gt.f32.partialorder %v491, 0.0
      %vm550 = vcmp.gt.f32.partialorder %v496, 0.0
      %vm551 = vcmp.gt.f32.partialorder %v499, 0.0
      %vm552 = vcmp.gt.f32.partialorder %v504, 0.0
      %vm553 = vcmp.gt.f32.partialorder %v507, 0.0
      %vm554 = vcmp.gt.f32.partialorder %v512, 0.0
      %vm555 = vcmp.gt.f32.partialorder %v515, 0.0
      %vm556 = vcmp.gt.f32.partialorder %v520, 0.0
      %vm557 = vcmp.gt.f32.partialorder %v523, 0.0
      %v558 = vmul.f32 %v400, 0.2
      %v559 = vmul.f32 %v403, 0.2
      %v560 = vmul.f32 %v408, 0.2
      %v561 = vmul.f32 %v411, 0.2
      %v562 = vmul.f32 %v416, 0.2
      %v563 = vmul.f32 %v419, 0.2
      %v564 = vmul.f32 %v424, 0.2
      %v565 = vmul.f32 %v427, 0.2
      %v566 = vmul.f32 %v432, 0.2
      %v567 = vmul.f32 %v435, 0.2
      %v568 = vmul.f32 %v440, 0.2
      %v569 = vmul.f32 %v443, 0.2
      %v570 = vmul.f32 %v448, 0.2
      %v571 = vmul.f32 %v451, 0.2
      %v572 = vmul.f32 %v456, 0.2
      %v573 = vmul.f32 %v459, 0.2
      %v574 = vmul.f32 %v464, 0.2
      %v575 = vmul.f32 %v467, 0.2
      %v576 = vmul.f32 %v472, 0.2
      %v577 = vmul.f32 %v475, 0.2
      %v578 = vmul.f32 %v480, 0.2
      %v579 = vmul.f32 %v483, 0.2
      %v580 = vmul.f32 %v488, 0.2
      %v581 = vmul.f32 %v491, 0.2
      %v582 = vmul.f32 %v496, 0.2
      %v583 = vmul.f32 %v499, 0.2
      %v584 = vmul.f32 %v504, 0.2
      %v585 = vmul.f32 %v507, 0.2
      %v586 = vmul.f32 %v512, 0.2
      %v587 = vmul.f32 %v515, 0.2
      %v588 = vmul.f32 %v520, 0.2
      %v589 = vmul.f32 %v523, 0.2
      %v590 = vsel %vm526, %v400, %v558
      %v591 = vsel %vm527, %v403, %v559
      %v592 = vsel %vm528, %v408, %v560
      %v593 = vsel %vm529, %v411, %v561
      %v594 = vsel %vm530, %v416, %v562
      %v595 = vsel %vm531, %v419, %v563
      %v596 = vsel %vm532, %v424, %v564
      %v597 = vsel %vm533, %v427, %v565
      %v598 = vsel %vm534, %v432, %v566
      %v599 = vsel %vm535, %v435, %v567
      %v600 = vsel %vm536, %v440, %v568
      %v601 = vsel %vm537, %v443, %v569
      %v602 = vsel %vm538, %v448, %v570
      %v603 = vsel %vm539, %v451, %v571
      %v604 = vsel %vm540, %v456, %v572
      %v605 = vsel %vm541, %v459, %v573
      %v606 = vsel %vm542, %v464, %v574
      %v607 = vsel %vm543, %v467, %v575
      %v608 = vsel %vm544, %v472, %v576
      %v609 = vsel %vm545, %v475, %v577
      %v610 = vsel %vm546, %v480, %v578
      %v611 = vsel %vm547, %v483, %v579
      %v612 = vsel %vm548, %v488, %v580
      %v613 = vsel %vm549, %v491, %v581
      %v614 = vsel %vm550, %v496, %v582
      %v615 = vsel %vm551, %v499, %v583
      %v616 = vsel %vm552, %v504, %v584
      %v617 = vsel %vm553, %v507, %v585
      %v618 = vsel %vm554, %v512, %v586
      %v619 = vsel %vm555, %v515, %v587
      %v620 = vsel %vm556, %v520, %v588
      %v621 = vsel %vm557, %v523, %v589
      %v622 = vpack.c.bf16 %v591, %v590
      %v623 = vpack.c.bf16 %v593, %v592
      %v624 = vpack.c.bf16 %v595, %v594
      %v625 = vpack.c.bf16 %v597, %v596
      %v626 = vpack.c.bf16 %v599, %v598
      %v627 = vpack.c.bf16 %v601, %v600
      %v628 = vpack.c.bf16 %v603, %v602
      %v629 = vpack.c.bf16 %v605, %v604
      %v630 = vpack.c.bf16 %v607, %v606
      %v631 = vpack.c.bf16 %v609, %v608
      %v632 = vpack.c.bf16 %v611, %v610
      %v633 = vpack.c.bf16 %v613, %v612
      %v634 = vpack.c.bf16 %v615, %v614
      %v635 = vpack.c.bf16 %v617, %v616
      %v636 = vpack.c.bf16 %v619, %v618
      %v637 = vpack.c.bf16 %v621, %v620
      %v654 = vunpack.c.l.b16 %v622
      %v655 = vunpack.c.h.b16 %v622
      %v656 = vunpack.c.l.b16 %v623
      %v657 = vunpack.c.h.b16 %v623
      %v658 = vunpack.c.l.b16 %v624
      %v659 = vunpack.c.h.b16 %v624
      %v660 = vunpack.c.l.b16 %v625
      %v661 = vunpack.c.h.b16 %v625
      %v662 = vunpack.c.l.b16 %v626
      %v663 = vunpack.c.h.b16 %v626
      %v664 = vunpack.c.l.b16 %v627
      %v665 = vunpack.c.h.b16 %v627
      %v666 = vunpack.c.l.b16 %v628
      %v667 = vunpack.c.h.b16 %v628
      %v668 = vunpack.c.l.b16 %v629
      %v669 = vunpack.c.h.b16 %v629
      %v670 = vunpack.c.l.b16 %v630
      %v671 = vunpack.c.h.b16 %v630
      %v672 = vunpack.c.l.b16 %v631
      %v673 = vunpack.c.h.b16 %v631
      %v674 = vunpack.c.l.b16 %v632
      %v675 = vunpack.c.h.b16 %v632
      %v676 = vunpack.c.l.b16 %v633
      %v677 = vunpack.c.h.b16 %v633
      %v678 = vunpack.c.l.b16 %v634
      %v679 = vunpack.c.h.b16 %v634
      %v680 = vunpack.c.l.b16 %v635
      %v681 = vunpack.c.h.b16 %v635
      %v682 = vunpack.c.l.b16 %v636
      %v683 = vunpack.c.h.b16 %v636
      %v684 = vunpack.c.l.b16 %v637
      %v685 = vunpack.c.h.b16 %v637
      %v686 = vpack.c.b16 %v654, %v654
      %v687 = vpack.c.b16 %v655, %v655
      %v688 = vpack.c.b16 %v656, %v656
      %v689 = vpack.c.b16 %v657, %v657
      %v690 = vpack.c.b16 %v658, %v658
      %v691 = vpack.c.b16 %v659, %v659
      %v692 = vpack.c.b16 %v660, %v660
      %v693 = vpack.c.b16 %v661, %v661
      %v694 = vpack.c.b16 %v662, %v662
      %v695 = vpack.c.b16 %v663, %v663
      %v696 = vpack.c.b16 %v664, %v664
      %v697 = vpack.c.b16 %v665, %v665
      %v698 = vpack.c.b16 %v666, %v666
      %v699 = vpack.c.b16 %v667, %v667
      %v700 = vpack.c.b16 %v668, %v668
      %v701 = vpack.c.b16 %v669, %v669
      %v702 = vpack.c.b16 %v670, %v670
      %v703 = vpack.c.b16 %v671, %v671
      %v704 = vpack.c.b16 %v672, %v672
      %v705 = vpack.c.b16 %v673, %v673
      %v706 = vpack.c.b16 %v674, %v674
      %v707 = vpack.c.b16 %v675, %v675
      %v708 = vpack.c.b16 %v676, %v676
      %v709 = vpack.c.b16 %v677, %v677
      %v710 = vpack.c.b16 %v678, %v678
      %v711 = vpack.c.b16 %v679, %v679
      %v712 = vpack.c.b16 %v680, %v680
      %v713 = vpack.c.b16 %v681, %v681
      %v714 = vpack.c.b16 %v682, %v682
      %v715 = vpack.c.b16 %v683, %v683
      %v716 = vpack.c.b16 %v684, %v684
      %v717 = vpack.c.b16 %v685, %v685
      %vm750 = vcmask 257024
      %751 = vst.msk [vmem:[%s172] sm:$0xf] %vm750, %v686
      %752 = vst.msk [vmem:[%s172 + $0x4] sm:$0xf] %vm750, %v687
      %753 = vst.msk [vmem:[%s172 + $0x8] sm:$0xf] %vm750, %v688
      %754 = vst.msk [vmem:[%s172 + $0xc] sm:$0xf] %vm750, %v689
      %755 = vst.msk [vmem:[%s172 + $0x10] sm:$0xf] %vm750, %v690
      %756 = vst.msk [vmem:[%s172 + $0x14] sm:$0xf] %vm750, %v691
      %757 = vst.msk [vmem:[%s172 + $0x18] sm:$0xf] %vm750, %v692
      %758 = vst.msk [vmem:[%s172 + $0x1c] sm:$0xf] %vm750, %v693
      %759 = vst.msk [vmem:[%s172 + $0x20] sm:$0xf] %vm750, %v694
      %760 = vst.msk [vmem:[%s172 + $0x24] sm:$0xf] %vm750, %v695
      %761 = vst.msk [vmem:[%s172 + $0x28] sm:$0xf] %vm750, %v696
      %762 = vst.msk [vmem:[%s172 + $0x2c] sm:$0xf] %vm750, %v697
      %763 = vst.msk [vmem:[%s172 + $0x30] sm:$0xf] %vm750, %v698
      %764 = vst.msk [vmem:[%s172 + $0x34] sm:$0xf] %vm750, %v699
      %765 = vst.msk [vmem:[%s172 + $0x38] sm:$0xf] %vm750, %v700
      %766 = vst.msk [vmem:[%s172 + $0x3c] sm:$0xf] %vm750, %v701
      %767 = vst.msk [vmem:[%s172 + $0x40] sm:$0xf] %vm750, %v702
      %768 = vst.msk [vmem:[%s172 + $0x44] sm:$0xf] %vm750, %v703
      %769 = vst.msk [vmem:[%s172 + $0x48] sm:$0xf] %vm750, %v704
      %770 = vst.msk [vmem:[%s172 + $0x4c] sm:$0xf] %vm750, %v705
      %771 = vst.msk [vmem:[%s172 + $0x50] sm:$0xf] %vm750, %v706
      %772 = vst.msk [vmem:[%s172 + $0x54] sm:$0xf] %vm750, %v707
      %773 = vst.msk [vmem:[%s172 + $0x58] sm:$0xf] %vm750, %v708
      %774 = vst.msk [vmem:[%s172 + $0x5c] sm:$0xf] %vm750, %v709
      %775 = vst.msk [vmem:[%s172 + $0x60] sm:$0xf] %vm750, %v710
      %776 = vst.msk [vmem:[%s172 + $0x64] sm:$0xf] %vm750, %v711
      %777 = vst.msk [vmem:[%s172 + $0x68] sm:$0xf] %vm750, %v712
      %778 = vst.msk [vmem:[%s172 + $0x6c] sm:$0xf] %vm750, %v713
      %779 = vst.msk [vmem:[%s172 + $0x70] sm:$0xf] %vm750, %v714
      %780 = vst.msk [vmem:[%s172 + $0x74] sm:$0xf] %vm750, %v715
      %781 = vst.msk [vmem:[%s172 + $0x78] sm:$0xf] %vm750, %v716
      %782 = vst.msk [vmem:[%s172 + $0x7c] sm:$0xf] %vm750, %v717
      %s783 = smul.u32 32, %s14
      %p784 = scmp.lt.s32.totalorder %s783, 63
      %s785 = scalar_select %p784, %s783, 63
      %s786 = smul.addr %s785, 4
      %s787 = scalar_lea.vmem %s3, %s786
      // Predicated region
      $region33: #{vae_forward.8} parent=31 // pred_check
        %p788 = pneg %p100
      $region34: #{vae_forward.8} parent=31 // pred_check_branch
        %790 = sbr.rel (%p788) target = $region36
      $region35: #{vae_forward.8} parent=31 // pred_region
        %s791 = smul.u32 32, %s14
      $region36: #{vae_forward.8} parent=31 // pred_fallthru
        _
    $region32: #{vae_forward.8} parent=5 // pred_fallthru
      _
    %p792 = scmp.le.s32.totalorder 2, %s9
    // Predicated region
    $region37: #{vae_forward.8} parent=5 // pred_check
      %p793 = pneg %p792
    $region38: #{vae_forward.8} parent=5 // pred_check_branch
      %795 = sbr.rel (%p793) target = $region40
    $region39: #{vae_forward.8} parent=5 // pred_region
      %s796 = ssub.s32 %s9, 2
      // Predicated region
      $region41: #{vae_forward.8} parent=39 // pred_check
        %p797 = pneg %p106
      $region42: #{vae_forward.8} parent=39 // pred_check_branch
        %799 = sbr.rel (%p797) target = $region44
      $region43: #{vae_forward.8} parent=39 // pred_region
        %s800 = smul.u32 32, %s15
        %p801 = scmp.lt.s32.totalorder %s800, 63
        %s802 = scalar_select %p801, %s800, 63
        %s803 = smul.addr %s802, 4
        %s804 = scalar_lea.vmem %s3, %s803
      $region44: #{vae_forward.8} parent=39 // pred_fallthru
        _
    $region40: #{vae_forward.8} parent=5 // pred_fallthru
      _
  $region6: #{vae_forward.8} parent=0 // loop_footer
    %s13 = sadd.s32 1, %s9
  $region7: #{vae_forward.8} parent=0 // loop_footer_branch
    %8 = sbr.rel target = $region3
  $region8: #{vae_forward.8} parent=0 // loop_exit
    _

// kernel: vae_forward.9
$region0: #{vae_forward.9}
  #allocation0 [shape = 'u32[]', space=smem, size = 0x4, offset = 0x4, fixed_abs, tag = 'smem constant byte address 0x4 - core index']
  #allocation1 [shape = 'u32[144,128]{1,0:T(1,128)}', space=vmem, size = 0x12000, scoped, tag = 'internal scratch']
  %s0 = inlined_call_operand.vmem [shape: bf16[128,288], index: 0, kind: input, shape index: {}]
  %s1 = inlined_call_operand.vmem [shape: bf16[288,64], index: 1, kind: input, shape index: {}]
  %s2 = inlined_call_operand.vmem [shape: f32[1,64], index: 2, kind: input, shape index: {}]
  %s3 = inlined_call_operand.vmem [shape: bf16[128,64], index: 3, kind: output, shape index: {}]
  %s4 = sld [smem:[#allocation0]]
  $region22: #{vae_forward.9} parent=0
    _
  %s6 = ssub.s32 1, %s4
  %s7 = scalar_select 0, %s6, %s4
  // Predicated region
  $region2: #{vae_forward.9} parent=0 // pred_check
    _
  $region3: #{vae_forward.9} parent=0 // pred_check_branch
    %9 = sbr.rel (0) target = $region5
  $region4: #{vae_forward.9} parent=0 // pred_region
    _
  $region5: #{vae_forward.9} parent=0 // pred_fallthru
    _
  // Predicated region
  $region6: #{vae_forward.9} parent=0 // pred_check
    _
  $region7: #{vae_forward.9} parent=0 // pred_check_branch
    %11 = sbr.rel (0) target = $region9
  $region8: #{vae_forward.9} parent=0 // pred_region
    _
  $region9: #{vae_forward.9} parent=0 // pred_fallthru
    _
  // Predicated region
  $region10: #{vae_forward.9} parent=0 // pred_check
    _
  $region11: #{vae_forward.9} parent=0 // pred_check_branch
    %13 = sbr.rel (0) target = $region13
  $region12: #{vae_forward.9} parent=0 // pred_region
    _
  $region13: #{vae_forward.9} parent=0 // pred_fallthru
    _
  %v15 = vld [vmem:[%s0] sm:$0xff]
  %v16 = vld [vmem:[%s0 + $0x8] sm:$0xf]
  %v17 = vld [vmem:[%s0 + $0xc] sm:$0xff]
  %v18 = vld [vmem:[%s0 + $0x14] sm:$0xf]
  %v19 = vld [vmem:[%s0 + $0x18] sm:$0xff]
  %v20 = vld [vmem:[%s0 + $0x20] sm:$0xf]
  %v21 = vld [vmem:[%s0 + $0x24] sm:$0xff]
  %v22 = vld [vmem:[%s0 + $0x2c] sm:$0xf]
  %v23 = vld [vmem:[%s0 + $0x30] sm:$0xff]
  %v24 = vld [vmem:[%s0 + $0x38] sm:$0xf]
  %v25 = vld [vmem:[%s0 + $0x3c] sm:$0xff]
  %v26 = vld [vmem:[%s0 + $0x44] sm:$0xf]
  %v27 = vld [vmem:[%s0 + $0x48] sm:$0xff]
  %v28 = vld [vmem:[%s0 + $0x50] sm:$0xf]
  %v29 = vld [vmem:[%s0 + $0x54] sm:$0xff]
  %v30 = vld [vmem:[%s0 + $0x5c] sm:$0xf]
  %v31 = vld [vmem:[%s0 + $0x60] sm:$0xff]
  %v32 = vld [vmem:[%s0 + $0x68] sm:$0xf]
  %v33 = vld [vmem:[%s0 + $0x6c] sm:$0xff]
  %v34 = vld [vmem:[%s0 + $0x74] sm:$0xf]
  %v35 = vld [vmem:[%s0 + $0x78] sm:$0xff]
  %v36 = vld [vmem:[%s0 + $0x80] sm:$0xf]
  %v37 = vld [vmem:[%s0 + $0x84] sm:$0xff]
  %v38 = vld [vmem:[%s0 + $0x8c] sm:$0xf]
  %v39 = vld [vmem:[%s0 + $0x90] sm:$0xff]
  %v40 = vld [vmem:[%s0 + $0x98] sm:$0xf]
  %v41 = vld [vmem:[%s0 + $0x9c] sm:$0xff]
  %v42 = vld [vmem:[%s0 + $0xa4] sm:$0xf]
  %v43 = vld [vmem:[%s0 + $0xa8] sm:$0xff]
  %v44 = vld [vmem:[%s0 + $0xb0] sm:$0xf]
  %v45 = vld [vmem:[%s0 + $0xb4] sm:$0xff]
  %v46 = vld [vmem:[%s0 + $0xbc] sm:$0xf]
  %v47 = vld [vmem:[%s1] sm:$0xf]
  %v48 = vld [vmem:[%s1 + $0x4] sm:$0xf]
  %v49 = vld [vmem:[%s1 + $0x8] sm:$0xf]
  %v50 = vld [vmem:[%s1 + $0xc] sm:$0xf]
  %v51 = vld [vmem:[%s1 + $0x10] sm:$0xf]
  %v52 = vld [vmem:[%s1 + $0x14] sm:$0xf]
  %v53 = vld [vmem:[%s1 + $0x18] sm:$0xf]
  %v54 = vld [vmem:[%s1 + $0x1c] sm:$0xf]
  %v55 = vld [vmem:[%s1 + $0x20] sm:$0xf]
  %v56 = vld [vmem:[%s1 + $0x24] sm:$0xf]
  %v57 = vld [vmem:[%s1 + $0x28] sm:$0xf]
  %v58 = vld [vmem:[%s1 + $0x2c] sm:$0xf]
  %v59 = vld [vmem:[%s1 + $0x30] sm:$0xf]
  %v60 = vld [vmem:[%s1 + $0x34] sm:$0xf]
  %v61 = vld [vmem:[%s1 + $0x38] sm:$0xf]
  %v62 = vld [vmem:[%s1 + $0x3c] sm:$0xf]
  %v63 = vld [vmem:[%s1 + $0x40] sm:$0xf]
  %v64 = vld [vmem:[%s1 + $0x44] sm:$0xf]
  %v65 = vld [vmem:[%s1 + $0x48] sm:$0xf]
  %v66 = vld [vmem:[%s1 + $0x4c] sm:$0xf]
  %v67 = vld [vmem:[%s1 + $0x50] sm:$0xf]
  %v68 = vld [vmem:[%s1 + $0x54] sm:$0xf]
  %v69 = vld [vmem:[%s1 + $0x58] sm:$0xf]
  %v70 = vld [vmem:[%s1 + $0x5c] sm:$0xf]
  %v71 = vld [vmem:[%s1 + $0x60] sm:$0xf]
  %v72 = vld [vmem:[%s1 + $0x64] sm:$0xf]
  %v73 = vld [vmem:[%s1 + $0x68] sm:$0xf]
  %v74 = vld [vmem:[%s1 + $0x6c] sm:$0xf]
  %v75 = vld [vmem:[%s1 + $0x70] sm:$0xf]
  %v76 = vld [vmem:[%s1 + $0x74] sm:$0xf]
  %v77 = vld [vmem:[%s1 + $0x78] sm:$0xf]
  %v78 = vld [vmem:[%s1 + $0x7c] sm:$0xf]
  %v79 = vld [vmem:[%s1 + $0x80] sm:$0xf]
  %v80 = vld [vmem:[%s1 + $0x84] sm:$0xf]
  %v81 = vld [vmem:[%s1 + $0x88] sm:$0xf]
  %v82 = vld [vmem:[%s1 + $0x8c] sm:$0xf]
  %v83 = vld [vmem:[%s2] sm:$0x1]
  %v85 = vlaneseq
  %v86 = vshrl.u32 %v85, 7
  %v87 = vsub.s32 0, %v86
  %v88 = vrot.slane %v83, %v87
  %v122 = vunpack.c.l.b16 %v15
  %v123 = vunpack.c.h.b16 %v15
  %v124 = vunpack.c.l.b16 %v16
  %v125 = vunpack.c.l.b16 %v17
  %v126 = vunpack.c.h.b16 %v17
  %v127 = vunpack.c.l.b16 %v18
  %v128 = vunpack.c.l.b16 %v19
  %v129 = vunpack.c.h.b16 %v19
  %v130 = vunpack.c.l.b16 %v20
  %v131 = vunpack.c.l.b16 %v21
  %v132 = vunpack.c.h.b16 %v21
  %v133 = vunpack.c.l.b16 %v22
  %v134 = vunpack.c.l.b16 %v23
  %v135 = vunpack.c.h.b16 %v23
  %v136 = vunpack.c.l.b16 %v24
  %v137 = vunpack.c.l.b16 %v25
  %v138 = vunpack.c.h.b16 %v25
  %v139 = vunpack.c.l.b16 %v26
  %v140 = vunpack.c.l.b16 %v27
  %v141 = vunpack.c.h.b16 %v27
  %v142 = vunpack.c.l.b16 %v28
  %v143 = vunpack.c.l.b16 %v29
  %v144 = vunpack.c.h.b16 %v29
  %v145 = vunpack.c.l.b16 %v30
  %v146 = vunpack.c.l.b16 %v31
  %v147 = vunpack.c.h.b16 %v31
  %v148 = vunpack.c.l.b16 %v32
  %v149 = vunpack.c.l.b16 %v33
  %v150 = vunpack.c.h.b16 %v33
  %v151 = vunpack.c.l.b16 %v34
  %v152 = vunpack.c.l.b16 %v35
  %v153 = vunpack.c.h.b16 %v35
  %v154 = vunpack.c.l.b16 %v36
  %v155 = vunpack.c.l.b16 %v37
  %v156 = vunpack.c.h.b16 %v37
  %v157 = vunpack.c.l.b16 %v38
  %v158 = vunpack.c.l.b16 %v39
  %v159 = vunpack.c.h.b16 %v39
  %v160 = vunpack.c.l.b16 %v40
  %v161 = vunpack.c.l.b16 %v41
  %v162 = vunpack.c.h.b16 %v41
  %v163 = vunpack.c.l.b16 %v42
  %v164 = vunpack.c.l.b16 %v43
  %v165 = vunpack.c.h.b16 %v43
  %v166 = vunpack.c.l.b16 %v44
  %v167 = vunpack.c.l.b16 %v45
  %v168 = vunpack.c.h.b16 %v45
  %v169 = vunpack.c.l.b16 %v46
  %v170 = vpack.c.b16 %v125, %v122
  %v171 = vpack.c.b16 %v126, %v123
  %v172 = vpack.c.b16 %v127, %v124
  %v173 = vpack.c.b16 %v131, %v128
  %v174 = vpack.c.b16 %v132, %v129
  %v175 = vpack.c.b16 %v133, %v130
  %v176 = vpack.c.b16 %v137, %v134
  %v177 = vpack.c.b16 %v138, %v135
  %v178 = vpack.c.b16 %v139, %v136
  %v179 = vpack.c.b16 %v143, %v140
  %v180 = vpack.c.b16 %v144, %v141
  %v181 = vpack.c.b16 %v145, %v142
  %v182 = vpack.c.b16 %v149, %v146
  %v183 = vpack.c.b16 %v150, %v147
  %v184 = vpack.c.b16 %v151, %v148
  %v185 = vpack.c.b16 %v155, %v152
  %v186 = vpack.c.b16 %v156, %v153
  %v187 = vpack.c.b16 %v157, %v154
  %v188 = vpack.c.b16 %v161, %v158
  %v189 = vpack.c.b16 %v162, %v159
  %v190 = vpack.c.b16 %v163, %v160
  %v191 = vpack.c.b16 %v167, %v164
  %v192 = vpack.c.b16 %v168, %v165
  %v193 = vpack.c.b16 %v169, %v166
  %v246 = vunpack.c.l.b16 %v47
  %v247 = vunpack.c.l.b16 %v48
  %v248 = vunpack.c.l.b16 %v49
  %v249 = vunpack.c.l.b16 %v50
  %v250 = vunpack.c.l.b16 %v51
  %v251 = vunpack.c.l.b16 %v52
  %v252 = vunpack.c.l.b16 %v53
  %v253 = vunpack.c.l.b16 %v54
  %v254 = vunpack.c.l.b16 %v55
  %v255 = vunpack.c.l.b16 %v56
  %v256 = vunpack.c.l.b16 %v57
  %v257 = vunpack.c.l.b16 %v58
  %v258 = vunpack.c.l.b16 %v59
  %v259 = vunpack.c.l.b16 %v60
  %v260 = vunpack.c.l.b16 %v61
  %v261 = vunpack.c.l.b16 %v62
  %v262 = vunpack.c.l.b16 %v63
  %v263 = vunpack.c.l.b16 %v64
  %v264 = vunpack.c.l.b16 %v65
  %v265 = vunpack.c.l.b16 %v66
  %v266 = vunpack.c.l.b16 %v67
  %v267 = vunpack.c.l.b16 %v68
  %v268 = vunpack.c.l.b16 %v69
  %v269 = vunpack.c.l.b16 %v70
  %v270 = vunpack.c.l.b16 %v71
  %v271 = vunpack.c.l.b16 %v72
  %v272 = vunpack.c.l.b16 %v73
  %v273 = vunpack.c.l.b16 %v74
  %v274 = vunpack.c.l.b16 %v75
  %v275 = vunpack.c.l.b16 %v76
  %v276 = vunpack.c.l.b16 %v77
  %v277 = vunpack.c.l.b16 %v78
  %v278 = vunpack.c.l.b16 %v79
  %v279 = vunpack.c.l.b16 %v80
  %v280 = vunpack.c.l.b16 %v81
  %v281 = vunpack.c.l.b16 %v82
  %v282 = vpack.c.b16 %v247, %v246
  %v283 = vpack.c.b16 %v249, %v248
  %v284 = vpack.c.b16 %v251, %v250
  %v285 = vpack.c.b16 %v253, %v252
  %v286 = vpack.c.b16 %v255, %v254
  %v287 = vpack.c.b16 %v257, %v256
  %v288 = vpack.c.b16 %v259, %v258
  %v289 = vpack.c.b16 %v261, %v260
  %v290 = vpack.c.b16 %v263, %v262
  %v291 = vpack.c.b16 %v265, %v264
  %v292 = vpack.c.b16 %v267, %v266
  %v293 = vpack.c.b16 %v269, %v268
  %v294 = vpack.c.b16 %v271, %v270
  %v295 = vpack.c.b16 %v273, %v272
  %v296 = vpack.c.b16 %v275, %v274
  %v297 = vpack.c.b16 %v277, %v276
  %v298 = vpack.c.b16 %v279, %v278
  %v299 = vpack.c.b16 %v281, %v280
  %vm318 = vcmask 261120
  %v320 = vsel %vm318, %v172, 0
  %v323 = vsel %vm318, %v175, 0
  %v326 = vsel %vm318, %v178, 0
  %v329 = vsel %vm318, %v181, 0
  %v332 = vsel %vm318, %v184, 0
  %v335 = vsel %vm318, %v187, 0
  %v338 = vsel %vm318, %v190, 0
  %v341 = vsel %vm318, %v193, 0
  %343 = vmatprep.subr.bf16.mxu0 0
  %344 = vmatpush1.bf16.msra.mxu0 %v282
  %345 = vmatprep.subr.bf16.mxu0 0
  %346 = vmatpush1.bf16.msra.mxu0 %v283
  %347 = vmatprep.subr.bf16.mxu0 0
  %348 = vmatpush1.bf16.msra.mxu0 %v284
  %349 = vmatprep.subr.bf16.mxu0 0
  %350 = vmatpush1.bf16.msra.mxu0 %v285
  %351 = vmatprep.subr.bf16.mxu0 0
  %352 = vmatpush1.bf16.msra.mxu0 %v286
  %353 = vmatprep.subr.bf16.mxu0 0
  %354 = vmatpush1.bf16.msra.mxu0 %v287
  %355 = vmatprep.subr.bf16.mxu0 0
  %356 = vmatpush1.bf16.msra.mxu0 %v288
  %357 = vmatprep.subr.bf16.mxu0 0
  %358 = vmatpush1.bf16.msra.mxu0 %v289
  %359 = vmatprep.subr.bf16.mxu0 0
  %360 = vmatpush1.bf16.msra.mxu0 %v290
  %361 = vmatprep.subr.bf16.mxu0 0
  %362 = vmatpush1.bf16.msra.mxu0 %v291
  %363 = vmatprep.subr.bf16.mxu0 0
  %364 = vmatpush1.bf16.msra.mxu0 %v292
  %365 = vmatprep.subr.bf16.mxu0 0
  %366 = vmatpush1.bf16.msra.mxu0 %v293
  %367 = vmatprep.subr.bf16.mxu0 0
  %368 = vmatpush1.bf16.msra.mxu0 %v294
  %369 = vmatprep.subr.bf16.mxu0 0
  %370 = vmatpush1.bf16.msra.mxu0 %v295
  %371 = vmatprep.subr.bf16.mxu0 0
  %372 = vmatpush1.bf16.msra.mxu0 %v296
  %373 = vmatprep.subr.bf16.mxu0 0
  %374 = vmatpush1.bf16.msra.mxu0 %v297
  %375 = vmatprep.mubr.bf16.mxu0 %v171
  %376 = vmatmul.mubr.bf16.gmra.mrb[0].mxu0 %v170
  %v377 = vpop.f32.mrb[0].mxu0
  %v378 = vadd.f32 %v88, %v377
  %v379 = vpop.f32.mrb[0].mxu0
  %v380 = vpop.f32.mrb[0].mxu0
  %v381 = vadd.f32 %v88, %v380
  %v382 = vpop.f32.mrb[0].mxu0
  %383 = vmatprep.mubr.bf16.mxu0 %v174
  %384 = vmatmul.mubr.bf16.gmra.mrb[0].mxu0 %v173
  %v385 = vpop.f32.mrb[0].mxu0
  %v386 = vadd.f32 %v88, %v385
  %v387 = vpop.f32.mrb[0].mxu0
  %v388 = vpop.f32.mrb[0].mxu0
  %v389 = vadd.f32 %v88, %v388
  %v390 = vpop.f32.mrb[0].mxu0
  %391 = vmatprep.mubr.bf16.mxu0 %v177
  %392 = vmatmul.mubr.bf16.gmra.mrb[0].mxu0 %v176
  %v393 = vpop.f32.mrb[0].mxu0
  %v394 = vadd.f32 %v88, %v393
  %v395 = vpop.f32.mrb[0].mxu0
  %v396 = vpop.f32.mrb[0].mxu0
  %v397 = vadd.f32 %v88, %v396
  %v398 = vpop.f32.mrb[0].mxu0
  %399 = vmatprep.mubr.bf16.mxu0 %v180
  %400 = vmatmul.mubr.bf16.gmra.mrb[0].mxu0 %v179
  %v401 = vpop.f32.mrb[0].mxu0
  %v402 = vadd.f32 %v88, %v401
  %v403 = vpop.f32.mrb[0].mxu0
  %v404 = vpop.f32.mrb[0].mxu0
  %v405 = vadd.f32 %v88, %v404
  %v406 = vpop.f32.mrb[0].mxu0
  %407 = vmatprep.mubr.bf16.mxu0 %v183
  %408 = vmatmul.mubr.bf16.gmra.mrb[0].mxu0 %v182
  %v409 = vpop.f32.mrb[0].mxu0
  %v410 = vadd.f32 %v88, %v409
  %v411 = vpop.f32.mrb[0].mxu0
  %v412 = vpop.f32.mrb[0].mxu0
  %v413 = vadd.f32 %v88, %v412
  %v414 = vpop.f32.mrb[0].mxu0
  %415 = vmatprep.mubr.bf16.mxu0 %v186
  %416 = vmatmul.mubr.bf16.gmra.mrb[0].mxu0 %v185
  %v417 = vpop.f32.mrb[0].mxu0
  %v418 = vadd.f32 %v88, %v417
  %v419 = vpop.f32.mrb[0].mxu0
  %v420 = vpop.f32.mrb[0].mxu0
  %v421 = vadd.f32 %v88, %v420
  %v422 = vpop.f32.mrb[0].mxu0
  %423 = vmatprep.mubr.bf16.mxu0 %v189
  %424 = vmatmul.mubr.bf16.gmra.mrb[0].mxu0 %v188
  %v425 = vpop.f32.mrb[0].mxu0
  %v426 = vadd.f32 %v88, %v425
  %v427 = vpop.f32.mrb[0].mxu0
  %v428 = vpop.f32.mrb[0].mxu0
  %v429 = vadd.f32 %v88, %v428
  %v430 = vpop.f32.mrb[0].mxu0
  %431 = vmatprep.mubr.bf16.mxu0 %v192
  %432 = vmatmul.mubr.bf16.gmra.mrb[0].mxu0 %v191
  %v433 = vpop.f32.mrb[0].mxu0
  %v434 = vadd.f32 %v88, %v433
  %v435 = vpop.f32.mrb[0].mxu0
  %v436 = vpop.f32.mrb[0].mxu0
  %v437 = vadd.f32 %v88, %v436
  %v438 = vpop.f32.mrb[0].mxu0
  %439 = vdwg.mxu0
  %440 = vmatprep.subr.bf16.mxu0 0
  %441 = vmatpush1.bf16.msra.mxu0 %v298
  %442 = vmatprep.subr.bf16.mxu0 0
  %443 = vmatpush1.bf16.msra.mxu0 %v299
  %444 = vmatprep.subr.bf16.mxu0 0
  %445 = vmatpush1.bf16.msra.mxu0 0
  %446 = vmatprep.subr.bf16.mxu0 0
  %447 = vmatpush1.bf16.msra.mxu0 0
  %448 = vmatprep.subr.bf16.mxu0 0
  %449 = vmatpush1.bf16.msra.mxu0 0
  %450 = vmatprep.subr.bf16.mxu0 0
  %451 = vmatpush1.bf16.msra.mxu0 0
  %452 = vmatprep.subr.bf16.mxu0 0
  %453 = vmatpush1.bf16.msra.mxu0 0
  %454 = vmatprep.subr.bf16.mxu0 0
  %455 = vmatpush1.bf16.msra.mxu0 0
  %456 = vmatprep.subr.bf16.mxu0 0
  %457 = vmatpush1.bf16.msra.mxu0 0
  %458 = vmatprep.subr.bf16.mxu0 0
  %459 = vmatpush1.bf16.msra.mxu0 0
  %460 = vmatprep.subr.bf16.mxu0 0
  %461 = vmatpush1.bf16.msra.mxu0 0
  %462 = vmatprep.subr.bf16.mxu0 0
  %463 = vmatpush1.bf16.msra.mxu0 0
  %464 = vmatprep.subr.bf16.mxu0 0
  %465 = vmatpush1.bf16.msra.mxu0 0
  %466 = vmatprep.subr.bf16.mxu0 0
  %467 = vmatpush1.bf16.msra.mxu0 0
  %468 = vmatprep.subr.bf16.mxu0 0
  %469 = vmatpush1.bf16.msra.mxu0 0
  %470 = vmatprep.subr.bf16.mxu0 0
  %471 = vmatpush1.bf16.msra.mxu0 0
  %472 = vmatprep.mubr.bf16.mxu0 0
  %473 = vmatmul.mubr.bf16.gmra.mrb[0].mxu0 %v320
  %v474 = vpop.f32.mrb[0].mxu0
  %v475 = vadd.f32 %v378, %v474
  %v476 = vpop.f32.mrb[0].mxu0
  %v477 = vpop.f32.mrb[0].mxu0
  %v478 = vadd.f32 %v381, %v477
  %v479 = vpop.f32.mrb[0].mxu0
  %480 = vmatprep.mubr.bf16.mxu0 0
  %481 = vmatmul.mubr.bf16.gmra.mrb[0].mxu0 %v323
  %v482 = vpop.f32.mrb[0].mxu0
  %v483 = vadd.f32 %v386, %v482
  %v484 = vpop.f32.mrb[0].mxu0
  %v485 = vpop.f32.mrb[0].mxu0
  %v486 = vadd.f32 %v389, %v485
  %v487 = vpop.f32.mrb[0].mxu0
  %488 = vmatprep.mubr.bf16.mxu0 0
  %489 = vmatmul.mubr.bf16.gmra.mrb[0].mxu0 %v326
  %v490 = vpop.f32.mrb[0].mxu0
  %v491 = vadd.f32 %v394, %v490
  %v492 = vpop.f32.mrb[0].mxu0
  %v493 = vpop.f32.mrb[0].mxu0
  %v494 = vadd.f32 %v397, %v493
  %v495 = vpop.f32.mrb[0].mxu0
  %496 = vmatprep.mubr.bf16.mxu0 0
  %497 = vmatmul.mubr.bf16.gmra.mrb[0].mxu0 %v329
  %v498 = vpop.f32.mrb[0].mxu0
  %v499 = vadd.f32 %v402, %v498
  %v500 = vpop.f32.mrb[0].mxu0
  %v501 = vpop.f32.mrb[0].mxu0
  %v502 = vadd.f32 %v405, %v501
  %v503 = vpop.f32.mrb[0].mxu0
  %504 = vmatprep.mubr.bf16.mxu0 0
  %505 = vmatmul.mubr.bf16.gmra.mrb[0].mxu0 %v332
  %v506 = vpop.f32.mrb[0].mxu0
  %v507 = vadd.f32 %v410, %v506
  %v508 = vpop.f32.mrb[0].mxu0
  %v509 = vpop.f32.mrb[0].mxu0
  %v510 = vadd.f32 %v413, %v509
  %v511 = vpop.f32.mrb[0].mxu0
  %512 = vmatprep.mubr.bf16.mxu0 0
  %513 = vmatmul.mubr.bf16.gmra.mrb[0].mxu0 %v335
  %v514 = vpop.f32.mrb[0].mxu0
  %v515 = vadd.f32 %v418, %v514
  %v516 = vpop.f32.mrb[0].mxu0
  %v517 = vpop.f32.mrb[0].mxu0
  %v518 = vadd.f32 %v421, %v517
  %v519 = vpop.f32.mrb[0].mxu0
  %520 = vmatprep.mubr.bf16.mxu0 0
  %521 = vmatmul.mubr.bf16.gmra.mrb[0].mxu0 %v338
  %v522 = vpop.f32.mrb[0].mxu0
  %v523 = vadd.f32 %v426, %v522
  %v524 = vpop.f32.mrb[0].mxu0
  %v525 = vpop.f32.mrb[0].mxu0
  %v526 = vadd.f32 %v429, %v525
  %v527 = vpop.f32.mrb[0].mxu0
  %528 = vmatprep.mubr.bf16.mxu0 0
  %529 = vmatmul.mubr.bf16.gmra.mrb[0].mxu0 %v341
  %v530 = vpop.f32.mrb[0].mxu0
  %v531 = vadd.f32 %v434, %v530
  %v532 = vpop.f32.mrb[0].mxu0
  %v533 = vpop.f32.mrb[0].mxu0
  %v534 = vadd.f32 %v437, %v533
  %v535 = vpop.f32.mrb[0].mxu0
  %536 = vdwg.mxu0
  %vm537 = vcmp.gt.f32.partialorder %v475, 0.0
  %vm538 = vcmp.gt.f32.partialorder %v478, 0.0
  %vm539 = vcmp.gt.f32.partialorder %v483, 0.0
  %vm540 = vcmp.gt.f32.partialorder %v486, 0.0
  %vm541 = vcmp.gt.f32.partialorder %v491, 0.0
  %vm542 = vcmp.gt.f32.partialorder %v494, 0.0
  %vm543 = vcmp.gt.f32.partialorder %v499, 0.0
  %vm544 = vcmp.gt.f32.partialorder %v502, 0.0
  %vm545 = vcmp.gt.f32.partialorder %v507, 0.0
  %vm546 = vcmp.gt.f32.partialorder %v510, 0.0
  %vm547 = vcmp.gt.f32.partialorder %v515, 0.0
  %vm548 = vcmp.gt.f32.partialorder %v518, 0.0
  %vm549 = vcmp.gt.f32.partialorder %v523, 0.0
  %vm550 = vcmp.gt.f32.partialorder %v526, 0.0
  %vm551 = vcmp.gt.f32.partialorder %v531, 0.0
  %vm552 = vcmp.gt.f32.partialorder %v534, 0.0
  %v553 = vmul.f32 %v475, 0.2
  %v554 = vmul.f32 %v478, 0.2
  %v555 = vmul.f32 %v483, 0.2
  %v556 = vmul.f32 %v486, 0.2
  %v557 = vmul.f32 %v491, 0.2
  %v558 = vmul.f32 %v494, 0.2
  %v559 = vmul.f32 %v499, 0.2
  %v560 = vmul.f32 %v502, 0.2
  %v561 = vmul.f32 %v507, 0.2
  %v562 = vmul.f32 %v510, 0.2
  %v563 = vmul.f32 %v515, 0.2
  %v564 = vmul.f32 %v518, 0.2
  %v565 = vmul.f32 %v523, 0.2
  %v566 = vmul.f32 %v526, 0.2
  %v567 = vmul.f32 %v531, 0.2
  %v568 = vmul.f32 %v534, 0.2
  %v569 = vsel %vm537, %v475, %v553
  %v570 = vsel %vm538, %v478, %v554
  %v571 = vsel %vm539, %v483, %v555
  %v572 = vsel %vm540, %v486, %v556
  %v573 = vsel %vm541, %v491, %v557
  %v574 = vsel %vm542, %v494, %v558
  %v575 = vsel %vm543, %v499, %v559
  %v576 = vsel %vm544, %v502, %v560
  %v577 = vsel %vm545, %v507, %v561
  %v578 = vsel %vm546, %v510, %v562
  %v579 = vsel %vm547, %v515, %v563
  %v580 = vsel %vm548, %v518, %v564
  %v581 = vsel %vm549, %v523, %v565
  %v582 = vsel %vm550, %v526, %v566
  %v583 = vsel %vm551, %v531, %v567
  %v584 = vsel %vm552, %v534, %v568
  %v585 = vpack.c.bf16 %v570, %v569
  %v586 = vpack.c.bf16 %v572, %v571
  %v587 = vpack.c.bf16 %v574, %v573
  %v588 = vpack.c.bf16 %v576, %v575
  %v589 = vpack.c.bf16 %v578, %v577
  %v590 = vpack.c.bf16 %v580, %v579
  %v591 = vpack.c.bf16 %v582, %v581
  %v592 = vpack.c.bf16 %v584, %v583
  %v601 = vunpack.c.l.b16 %v585
  %v602 = vunpack.c.h.b16 %v585
  %v603 = vunpack.c.l.b16 %v586
  %v604 = vunpack.c.h.b16 %v586
  %v605 = vunpack.c.l.b16 %v587
  %v606 = vunpack.c.h.b16 %v587
  %v607 = vunpack.c.l.b16 %v588
  %v608 = vunpack.c.h.b16 %v588
  %v609 = vunpack.c.l.b16 %v589
  %v610 = vunpack.c.h.b16 %v589
  %v611 = vunpack.c.l.b16 %v590
  %v612 = vunpack.c.h.b16 %v590
  %v613 = vunpack.c.l.b16 %v591
  %v614 = vunpack.c.h.b16 %v591
  %v615 = vunpack.c.l.b16 %v592
  %v616 = vunpack.c.h.b16 %v592
  %v617 = vpack.c.b16 %v601, %v601
  %v618 = vpack.c.b16 %v602, %v602
  %v619 = vpack.c.b16 %v603, %v603
  %v620 = vpack.c.b16 %v604, %v604
  %v621 = vpack.c.b16 %v605, %v605
  %v622 = vpack.c.b16 %v606, %v606
  %v623 = vpack.c.b16 %v607, %v607
  %v624 = vpack.c.b16 %v608, %v608
  %v625 = vpack.c.b16 %v609, %v609
  %v626 = vpack.c.b16 %v610, %v610
  %v627 = vpack.c.b16 %v611, %v611
  %v628 = vpack.c.b16 %v612, %v612
  %v629 = vpack.c.b16 %v613, %v613
  %v630 = vpack.c.b16 %v614, %v614
  %v631 = vpack.c.b16 %v615, %v615
  %v632 = vpack.c.b16 %v616, %v616
  %vm649 = vcmask 519168
  %650 = vst.msk [vmem:[%s3] sm:$0xf] %vm649, %v617
  %651 = vst.msk [vmem:[%s3 + $0x4] sm:$0xf] %vm649, %v618
  %652 = vst.msk [vmem:[%s3 + $0x8] sm:$0xf] %vm649, %v619
  %653 = vst.msk [vmem:[%s3 + $0xc] sm:$0xf] %vm649, %v620
  %654 = vst.msk [vmem:[%s3 + $0x10] sm:$0xf] %vm649, %v621
  %655 = vst.msk [vmem:[%s3 + $0x14] sm:$0xf] %vm649, %v622
  %656 = vst.msk [vmem:[%s3 + $0x18] sm:$0xf] %vm649, %v623
  %657 = vst.msk [vmem:[%s3 + $0x1c] sm:$0xf] %vm649, %v624
  %658 = vst.msk [vmem:[%s3 + $0x20] sm:$0xf] %vm649, %v625
  %659 = vst.msk [vmem:[%s3 + $0x24] sm:$0xf] %vm649, %v626
  %660 = vst.msk [vmem:[%s3 + $0x28] sm:$0xf] %vm649, %v627
  %661 = vst.msk [vmem:[%s3 + $0x2c] sm:$0xf] %vm649, %v628
  %662 = vst.msk [vmem:[%s3 + $0x30] sm:$0xf] %vm649, %v629
  %663 = vst.msk [vmem:[%s3 + $0x34] sm:$0xf] %vm649, %v630
  %664 = vst.msk [vmem:[%s3 + $0x38] sm:$0xf] %vm649, %v631
  %665 = vst.msk [vmem:[%s3 + $0x3c] sm:$0xf] %vm649, %v632
  // Predicated region
  $region14: #{vae_forward.9} parent=0 // pred_check
    _
  $region15: #{vae_forward.9} parent=0 // pred_check_branch
    %667 = sbr.rel (0) target = $region17
  $region16: #{vae_forward.9} parent=0 // pred_region
    _
  $region17: #{vae_forward.9} parent=0 // pred_fallthru
    _
  // Predicated region
  $region18: #{vae_forward.9} parent=0 // pred_check
    _
  $region19: #{vae_forward.9} parent=0 // pred_check_branch
    %669 = sbr.rel (0) target = $region21
  $region20: #{vae_forward.9} parent=0 // pred_region
    _
  $region21: #{vae_forward.9} parent=0 // pred_fallthru
    _

// kernel: vae_forward.10
$region0: #{vae_forward.10}
  #allocation0 [shape = 'u32[]', space=smem, size = 0x4, offset = 0x4, fixed_abs, tag = 'smem constant byte address 0x4 - core index']
  #allocation1 [shape = 'u32[144,128]{1,0:T(1,128)}', space=vmem, size = 0x12000, scoped, tag = 'internal scratch']
  %s0 = inlined_call_operand.vmem [shape: bf16[32,576], index: 0, kind: input, shape index: {}]
  %s1 = inlined_call_operand.vmem [shape: bf16[576,128], index: 1, kind: input, shape index: {}]
  %s2 = inlined_call_operand.vmem [shape: f32[1,128], index: 2, kind: input, shape index: {}]
  %s3 = inlined_call_operand.vmem [shape: bf16[32,128], index: 3, kind: output, shape index: {}]
  %s4 = sld [smem:[#allocation0]]
  $region22: #{vae_forward.10} parent=0
    _
  %s6 = ssub.s32 1, %s4
  %s7 = scalar_select 0, %s6, %s4
  // Predicated region
  $region2: #{vae_forward.10} parent=0 // pred_check
    _
  $region3: #{vae_forward.10} parent=0 // pred_check_branch
    %9 = sbr.rel (0) target = $region5
  $region4: #{vae_forward.10} parent=0 // pred_region
    _
  $region5: #{vae_forward.10} parent=0 // pred_fallthru
    _
  // Predicated region
  $region6: #{vae_forward.10} parent=0 // pred_check
    _
  $region7: #{vae_forward.10} parent=0 // pred_check_branch
    %11 = sbr.rel (0) target = $region9
  $region8: #{vae_forward.10} parent=0 // pred_region
    _
  $region9: #{vae_forward.10} parent=0 // pred_fallthru
    _
  // Predicated region
  $region10: #{vae_forward.10} parent=0 // pred_check
    _
  $region11: #{vae_forward.10} parent=0 // pred_check_branch
    %13 = sbr.rel (0) target = $region13
  $region12: #{vae_forward.10} parent=0 // pred_region
    _
  $region13: #{vae_forward.10} parent=0 // pred_fallthru
    _
  %v15 = vld [vmem:[%s0] sm:$0xff]
  %v16 = vld [vmem:[%s0 + $0x8] sm:$0xff]
  %v17 = vld [vmem:[%s0 + $0x10] sm:$0xf]
  %v18 = vld [vmem:[%s0 + $0x14] sm:$0xff]
  %v19 = vld [vmem:[%s0 + $0x1c] sm:$0xff]
  %v20 = vld [vmem:[%s0 + $0x24] sm:$0xf]
  %v21 = vld [vmem:[%s0 + $0x28] sm:$0xff]
  %v22 = vld [vmem:[%s0 + $0x30] sm:$0xff]
  %v23 = vld [vmem:[%s0 + $0x38] sm:$0xf]
  %v24 = vld [vmem:[%s0 + $0x3c] sm:$0xff]
  %v25 = vld [vmem:[%s0 + $0x44] sm:$0xff]
  %v26 = vld [vmem:[%s0 + $0x4c] sm:$0xf]
  %v27 = vld [vmem:[%s1] sm:$0xf]
  %v28 = vld [vmem:[%s1 + $0x4] sm:$0xf]
  %v29 = vld [vmem:[%s1 + $0x8] sm:$0xf]
  %v30 = vld [vmem:[%s1 + $0xc] sm:$0xf]
  %v31 = vld [vmem:[%s1 + $0x10] sm:$0xf]
  %v32 = vld [vmem:[%s1 + $0x14] sm:$0xf]
  %v33 = vld [vmem:[%s1 + $0x18] sm:$0xf]
  %v34 = vld [vmem:[%s1 + $0x1c] sm:$0xf]
  %v35 = vld [vmem:[%s1 + $0x20] sm:$0xf]
  %v36 = vld [vmem:[%s1 + $0x24] sm:$0xf]
  %v37 = vld [vmem:[%s1 + $0x28] sm:$0xf]
  %v38 = vld [vmem:[%s1 + $0x2c] sm:$0xf]
  %v39 = vld [vmem:[%s1 + $0x30] sm:$0xf]
  %v40 = vld [vmem:[%s1 + $0x34] sm:$0xf]
  %v41 = vld [vmem:[%s1 + $0x38] sm:$0xf]
  %v42 = vld [vmem:[%s1 + $0x3c] sm:$0xf]
  %v43 = vld [vmem:[%s1 + $0x40] sm:$0xf]
  %v44 = vld [vmem:[%s1 + $0x44] sm:$0xf]
  %v45 = vld [vmem:[%s1 + $0x48] sm:$0xf]
  %v46 = vld [vmem:[%s1 + $0x4c] sm:$0xf]
  %v47 = vld [vmem:[%s1 + $0x50] sm:$0xf]
  %v48 = vld [vmem:[%s1 + $0x54] sm:$0xf]
  %v49 = vld [vmem:[%s1 + $0x58] sm:$0xf]
  %v50 = vld [vmem:[%s1 + $0x5c] sm:$0xf]
  %v51 = vld [vmem:[%s1 + $0x60] sm:$0xf]
  %v52 = vld [vmem:[%s1 + $0x64] sm:$0xf]
  %v53 = vld [vmem:[%s1 + $0x68] sm:$0xf]
  %v54 = vld [vmem:[%s1 + $0x6c] sm:$0xf]
  %v55 = vld [vmem:[%s1 + $0x70] sm:$0xf]
  %v56 = vld [vmem:[%s1 + $0x74] sm:$0xf]
  %v57 = vld [vmem:[%s1 + $0x78] sm:$0xf]
  %v58 = vld [vmem:[%s1 + $0x7c] sm:$0xf]
  %v59 = vld [vmem:[%s1 + $0x80] sm:$0xf]
  %v60 = vld [vmem:[%s1 + $0x84] sm:$0xf]
  %v61 = vld [vmem:[%s1 + $0x88] sm:$0xf]
  %v62 = vld [vmem:[%s1 + $0x8c] sm:$0xf]
  %v63 = vld [vmem:[%s1 + $0x90] sm:$0xf]
  %v64 = vld [vmem:[%s1 + $0x94] sm:$0xf]
  %v65 = vld [vmem:[%s1 + $0x98] sm:$0xf]
  %v66 = vld [vmem:[%s1 + $0x9c] sm:$0xf]
  %v67 = vld [vmem:[%s1 + $0xa0] sm:$0xf]
  %v68 = vld [vmem:[%s1 + $0xa4] sm:$0xf]
  %v69 = vld [vmem:[%s1 + $0xa8] sm:$0xf]
  %v70 = vld [vmem:[%s1 + $0xac] sm:$0xf]
  %v71 = vld [vmem:[%s1 + $0xb0] sm:$0xf]
  %v72 = vld [vmem:[%s1 + $0xb4] sm:$0xf]
  %v73 = vld [vmem:[%s1 + $0xb8] sm:$0xf]
  %v74 = vld [vmem:[%s1 + $0xbc] sm:$0xf]
  %v75 = vld [vmem:[%s1 + $0xc0] sm:$0xf]
  %v76 = vld [vmem:[%s1 + $0xc4] sm:$0xf]
  %v77 = vld [vmem:[%s1 + $0xc8] sm:$0xf]
  %v78 = vld [vmem:[%s1 + $0xcc] sm:$0xf]
  %v79 = vld [vmem:[%s1 + $0xd0] sm:$0xf]
  %v80 = vld [vmem:[%s1 + $0xd4] sm:$0xf]
  %v81 = vld [vmem:[%s1 + $0xd8] sm:$0xf]
  %v82 = vld [vmem:[%s1 + $0xdc] sm:$0xf]
  %v83 = vld [vmem:[%s1 + $0xe0] sm:$0xf]
  %v84 = vld [vmem:[%s1 + $0xe4] sm:$0xf]
  %v85 = vld [vmem:[%s1 + $0xe8] sm:$0xf]
  %v86 = vld [vmem:[%s1 + $0xec] sm:$0xf]
  %v87 = vld [vmem:[%s1 + $0xf0] sm:$0xf]
  %v88 = vld [vmem:[%s1 + $0xf4] sm:$0xf]
  %v89 = vld [vmem:[%s1 + $0xf8] sm:$0xf]
  %v90 = vld [vmem:[%s1 + $0xfc] sm:$0xf]
  %v91 = vld [vmem:[%s1 + $0x100] sm:$0xf]
  %v92 = vld [vmem:[%s1 + $0x104] sm:$0xf]
  %v93 = vld [vmem:[%s1 + $0x108] sm:$0xf]
  %v94 = vld [vmem:[%s1 + $0x10c] sm:$0xf]
  %v95 = vld [vmem:[%s1 + $0x110] sm:$0xf]
  %v96 = vld [vmem:[%s1 + $0x114] sm:$0xf]
  %v97 = vld [vmem:[%s1 + $0x118] sm:$0xf]
  %v98 = vld [vmem:[%s1 + $0x11c] sm:$0xf]
  %v99 = vld [vmem:[%s2] sm:$0x1]
  %v101 = vlaneseq
  %v102 = vshrl.u32 %v101, 7
  %v103 = vsub.s32 0, %v102
  %v104 = vrot.slane %v99, %v103
  %v118 = vunpack.c.l.b16 %v15
  %v119 = vunpack.c.h.b16 %v15
  %v120 = vunpack.c.l.b16 %v16
  %v121 = vunpack.c.h.b16 %v16
  %v122 = vunpack.c.l.b16 %v17
  %v123 = vunpack.c.l.b16 %v18
  %v124 = vunpack.c.h.b16 %v18
  %v125 = vunpack.c.l.b16 %v19
  %v126 = vunpack.c.h.b16 %v19
  %v127 = vunpack.c.l.b16 %v20
  %v128 = vunpack.c.l.b16 %v21
  %v129 = vunpack.c.h.b16 %v21
  %v130 = vunpack.c.l.b16 %v22
  %v131 = vunpack.c.h.b16 %v22
  %v132 = vunpack.c.l.b16 %v23
  %v133 = vunpack.c.l.b16 %v24
  %v134 = vunpack.c.h.b16 %v24
  %v135 = vunpack.c.l.b16 %v25
  %v136 = vunpack.c.h.b16 %v25
  %v137 = vunpack.c.l.b16 %v26
  %v138 = vpack.c.b16 %v123, %v118
  %v139 = vpack.c.b16 %v124, %v119
  %v140 = vpack.c.b16 %v125, %v120
  %v141 = vpack.c.b16 %v126, %v121
  %v142 = vpack.c.b16 %v127, %v122
  %v143 = vpack.c.b16 %v133, %v128
  %v144 = vpack.c.b16 %v134, %v129
  %v145 = vpack.c.b16 %v135, %v130
  %v146 = vpack.c.b16 %v136, %v131
  %v147 = vpack.c.b16 %v137, %v132
  %v228 = vunpack.c.l.b16 %v27
  %v229 = vunpack.c.l.b16 %v28
  %v230 = vunpack.c.l.b16 %v29
  %v231 = vunpack.c.l.b16 %v30
  %v232 = vunpack.c.l.b16 %v31
  %v233 = vunpack.c.l.b16 %v32
  %v234 = vunpack.c.l.b16 %v33
  %v235 = vunpack.c.l.b16 %v34
  %v236 = vunpack.c.l.b16 %v35
  %v237 = vunpack.c.l.b16 %v36
  %v238 = vunpack.c.l.b16 %v37
  %v239 = vunpack.c.l.b16 %v38
  %v240 = vunpack.c.l.b16 %v39
  %v241 = vunpack.c.l.b16 %v40
  %v242 = vunpack.c.l.b16 %v41
  %v243 = vunpack.c.l.b16 %v42
  %v244 = vunpack.c.l.b16 %v43
  %v245 = vunpack.c.l.b16 %v44
  %v246 = vunpack.c.l.b16 %v45
  %v247 = vunpack.c.l.b16 %v46
  %v248 = vunpack.c.l.b16 %v47
  %v249 = vunpack.c.l.b16 %v48
  %v250 = vunpack.c.l.b16 %v49
  %v251 = vunpack.c.l.b16 %v50
  %v252 = vunpack.c.l.b16 %v51
  %v253 = vunpack.c.l.b16 %v52
  %v254 = vunpack.c.l.b16 %v53
  %v255 = vunpack.c.l.b16 %v54
  %v256 = vunpack.c.l.b16 %v55
  %v257 = vunpack.c.l.b16 %v56
  %v258 = vunpack.c.l.b16 %v57
  %v259 = vunpack.c.l.b16 %v58
  %v260 = vunpack.c.l.b16 %v59
  %v261 = vunpack.c.l.b16 %v60
  %v262 = vunpack.c.l.b16 %v61
  %v263 = vunpack.c.l.b16 %v62
  %v264 = vunpack.c.l.b16 %v63
  %v265 = vunpack.c.l.b16 %v64
  %v266 = vunpack.c.l.b16 %v65
  %v267 = vunpack.c.l.b16 %v66
  %v268 = vunpack.c.l.b16 %v67
  %v269 = vunpack.c.l.b16 %v68
  %v270 = vunpack.c.l.b16 %v69
  %v271 = vunpack.c.l.b16 %v70
  %v272 = vunpack.c.l.b16 %v71
  %v273 = vunpack.c.l.b16 %v72
  %v274 = vunpack.c.l.b16 %v73
  %v275 = vunpack.c.l.b16 %v74
  %v276 = vunpack.c.l.b16 %v75
  %v277 = vunpack.c.l.b16 %v76
  %v278 = vunpack.c.l.b16 %v77
  %v279 = vunpack.c.l.b16 %v78
  %v280 = vunpack.c.l.b16 %v79
  %v281 = vunpack.c.l.b16 %v80
  %v282 = vunpack.c.l.b16 %v81
  %v283 = vunpack.c.l.b16 %v82
  %v284 = vunpack.c.l.b16 %v83
  %v285 = vunpack.c.l.b16 %v84
  %v286 = vunpack.c.l.b16 %v85
  %v287 = vunpack.c.l.b16 %v86
  %v288 = vunpack.c.l.b16 %v87
  %v289 = vunpack.c.l.b16 %v88
  %v290 = vunpack.c.l.b16 %v89
  %v291 = vunpack.c.l.b16 %v90
  %v292 = vunpack.c.l.b16 %v91
  %v293 = vunpack.c.l.b16 %v92
  %v294 = vunpack.c.l.b16 %v93
  %v295 = vunpack.c.l.b16 %v94
  %v296 = vunpack.c.l.b16 %v95
  %v297 = vunpack.c.l.b16 %v96
  %v298 = vunpack.c.l.b16 %v97
  %v299 = vunpack.c.l.b16 %v98
  %v300 = vpack.c.b16 %v229, %v228
  %v301 = vpack.c.b16 %v231, %v230
  %v302 = vpack.c.b16 %v233, %v232
  %v303 = vpack.c.b16 %v235, %v234
  %v304 = vpack.c.b16 %v237, %v236
  %v305 = vpack.c.b16 %v239, %v238
  %v306 = vpack.c.b16 %v241, %v240
  %v307 = vpack.c.b16 %v243, %v242
  %v308 = vpack.c.b16 %v245, %v244
  %v309 = vpack.c.b16 %v247, %v246
  %v310 = vpack.c.b16 %v249, %v248
  %v311 = vpack.c.b16 %v251, %v250
  %v312 = vpack.c.b16 %v253, %v252
  %v313 = vpack.c.b16 %v255, %v254
  %v314 = vpack.c.b16 %v257, %v256
  %v315 = vpack.c.b16 %v259, %v258
  %v316 = vpack.c.b16 %v261, %v260
  %v317 = vpack.c.b16 %v263, %v262
  %v318 = vpack.c.b16 %v265, %v264
  %v319 = vpack.c.b16 %v267, %v266
  %v320 = vpack.c.b16 %v269, %v268
  %v321 = vpack.c.b16 %v271, %v270
  %v322 = vpack.c.b16 %v273, %v272
  %v323 = vpack.c.b16 %v275, %v274
  %v324 = vpack.c.b16 %v277, %v276
  %v325 = vpack.c.b16 %v279, %v278
  %v326 = vpack.c.b16 %v281, %v280
  %v327 = vpack.c.b16 %v283, %v282
  %v328 = vpack.c.b16 %v285, %v284
  %v329 = vpack.c.b16 %v287, %v286
  %v330 = vpack.c.b16 %v289, %v288
  %v331 = vpack.c.b16 %v291, %v290
  %v332 = vpack.c.b16 %v293, %v292
  %v333 = vpack.c.b16 %v295, %v294
  %v334 = vpack.c.b16 %v297, %v296
  %v335 = vpack.c.b16 %v299, %v298
  %vm372 = vcmask 523264
  %v374 = vsel %vm372, %v142, 0
  %v377 = vsel %vm372, %v147, 0
  %379 = vmatprep.subr.bf16.mxu0 0
  %380 = vmatpush1.bf16.msra.mxu0 %v300
  %381 = vmatprep.subr.bf16.mxu0 0
  %382 = vmatpush1.bf16.msra.mxu0 %v301
  %383 = vmatprep.subr.bf16.mxu0 0
  %384 = vmatpush1.bf16.msra.mxu0 %v302
  %385 = vmatprep.subr.bf16.mxu0 0
  %386 = vmatpush1.bf16.msra.mxu0 %v303
  %387 = vmatprep.subr.bf16.mxu0 0
  %388 = vmatpush1.bf16.msra.mxu0 %v304
  %389 = vmatprep.subr.bf16.mxu0 0
  %390 = vmatpush1.bf16.msra.mxu0 %v305
  %391 = vmatprep.subr.bf16.mxu0 0
  %392 = vmatpush1.bf16.msra.mxu0 %v306
  %393 = vmatprep.subr.bf16.mxu0 0
  %394 = vmatpush1.bf16.msra.mxu0 %v307
  %395 = vmatprep.subr.bf16.mxu0 0
  %396 = vmatpush1.bf16.msra.mxu0 %v308
  %397 = vmatprep.subr.bf16.mxu0 0
  %398 = vmatpush1.bf16.msra.mxu0 %v309
  %399 = vmatprep.subr.bf16.mxu0 0
  %400 = vmatpush1.bf16.msra.mxu0 %v310
  %401 = vmatprep.subr.bf16.mxu0 0
  %402 = vmatpush1.bf16.msra.mxu0 %v311
  %403 = vmatprep.subr.bf16.mxu0 0
  %404 = vmatpush1.bf16.msra.mxu0 %v312
  %405 = vmatprep.subr.bf16.mxu0 0
  %406 = vmatpush1.bf16.msra.mxu0 %v313
  %407 = vmatprep.subr.bf16.mxu0 0
  %408 = vmatpush1.bf16.msra.mxu0 %v314
  %409 = vmatprep.subr.bf16.mxu0 0
  %410 = vmatpush1.bf16.msra.mxu0 %v315
  %411 = vmatprep.mubr.bf16.mxu0 %v139
  %412 = vmatmul.mubr.bf16.gmra.mrb[0].mxu0 %v138
  %v413 = vpop.f32.mrb[0].mxu0
  %v414 = vadd.f32 %v104, %v413
  %v415 = vpop.f32.mrb[0].mxu0
  %v416 = vpop.f32.mrb[0].mxu0
  %v417 = vadd.f32 %v104, %v416
  %v418 = vpop.f32.mrb[0].mxu0
  %419 = vmatprep.mubr.bf16.mxu0 %v144
  %420 = vmatmul.mubr.bf16.gmra.mrb[0].mxu0 %v143
  %v421 = vpop.f32.mrb[0].mxu0
  %v422 = vadd.f32 %v104, %v421
  %v423 = vpop.f32.mrb[0].mxu0
  %v424 = vpop.f32.mrb[0].mxu0
  %v425 = vadd.f32 %v104, %v424
  %v426 = vpop.f32.mrb[0].mxu0
  %427 = vdwg.mxu0
  %428 = vmatprep.subr.bf16.mxu0 0
  %429 = vmatpush1.bf16.msra.mxu0 %v316
  %430 = vmatprep.subr.bf16.mxu0 0
  %431 = vmatpush1.bf16.msra.mxu0 %v317
  %432 = vmatprep.subr.bf16.mxu0 0
  %433 = vmatpush1.bf16.msra.mxu0 %v318
  %434 = vmatprep.subr.bf16.mxu0 0
  %435 = vmatpush1.bf16.msra.mxu0 %v319
  %436 = vmatprep.subr.bf16.mxu0 0
  %437 = vmatpush1.bf16.msra.mxu0 %v320
  %438 = vmatprep.subr.bf16.mxu0 0
  %439 = vmatpush1.bf16.msra.mxu0 %v321
  %440 = vmatprep.subr.bf16.mxu0 0
  %441 = vmatpush1.bf16.msra.mxu0 %v322
  %442 = vmatprep.subr.bf16.mxu0 0
  %443 = vmatpush1.bf16.msra.mxu0 %v323
  %444 = vmatprep.subr.bf16.mxu0 0
  %445 = vmatpush1.bf16.msra.mxu0 %v324
  %446 = vmatprep.subr.bf16.mxu0 0
  %447 = vmatpush1.bf16.msra.mxu0 %v325
  %448 = vmatprep.subr.bf16.mxu0 0
  %449 = vmatpush1.bf16.msra.mxu0 %v326
  %450 = vmatprep.subr.bf16.mxu0 0
  %451 = vmatpush1.bf16.msra.mxu0 %v327
  %452 = vmatprep.subr.bf16.mxu0 0
  %453 = vmatpush1.bf16.msra.mxu0 %v328
  %454 = vmatprep.subr.bf16.mxu0 0
  %455 = vmatpush1.bf16.msra.mxu0 %v329
  %456 = vmatprep.subr.bf16.mxu0 0
  %457 = vmatpush1.bf16.msra.mxu0 %v330
  %458 = vmatprep.subr.bf16.mxu0 0
  %459 = vmatpush1.bf16.msra.mxu0 %v331
  %460 = vmatprep.mubr.bf16.mxu0 %v141
  %461 = vmatmul.mubr.bf16.gmra.mrb[0].mxu0 %v140
  %v462 = vpop.f32.mrb[0].mxu0
  %v463 = vadd.f32 %v414, %v462
  %v464 = vpop.f32.mrb[0].mxu0
  %v465 = vpop.f32.mrb[0].mxu0
  %v466 = vadd.f32 %v417, %v465
  %v467 = vpop.f32.mrb[0].mxu0
  %468 = vmatprep.mubr.bf16.mxu0 %v146
  %469 = vmatmul.mubr.bf16.gmra.mrb[0].mxu0 %v145
  %v470 = vpop.f32.mrb[0].mxu0
  %v471 = vadd.f32 %v422, %v470
  %v472 = vpop.f32.mrb[0].mxu0
  %v473 = vpop.f32.mrb[0].mxu0
  %v474 = vadd.f32 %v425, %v473
  %v475 = vpop.f32.mrb[0].mxu0
  %476 = vdwg.mxu0
  %477 = vmatprep.subr.bf16.mxu0 0
  %478 = vmatpush1.bf16.msra.mxu0 %v332
  %479 = vmatprep.subr.bf16.mxu0 0
  %480 = vmatpush1.bf16.msra.mxu0 %v333
  %481 = vmatprep.subr.bf16.mxu0 0
  %482 = vmatpush1.bf16.msra.mxu0 %v334
  %483 = vmatprep.subr.bf16.mxu0 0
  %484 = vmatpush1.bf16.msra.mxu0 %v335
  %485 = vmatprep.subr.bf16.mxu0 0
  %486 = vmatpush1.bf16.msra.mxu0 0
  %487 = vmatprep.subr.bf16.mxu0 0
  %488 = vmatpush1.bf16.msra.mxu0 0
  %489 = vmatprep.subr.bf16.mxu0 0
  %490 = vmatpush1.bf16.msra.mxu0 0
  %491 = vmatprep.subr.bf16.mxu0 0
  %492 = vmatpush1.bf16.msra.mxu0 0
  %493 = vmatprep.subr.bf16.mxu0 0
  %494 = vmatpush1.bf16.msra.mxu0 0
  %495 = vmatprep.subr.bf16.mxu0 0
  %496 = vmatpush1.bf16.msra.mxu0 0
  %497 = vmatprep.subr.bf16.mxu0 0
  %498 = vmatpush1.bf16.msra.mxu0 0
  %499 = vmatprep.subr.bf16.mxu0 0
  %500 = vmatpush1.bf16.msra.mxu0 0
  %501 = vmatprep.subr.bf16.mxu0 0
  %502 = vmatpush1.bf16.msra.mxu0 0
  %503 = vmatprep.subr.bf16.mxu0 0
  %504 = vmatpush1.bf16.msra.mxu0 0
  %505 = vmatprep.subr.bf16.mxu0 0
  %506 = vmatpush1.bf16.msra.mxu0 0
  %507 = vmatprep.subr.bf16.mxu0 0
  %508 = vmatpush1.bf16.msra.mxu0 0
  %509 = vmatprep.mubr.bf16.mxu0 0
  %510 = vmatmul.mubr.bf16.gmra.mrb[0].mxu0 %v374
  %v511 = vpop.f32.mrb[0].mxu0
  %v512 = vadd.f32 %v463, %v511
  %v513 = vpop.f32.mrb[0].mxu0
  %v514 = vpop.f32.mrb[0].mxu0
  %v515 = vadd.f32 %v466, %v514
  %v516 = vpop.f32.mrb[0].mxu0
  %517 = vmatprep.mubr.bf16.mxu0 0
  %518 = vmatmul.mubr.bf16.gmra.mrb[0].mxu0 %v377
  %v519 = vpop.f32.mrb[0].mxu0
  %v520 = vadd.f32 %v471, %v519
  %v521 = vpop.f32.mrb[0].mxu0
  %v522 = vpop.f32.mrb[0].mxu0
  %v523 = vadd.f32 %v474, %v522
  %v524 = vpop.f32.mrb[0].mxu0
  %525 = vdwg.mxu0
  %vm526 = vcmp.gt.f32.partialorder %v512, 0.0
  %vm527 = vcmp.gt.f32.partialorder %v515, 0.0
  %vm528 = vcmp.gt.f32.partialorder %v520, 0.0
  %vm529 = vcmp.gt.f32.partialorder %v523, 0.0
  %v530 = vmul.f32 %v512, 0.2
  %v531 = vmul.f32 %v515, 0.2
  %v532 = vmul.f32 %v520, 0.2
  %v533 = vmul.f32 %v523, 0.2
  %v534 = vsel %vm526, %v512, %v530
  %v535 = vsel %vm527, %v515, %v531
  %v536 = vsel %vm528, %v520, %v532
  %v537 = vsel %vm529, %v523, %v533
  %v538 = vpack.c.bf16 %v535, %v534
  %v539 = vpack.c.bf16 %v537, %v536
  %v542 = vunpack.c.l.b16 %v538
  %v543 = vunpack.c.h.b16 %v538
  %v544 = vunpack.c.l.b16 %v539
  %v545 = vunpack.c.h.b16 %v539
  %v546 = vpack.c.b16 %v542, %v542
  %v547 = vpack.c.b16 %v543, %v543
  %v548 = vpack.c.b16 %v544, %v544
  %v549 = vpack.c.b16 %v545, %v545
  %554 = vst [vmem:[%s3] sm:$0xf] %v546
  %555 = vst [vmem:[%s3 + $0x4] sm:$0xf] %v547
  %556 = vst [vmem:[%s3 + $0x8] sm:$0xf] %v548
  %557 = vst [vmem:[%s3 + $0xc] sm:$0xf] %v549
  // Predicated region
  $region14: #{vae_forward.10} parent=0 // pred_check
    _
  $region15: #{vae_forward.10} parent=0 // pred_check_branch
    %559 = sbr.rel (0) target = $region17
  $region16: #{vae_forward.10} parent=0 // pred_region
    _
  $region17: #{vae_forward.10} parent=0 // pred_fallthru
    _
  // Predicated region
  $region18: #{vae_forward.10} parent=0 // pred_check
    _
  $region19: #{vae_forward.10} parent=0 // pred_check_branch
    %561 = sbr.rel (0) target = $region21
  $region20: #{vae_forward.10} parent=0 // pred_region
    _
  $region21: #{vae_forward.10} parent=0 // pred_fallthru
    _

// kernel: vae_forward.11
$region0: #{vae_forward.11}
  #allocation0 [shape = 'u32[]', space=smem, size = 0x4, offset = 0x4, fixed_abs, tag = 'smem constant byte address 0x4 - core index']
  #allocation1 [shape = 'u32[144,128]{1,0:T(1,128)}', space=vmem, size = 0x12000, scoped, tag = 'internal scratch']
  %s0 = inlined_call_operand.vmem [shape: bf16[2,2048], index: 0, kind: input, shape index: {}]
  %s1 = inlined_call_operand.vmem [shape: bf16[2048,256], index: 1, kind: input, shape index: {}]
  %s2 = inlined_call_operand.vmem [shape: f32[1,256], index: 2, kind: input, shape index: {}]
  %s3 = inlined_call_operand.vmem [shape: f32[2,256], index: 3, kind: output, shape index: {}]
  %s4 = sld [smem:[#allocation0]]
  $region22: #{vae_forward.11} parent=0
    _
  %s6 = ssub.s32 1, %s4
  %s7 = scalar_select 0, %s6, %s4
  // Predicated region
  $region2: #{vae_forward.11} parent=0 // pred_check
    _
  $region3: #{vae_forward.11} parent=0 // pred_check_branch
    %9 = sbr.rel (0) target = $region5
  $region4: #{vae_forward.11} parent=0 // pred_region
    _
  $region5: #{vae_forward.11} parent=0 // pred_fallthru
    _
  // Predicated region
  $region6: #{vae_forward.11} parent=0 // pred_check
    _
  $region7: #{vae_forward.11} parent=0 // pred_check_branch
    %11 = sbr.rel (0) target = $region9
  $region8: #{vae_forward.11} parent=0 // pred_region
    _
  $region9: #{vae_forward.11} parent=0 // pred_fallthru
    _
  // Predicated region
  $region10: #{vae_forward.11} parent=0 // pred_check
    _
  $region11: #{vae_forward.11} parent=0 // pred_check_branch
    %13 = sbr.rel (0) target = $region13
  $region12: #{vae_forward.11} parent=0 // pred_region
    _
  $region13: #{vae_forward.11} parent=0 // pred_fallthru
    _
  %v14 = vld [vmem:[%s0] sm:$0xff]
  %v15 = vld [vmem:[%s0 + $0x8] sm:$0xff]
  %v16 = vld [vmem:[%s1] sm:$0xff]
  %v17 = vld [vmem:[%s1 + $0x8] sm:$0xff]
  %v18 = vld [vmem:[%s1 + $0x10] sm:$0xff]
  %v19 = vld [vmem:[%s1 + $0x18] sm:$0xff]
  %v20 = vld [vmem:[%s1 + $0x20] sm:$0xff]
  %v21 = vld [vmem:[%s1 + $0x28] sm:$0xff]
  %v22 = vld [vmem:[%s1 + $0x30] sm:$0xff]
  %v23 = vld [vmem:[%s1 + $0x38] sm:$0xff]
  %v24 = vld [vmem:[%s1 + $0x40] sm:$0xff]
  %v25 = vld [vmem:[%s1 + $0x48] sm:$0xff]
  %v26 = vld [vmem:[%s1 + $0x50] sm:$0xff]
  %v27 = vld [vmem:[%s1 + $0x58] sm:$0xff]
  %v28 = vld [vmem:[%s1 + $0x60] sm:$0xff]
  %v29 = vld [vmem:[%s1 + $0x68] sm:$0xff]
  %v30 = vld [vmem:[%s1 + $0x70] sm:$0xff]
  %v31 = vld [vmem:[%s1 + $0x78] sm:$0xff]
  %v32 = vld [vmem:[%s1 + $0x80] sm:$0xff]
  %v33 = vld [vmem:[%s1 + $0x88] sm:$0xff]
  %v34 = vld [vmem:[%s1 + $0x90] sm:$0xff]
  %v35 = vld [vmem:[%s1 + $0x98] sm:$0xff]
  %v36 = vld [vmem:[%s1 + $0xa0] sm:$0xff]
  %v37 = vld [vmem:[%s1 + $0xa8] sm:$0xff]
  %v38 = vld [vmem:[%s1 + $0xb0] sm:$0xff]
  %v39 = vld [vmem:[%s1 + $0xb8] sm:$0xff]
  %v40 = vld [vmem:[%s1 + $0xc0] sm:$0xff]
  %v41 = vld [vmem:[%s1 + $0xc8] sm:$0xff]
  %v42 = vld [vmem:[%s1 + $0xd0] sm:$0xff]
  %v43 = vld [vmem:[%s1 + $0xd8] sm:$0xff]
  %v44 = vld [vmem:[%s1 + $0xe0] sm:$0xff]
  %v45 = vld [vmem:[%s1 + $0xe8] sm:$0xff]
  %v46 = vld [vmem:[%s1 + $0xf0] sm:$0xff]
  %v47 = vld [vmem:[%s1 + $0xf8] sm:$0xff]
  %v48 = vld [vmem:[%s1 + $0x100] sm:$0xff]
  %v49 = vld [vmem:[%s1 + $0x108] sm:$0xff]
  %v50 = vld [vmem:[%s1 + $0x110] sm:$0xff]
  %v51 = vld [vmem:[%s1 + $0x118] sm:$0xff]
  %v52 = vld [vmem:[%s1 + $0x120] sm:$0xff]
  %v53 = vld [vmem:[%s1 + $0x128] sm:$0xff]
  %v54 = vld [vmem:[%s1 + $0x130] sm:$0xff]
  %v55 = vld [vmem:[%s1 + $0x138] sm:$0xff]
  %v56 = vld [vmem:[%s1 + $0x140] sm:$0xff]
  %v57 = vld [vmem:[%s1 + $0x148] sm:$0xff]
  %v58 = vld [vmem:[%s1 + $0x150] sm:$0xff]
  %v59 = vld [vmem:[%s1 + $0x158] sm:$0xff]
  %v60 = vld [vmem:[%s1 + $0x160] sm:$0xff]
  %v61 = vld [vmem:[%s1 + $0x168] sm:$0xff]
  %v62 = vld [vmem:[%s1 + $0x170] sm:$0xff]
  %v63 = vld [vmem:[%s1 + $0x178] sm:$0xff]
  %v64 = vld [vmem:[%s1 + $0x180] sm:$0xff]
  %v65 = vld [vmem:[%s1 + $0x188] sm:$0xff]
  %v66 = vld [vmem:[%s1 + $0x190] sm:$0xff]
  %v67 = vld [vmem:[%s1 + $0x198] sm:$0xff]
  %v68 = vld [vmem:[%s1 + $0x1a0] sm:$0xff]
  %v69 = vld [vmem:[%s1 + $0x1a8] sm:$0xff]
  %v70 = vld [vmem:[%s1 + $0x1b0] sm:$0xff]
  %v71 = vld [vmem:[%s1 + $0x1b8] sm:$0xff]
  %v72 = vld [vmem:[%s1 + $0x1c0] sm:$0xff]
  %v73 = vld [vmem:[%s1 + $0x1c8] sm:$0xff]
  %v74 = vld [vmem:[%s1 + $0x1d0] sm:$0xff]
  %v75 = vld [vmem:[%s1 + $0x1d8] sm:$0xff]
  %v76 = vld [vmem:[%s1 + $0x1e0] sm:$0xff]
  %v77 = vld [vmem:[%s1 + $0x1e8] sm:$0xff]
  %v78 = vld [vmem:[%s1 + $0x1f0] sm:$0xff]
  %v79 = vld [vmem:[%s1 + $0x1f8] sm:$0xff]
  %v80 = vld [vmem:[%s1 + $0x200] sm:$0xff]
  %v81 = vld [vmem:[%s1 + $0x208] sm:$0xff]
  %v82 = vld [vmem:[%s1 + $0x210] sm:$0xff]
  %v83 = vld [vmem:[%s1 + $0x218] sm:$0xff]
  %v84 = vld [vmem:[%s1 + $0x220] sm:$0xff]
  %v85 = vld [vmem:[%s1 + $0x228] sm:$0xff]
  %v86 = vld [vmem:[%s1 + $0x230] sm:$0xff]
  %v87 = vld [vmem:[%s1 + $0x238] sm:$0xff]
  %v88 = vld [vmem:[%s1 + $0x240] sm:$0xff]
  %v89 = vld [vmem:[%s1 + $0x248] sm:$0xff]
  %v90 = vld [vmem:[%s1 + $0x250] sm:$0xff]
  %v91 = vld [vmem:[%s1 + $0x258] sm:$0xff]
  %v92 = vld [vmem:[%s1 + $0x260] sm:$0xff]
  %v93 = vld [vmem:[%s1 + $0x268] sm:$0xff]
  %v94 = vld [vmem:[%s1 + $0x270] sm:$0xff]
  %v95 = vld [vmem:[%s1 + $0x278] sm:$0xff]
  %v96 = vld [vmem:[%s1 + $0x280] sm:$0xff]
  %v97 = vld [vmem:[%s1 + $0x288] sm:$0xff]
  %v98 = vld [vmem:[%s1 + $0x290] sm:$0xff]
  %v99 = vld [vmem:[%s1 + $0x298] sm:$0xff]
  %v100 = vld [vmem:[%s1 + $0x2a0] sm:$0xff]
  %v101 = vld [vmem:[%s1 + $0x2a8] sm:$0xff]
  %v102 = vld [vmem:[%s1 + $0x2b0] sm:$0xff]
  %v103 = vld [vmem:[%s1 + $0x2b8] sm:$0xff]
  %v104 = vld [vmem:[%s1 + $0x2c0] sm:$0xff]
  %v105 = vld [vmem:[%s1 + $0x2c8] sm:$0xff]
  %v106 = vld [vmem:[%s1 + $0x2d0] sm:$0xff]
  %v107 = vld [vmem:[%s1 + $0x2d8] sm:$0xff]
  %v108 = vld [vmem:[%s1 + $0x2e0] sm:$0xff]
  %v109 = vld [vmem:[%s1 + $0x2e8] sm:$0xff]
  %v110 = vld [vmem:[%s1 + $0x2f0] sm:$0xff]
  %v111 = vld [vmem:[%s1 + $0x2f8] sm:$0xff]
  %v112 = vld [vmem:[%s1 + $0x300] sm:$0xff]
  %v113 = vld [vmem:[%s1 + $0x308] sm:$0xff]
  %v114 = vld [vmem:[%s1 + $0x310] sm:$0xff]
  %v115 = vld [vmem:[%s1 + $0x318] sm:$0xff]
  %v116 = vld [vmem:[%s1 + $0x320] sm:$0xff]
  %v117 = vld [vmem:[%s1 + $0x328] sm:$0xff]
  %v118 = vld [vmem:[%s1 + $0x330] sm:$0xff]
  %v119 = vld [vmem:[%s1 + $0x338] sm:$0xff]
  %v120 = vld [vmem:[%s1 + $0x340] sm:$0xff]
  %v121 = vld [vmem:[%s1 + $0x348] sm:$0xff]
  %v122 = vld [vmem:[%s1 + $0x350] sm:$0xff]
  %v123 = vld [vmem:[%s1 + $0x358] sm:$0xff]
  %v124 = vld [vmem:[%s1 + $0x360] sm:$0xff]
  %v125 = vld [vmem:[%s1 + $0x368] sm:$0xff]
  %v126 = vld [vmem:[%s1 + $0x370] sm:$0xff]
  %v127 = vld [vmem:[%s1 + $0x378] sm:$0xff]
  %v128 = vld [vmem:[%s1 + $0x380] sm:$0xff]
  %v129 = vld [vmem:[%s1 + $0x388] sm:$0xff]
  %v130 = vld [vmem:[%s1 + $0x390] sm:$0xff]
  %v131 = vld [vmem:[%s1 + $0x398] sm:$0xff]
  %v132 = vld [vmem:[%s1 + $0x3a0] sm:$0xff]
  %v133 = vld [vmem:[%s1 + $0x3a8] sm:$0xff]
  %v134 = vld [vmem:[%s1 + $0x3b0] sm:$0xff]
  %v135 = vld [vmem:[%s1 + $0x3b8] sm:$0xff]
  %v136 = vld [vmem:[%s1 + $0x3c0] sm:$0xff]
  %v137 = vld [vmem:[%s1 + $0x3c8] sm:$0xff]
  %v138 = vld [vmem:[%s1 + $0x3d0] sm:$0xff]
  %v139 = vld [vmem:[%s1 + $0x3d8] sm:$0xff]
  %v140 = vld [vmem:[%s1 + $0x3e0] sm:$0xff]
  %v141 = vld [vmem:[%s1 + $0x3e8] sm:$0xff]
  %v142 = vld [vmem:[%s1 + $0x3f0] sm:$0xff]
  %v143 = vld [vmem:[%s1 + $0x3f8] sm:$0xff]
  %v144 = vld [vmem:[%s1 + $0x400] sm:$0xff]
  %v145 = vld [vmem:[%s1 + $0x408] sm:$0xff]
  %v146 = vld [vmem:[%s1 + $0x410] sm:$0xff]
  %v147 = vld [vmem:[%s1 + $0x418] sm:$0xff]
  %v148 = vld [vmem:[%s1 + $0x420] sm:$0xff]
  %v149 = vld [vmem:[%s1 + $0x428] sm:$0xff]
  %v150 = vld [vmem:[%s1 + $0x430] sm:$0xff]
  %v151 = vld [vmem:[%s1 + $0x438] sm:$0xff]
  %v152 = vld [vmem:[%s1 + $0x440] sm:$0xff]
  %v153 = vld [vmem:[%s1 + $0x448] sm:$0xff]
  %v154 = vld [vmem:[%s1 + $0x450] sm:$0xff]
  %v155 = vld [vmem:[%s1 + $0x458] sm:$0xff]
  %v156 = vld [vmem:[%s1 + $0x460] sm:$0xff]
  %v157 = vld [vmem:[%s1 + $0x468] sm:$0xff]
  %v158 = vld [vmem:[%s1 + $0x470] sm:$0xff]
  %v159 = vld [vmem:[%s1 + $0x478] sm:$0xff]
  %v160 = vld [vmem:[%s1 + $0x480] sm:$0xff]
  %v161 = vld [vmem:[%s1 + $0x488] sm:$0xff]
  %v162 = vld [vmem:[%s1 + $0x490] sm:$0xff]
  %v163 = vld [vmem:[%s1 + $0x498] sm:$0xff]
  %v164 = vld [vmem:[%s1 + $0x4a0] sm:$0xff]
  %v165 = vld [vmem:[%s1 + $0x4a8] sm:$0xff]
  %v166 = vld [vmem:[%s1 + $0x4b0] sm:$0xff]
  %v167 = vld [vmem:[%s1 + $0x4b8] sm:$0xff]
  %v168 = vld [vmem:[%s1 + $0x4c0] sm:$0xff]
  %v169 = vld [vmem:[%s1 + $0x4c8] sm:$0xff]
  %v170 = vld [vmem:[%s1 + $0x4d0] sm:$0xff]
  %v171 = vld [vmem:[%s1 + $0x4d8] sm:$0xff]
  %v172 = vld [vmem:[%s1 + $0x4e0] sm:$0xff]
  %v173 = vld [vmem:[%s1 + $0x4e8] sm:$0xff]
  %v174 = vld [vmem:[%s1 + $0x4f0] sm:$0xff]
  %v175 = vld [vmem:[%s1 + $0x4f8] sm:$0xff]
  %v176 = vld [vmem:[%s1 + $0x500] sm:$0xff]
  %v177 = vld [vmem:[%s1 + $0x508] sm:$0xff]
  %v178 = vld [vmem:[%s1 + $0x510] sm:$0xff]
  %v179 = vld [vmem:[%s1 + $0x518] sm:$0xff]
  %v180 = vld [vmem:[%s1 + $0x520] sm:$0xff]
  %v181 = vld [vmem:[%s1 + $0x528] sm:$0xff]
  %v182 = vld [vmem:[%s1 + $0x530] sm:$0xff]
  %v183 = vld [vmem:[%s1 + $0x538] sm:$0xff]
  %v184 = vld [vmem:[%s1 + $0x540] sm:$0xff]
  %v185 = vld [vmem:[%s1 + $0x548] sm:$0xff]
  %v186 = vld [vmem:[%s1 + $0x550] sm:$0xff]
  %v187 = vld [vmem:[%s1 + $0x558] sm:$0xff]
  %v188 = vld [vmem:[%s1 + $0x560] sm:$0xff]
  %v189 = vld [vmem:[%s1 + $0x568] sm:$0xff]
  %v190 = vld [vmem:[%s1 + $0x570] sm:$0xff]
  %v191 = vld [vmem:[%s1 + $0x578] sm:$0xff]
  %v192 = vld [vmem:[%s1 + $0x580] sm:$0xff]
  %v193 = vld [vmem:[%s1 + $0x588] sm:$0xff]
  %v194 = vld [vmem:[%s1 + $0x590] sm:$0xff]
  %v195 = vld [vmem:[%s1 + $0x598] sm:$0xff]
  %v196 = vld [vmem:[%s1 + $0x5a0] sm:$0xff]
  %v197 = vld [vmem:[%s1 + $0x5a8] sm:$0xff]
  %v198 = vld [vmem:[%s1 + $0x5b0] sm:$0xff]
  %v199 = vld [vmem:[%s1 + $0x5b8] sm:$0xff]
  %v200 = vld [vmem:[%s1 + $0x5c0] sm:$0xff]
  %v201 = vld [vmem:[%s1 + $0x5c8] sm:$0xff]
  %v202 = vld [vmem:[%s1 + $0x5d0] sm:$0xff]
  %v203 = vld [vmem:[%s1 + $0x5d8] sm:$0xff]
  %v204 = vld [vmem:[%s1 + $0x5e0] sm:$0xff]
  %v205 = vld [vmem:[%s1 + $0x5e8] sm:$0xff]
  %v206 = vld [vmem:[%s1 + $0x5f0] sm:$0xff]
  %v207 = vld [vmem:[%s1 + $0x5f8] sm:$0xff]
  %v208 = vld [vmem:[%s1 + $0x600] sm:$0xff]
  %v209 = vld [vmem:[%s1 + $0x608] sm:$0xff]
  %v210 = vld [vmem:[%s1 + $0x610] sm:$0xff]
  %v211 = vld [vmem:[%s1 + $0x618] sm:$0xff]
  %v212 = vld [vmem:[%s1 + $0x620] sm:$0xff]
  %v213 = vld [vmem:[%s1 + $0x628] sm:$0xff]
  %v214 = vld [vmem:[%s1 + $0x630] sm:$0xff]
  %v215 = vld [vmem:[%s1 + $0x638] sm:$0xff]
  %v216 = vld [vmem:[%s1 + $0x640] sm:$0xff]
  %v217 = vld [vmem:[%s1 + $0x648] sm:$0xff]
  %v218 = vld [vmem:[%s1 + $0x650] sm:$0xff]
  %v219 = vld [vmem:[%s1 + $0x658] sm:$0xff]
  %v220 = vld [vmem:[%s1 + $0x660] sm:$0xff]
  %v221 = vld [vmem:[%s1 + $0x668] sm:$0xff]
  %v222 = vld [vmem:[%s1 + $0x670] sm:$0xff]
  %v223 = vld [vmem:[%s1 + $0x678] sm:$0xff]
  %v224 = vld [vmem:[%s1 + $0x680] sm:$0xff]
  %v225 = vld [vmem:[%s1 + $0x688] sm:$0xff]
  %v226 = vld [vmem:[%s1 + $0x690] sm:$0xff]
  %v227 = vld [vmem:[%s1 + $0x698] sm:$0xff]
  %v228 = vld [vmem:[%s1 + $0x6a0] sm:$0xff]
  %v229 = vld [vmem:[%s1 + $0x6a8] sm:$0xff]
  %v230 = vld [vmem:[%s1 + $0x6b0] sm:$0xff]
  %v231 = vld [vmem:[%s1 + $0x6b8] sm:$0xff]
  %v232 = vld [vmem:[%s1 + $0x6c0] sm:$0xff]
  %v233 = vld [vmem:[%s1 + $0x6c8] sm:$0xff]
  %v234 = vld [vmem:[%s1 + $0x6d0] sm:$0xff]
  %v235 = vld [vmem:[%s1 + $0x6d8] sm:$0xff]
  %v236 = vld [vmem:[%s1 + $0x6e0] sm:$0xff]
  %v237 = vld [vmem:[%s1 + $0x6e8] sm:$0xff]
  %v238 = vld [vmem:[%s1 + $0x6f0] sm:$0xff]
  %v239 = vld [vmem:[%s1 + $0x6f8] sm:$0xff]
  %v240 = vld [vmem:[%s1 + $0x700] sm:$0xff]
  %v241 = vld [vmem:[%s1 + $0x708] sm:$0xff]
  %v242 = vld [vmem:[%s1 + $0x710] sm:$0xff]
  %v243 = vld [vmem:[%s1 + $0x718] sm:$0xff]
  %v244 = vld [vmem:[%s1 + $0x720] sm:$0xff]
  %v245 = vld [vmem:[%s1 + $0x728] sm:$0xff]
  %v246 = vld [vmem:[%s1 + $0x730] sm:$0xff]
  %v247 = vld [vmem:[%s1 + $0x738] sm:$0xff]
  %v248 = vld [vmem:[%s1 + $0x740] sm:$0xff]
  %v249 = vld [vmem:[%s1 + $0x748] sm:$0xff]
  %v250 = vld [vmem:[%s1 + $0x750] sm:$0xff]
  %v251 = vld [vmem:[%s1 + $0x758] sm:$0xff]
  %v252 = vld [vmem:[%s1 + $0x760] sm:$0xff]
  %v253 = vld [vmem:[%s1 + $0x768] sm:$0xff]
  %v254 = vld [vmem:[%s1 + $0x770] sm:$0xff]
  %v255 = vld [vmem:[%s1 + $0x778] sm:$0xff]
  %v256 = vld [vmem:[%s1 + $0x780] sm:$0xff]
  %v257 = vld [vmem:[%s1 + $0x788] sm:$0xff]
  %v258 = vld [vmem:[%s1 + $0x790] sm:$0xff]
  %v259 = vld [vmem:[%s1 + $0x798] sm:$0xff]
  %v260 = vld [vmem:[%s1 + $0x7a0] sm:$0xff]
  %v261 = vld [vmem:[%s1 + $0x7a8] sm:$0xff]
  %v262 = vld [vmem:[%s1 + $0x7b0] sm:$0xff]
  %v263 = vld [vmem:[%s1 + $0x7b8] sm:$0xff]
  %v264 = vld [vmem:[%s1 + $0x7c0] sm:$0xff]
  %v265 = vld [vmem:[%s1 + $0x7c8] sm:$0xff]
  %v266 = vld [vmem:[%s1 + $0x7d0] sm:$0xff]
  %v267 = vld [vmem:[%s1 + $0x7d8] sm:$0xff]
  %v268 = vld [vmem:[%s1 + $0x7e0] sm:$0xff]
  %v269 = vld [vmem:[%s1 + $0x7e8] sm:$0xff]
  %v270 = vld [vmem:[%s1 + $0x7f0] sm:$0xff]
  %v271 = vld [vmem:[%s1 + $0x7f8] sm:$0xff]
  %v272 = vld [vmem:[%s2] sm:$0x3]
  %v274 = vlaneseq
  %v275 = vshrl.u32 %v274, 7
  %v276 = vsub.s32 0, %v275
  %v277 = vrot.slane %v272, %v276
  %v278 = vlaneseq
  %v279 = vshrl.u32 %v278, 7
  %v280 = vsub.s32 1, %v279
  %v281 = vrot.slane %v272, %v280
  %v286 = vcombine.high %v14, %v14
  %v288 = vunpack.c.l.s4 1966171168
  %v289 = vunpack.c.0.s8 %v288
  %v290 = vlaneseq
  %v291 = vshrl.u32 %v290, 7
  %v292 = vsub.s32 %v289, %v291
  %v293 = vrot.slane %v14, %v292
  %v295 = vunpack.c.l.s4 1966171168
  %v296 = vunpack.c.0.s8 %v295
  %v297 = vlaneseq
  %v298 = vshrl.u32 %v297, 7
  %v299 = vsub.s32 %v296, %v298
  %v300 = vrot.slane %v286, %v299
  %v301 = vcombine.high %v293, %v293
  %v302 = vcombine.high %v300, %v300
  %v304 = vunpack.c.l.s4 1966171168
  %v305 = vunpack.c.0.s8 %v304
  %v306 = vlaneseq
  %v307 = vshrl.u32 %v306, 7
  %v308 = vsub.s32 %v305, %v307
  %v309 = vrot.slane %v293, %v308
  %v311 = vunpack.c.l.s4 1966171168
  %v312 = vunpack.c.0.s8 %v311
  %v313 = vlaneseq
  %v314 = vshrl.u32 %v313, 7
  %v315 = vsub.s32 %v312, %v314
  %v316 = vrot.slane %v300, %v315
  %v318 = vunpack.c.l.s4 1966171168
  %v319 = vunpack.c.0.s8 %v318
  %v320 = vlaneseq
  %v321 = vshrl.u32 %v320, 7
  %v322 = vsub.s32 %v319, %v321
  %v323 = vrot.slane %v301, %v322
  %v325 = vunpack.c.l.s4 1966171168
  %v326 = vunpack.c.0.s8 %v325
  %v327 = vlaneseq
  %v328 = vshrl.u32 %v327, 7
  %v329 = vsub.s32 %v326, %v328
  %v330 = vrot.slane %v302, %v329
  %v331 = vcombine.high %v309, %v309
  %v332 = vcombine.high %v316, %v316
  %v333 = vcombine.high %v323, %v323
  %v334 = vcombine.high %v330, %v330
  %v335 = vcombine.high %v15, %v15
  %v337 = vunpack.c.l.s4 1966171168
  %v338 = vunpack.c.0.s8 %v337
  %v339 = vlaneseq
  %v340 = vshrl.u32 %v339, 7
  %v341 = vsub.s32 %v338, %v340
  %v342 = vrot.slane %v15, %v341
  %v344 = vunpack.c.l.s4 1966171168
  %v345 = vunpack.c.0.s8 %v344
  %v346 = vlaneseq
  %v347 = vshrl.u32 %v346, 7
  %v348 = vsub.s32 %v345, %v347
  %v349 = vrot.slane %v335, %v348
  %v350 = vcombine.high %v342, %v342
  %v351 = vcombine.high %v349, %v349
  %v353 = vunpack.c.l.s4 1966171168
  %v354 = vunpack.c.0.s8 %v353
  %v355 = vlaneseq
  %v356 = vshrl.u32 %v355, 7
  %v357 = vsub.s32 %v354, %v356
  %v358 = vrot.slane %v342, %v357
  %v360 = vunpack.c.l.s4 1966171168
  %v361 = vunpack.c.0.s8 %v360
  %v362 = vlaneseq
  %v363 = vshrl.u32 %v362, 7
  %v364 = vsub.s32 %v361, %v363
  %v365 = vrot.slane %v349, %v364
  %v367 = vunpack.c.l.s4 1966171168
  %v368 = vunpack.c.0.s8 %v367
  %v369 = vlaneseq
  %v370 = vshrl.u32 %v369, 7
  %v371 = vsub.s32 %v368, %v370
  %v372 = vrot.slane %v350, %v371
  %v374 = vunpack.c.l.s4 1966171168
  %v375 = vunpack.c.0.s8 %v374
  %v376 = vlaneseq
  %v377 = vshrl.u32 %v376, 7
  %v378 = vsub.s32 %v375, %v377
  %v379 = vrot.slane %v351, %v378
  %v380 = vcombine.high %v358, %v358
  %v381 = vcombine.high %v365, %v365
  %v382 = vcombine.high %v372, %v372
  %v383 = vcombine.high %v379, %v379
  %v656 = vunpack.c.l.b16 %v16
  %v657 = vunpack.c.h.b16 %v16
  %v658 = vunpack.c.l.b16 %v17
  %v659 = vunpack.c.h.b16 %v17
  %v660 = vunpack.c.l.b16 %v18
  %v661 = vunpack.c.h.b16 %v18
  %v662 = vunpack.c.l.b16 %v19
  %v663 = vunpack.c.h.b16 %v19
  %v664 = vunpack.c.l.b16 %v20
  %v665 = vunpack.c.h.b16 %v20
  %v666 = vunpack.c.l.b16 %v21
  %v667 = vunpack.c.h.b16 %v21
  %v668 = vunpack.c.l.b16 %v22
  %v669 = vunpack.c.h.b16 %v22
  %v670 = vunpack.c.l.b16 %v23
  %v671 = vunpack.c.h.b16 %v23
  %v672 = vunpack.c.l.b16 %v24
  %v673 = vunpack.c.h.b16 %v24
  %v674 = vunpack.c.l.b16 %v25
  %v675 = vunpack.c.h.b16 %v25
  %v676 = vunpack.c.l.b16 %v26
  %v677 = vunpack.c.h.b16 %v26
  %v678 = vunpack.c.l.b16 %v27
  %v679 = vunpack.c.h.b16 %v27
  %v680 = vunpack.c.l.b16 %v28
  %v681 = vunpack.c.h.b16 %v28
  %v682 = vunpack.c.l.b16 %v29
  %v683 = vunpack.c.h.b16 %v29
  %v684 = vunpack.c.l.b16 %v30
  %v685 = vunpack.c.h.b16 %v30
  %v686 = vunpack.c.l.b16 %v31
  %v687 = vunpack.c.h.b16 %v31
  %v688 = vunpack.c.l.b16 %v32
  %v689 = vunpack.c.h.b16 %v32
  %v690 = vunpack.c.l.b16 %v33
  %v691 = vunpack.c.h.b16 %v33
  %v692 = vunpack.c.l.b16 %v34
  %v693 = vunpack.c.h.b16 %v34
  %v694 = vunpack.c.l.b16 %v35
  %v695 = vunpack.c.h.b16 %v35
  %v696 = vunpack.c.l.b16 %v36
  %v697 = vunpack.c.h.b16 %v36
  %v698 = vunpack.c.l.b16 %v37
  %v699 = vunpack.c.h.b16 %v37
  %v700 = vunpack.c.l.b16 %v38
  %v701 = vunpack.c.h.b16 %v38
  %v702 = vunpack.c.l.b16 %v39
  %v703 = vunpack.c.h.b16 %v39
  %v704 = vunpack.c.l.b16 %v40
  %v705 = vunpack.c.h.b16 %v40
  %v706 = vunpack.c.l.b16 %v41
  %v707 = vunpack.c.h.b16 %v41
  %v708 = vunpack.c.l.b16 %v42
  %v709 = vunpack.c.h.b16 %v42
  %v710 = vunpack.c.l.b16 %v43
  %v711 = vunpack.c.h.b16 %v43
  %v712 = vunpack.c.l.b16 %v44
  %v713 = vunpack.c.h.b16 %v44
  %v714 = vunpack.c.l.b16 %v45
  %v715 = vunpack.c.h.b16 %v45
  %v716 = vunpack.c.l.b16 %v46
  %v717 = vunpack.c.h.b16 %v46
  %v718 = vunpack.c.l.b16 %v47
  %v719 = vunpack.c.h.b16 %v47
  %v720 = vunpack.c.l.b16 %v48
  %v721 = vunpack.c.h.b16 %v48
  %v722 = vunpack.c.l.b16 %v49
  %v723 = vunpack.c.h.b16 %v49
  %v724 = vunpack.c.l.b16 %v50
  %v725 = vunpack.c.h.b16 %v50
  %v726 = vunpack.c.l.b16 %v51
  %v727 = vunpack.c.h.b16 %v51
  %v728 = vunpack.c.l.b16 %v52
  %v729 = vunpack.c.h.b16 %v52
  %v730 = vunpack.c.l.b16 %v53
  %v731 = vunpack.c.h.b16 %v53
  %v732 = vunpack.c.l.b16 %v54
  %v733 = vunpack.c.h.b16 %v54
  %v734 = vunpack.c.l.b16 %v55
  %v735 = vunpack.c.h.b16 %v55
  %v736 = vunpack.c.l.b16 %v56
  %v737 = vunpack.c.h.b16 %v56
  %v738 = vunpack.c.l.b16 %v57
  %v739 = vunpack.c.h.b16 %v57
  %v740 = vunpack.c.l.b16 %v58
  %v741 = vunpack.c.h.b16 %v58
  %v742 = vunpack.c.l.b16 %v59
  %v743 = vunpack.c.h.b16 %v59
  %v744 = vunpack.c.l.b16 %v60
  %v745 = vunpack.c.h.b16 %v60
  %v746 = vunpack.c.l.b16 %v61
  %v747 = vunpack.c.h.b16 %v61
  %v748 = vunpack.c.l.b16 %v62
  %v749 = vunpack.c.h.b16 %v62
  %v750 = vunpack.c.l.b16 %v63
  %v751 = vunpack.c.h.b16 %v63
  %v752 = vunpack.c.l.b16 %v64
  %v753 = vunpack.c.h.b16 %v64
  %v754 = vunpack.c.l.b16 %v65
  %v755 = vunpack.c.h.b16 %v65
  %v756 = vunpack.c.l.b16 %v66
  %v757 = vunpack.c.h.b16 %v66
  %v758 = vunpack.c.l.b16 %v67
  %v759 = vunpack.c.h.b16 %v67
  %v760 = vunpack.c.l.b16 %v68
  %v761 = vunpack.c.h.b16 %v68
  %v762 = vunpack.c.l.b16 %v69
  %v763 = vunpack.c.h.b16 %v69
  %v764 = vunpack.c.l.b16 %v70
  %v765 = vunpack.c.h.b16 %v70
  %v766 = vunpack.c.l.b16 %v71
  %v767 = vunpack.c.h.b16 %v71
  %v768 = vunpack.c.l.b16 %v72
  %v769 = vunpack.c.h.b16 %v72
  %v770 = vunpack.c.l.b16 %v73
  %v771 = vunpack.c.h.b16 %v73
  %v772 = vunpack.c.l.b16 %v74
  %v773 = vunpack.c.h.b16 %v74
  %v774 = vunpack.c.l.b16 %v75
  %v775 = vunpack.c.h.b16 %v75
  %v776 = vunpack.c.l.b16 %v76
  %v777 = vunpack.c.h.b16 %v76
  %v778 = vunpack.c.l.b16 %v77
  %v779 = vunpack.c.h.b16 %v77
  %v780 = vunpack.c.l.b16 %v78
  %v781 = vunpack.c.h.b16 %v78
  %v782 = vunpack.c.l.b16 %v79
  %v783 = vunpack.c.h.b16 %v79
  %v784 = vunpack.c.l.b16 %v80
  %v785 = vunpack.c.h.b16 %v80
  %v786 = vunpack.c.l.b16 %v81
  %v787 = vunpack.c.h.b16 %v81
  %v788 = vunpack.c.l.b16 %v82
  %v789 = vunpack.c.h.b16 %v82
  %v790 = vunpack.c.l.b16 %v83
  %v791 = vunpack.c.h.b16 %v83
  %v792 = vunpack.c.l.b16 %v84
  %v793 = vunpack.c.h.b16 %v84
  %v794 = vunpack.c.l.b16 %v85
  %v795 = vunpack.c.h.b16 %v85
  %v796 = vunpack.c.l.b16 %v86
  %v797 = vunpack.c.h.b16 %v86
  %v798 = vunpack.c.l.b16 %v87
  %v799 = vunpack.c.h.b16 %v87
  %v800 = vunpack.c.l.b16 %v88
  %v801 = vunpack.c.h.b16 %v88
  %v802 = vunpack.c.l.b16 %v89
  %v803 = vunpack.c.h.b16 %v89
  %v804 = vunpack.c.l.b16 %v90
  %v805 = vunpack.c.h.b16 %v90
  %v806 = vunpack.c.l.b16 %v91
  %v807 = vunpack.c.h.b16 %v91
  %v808 = vunpack.c.l.b16 %v92
  %v809 = vunpack.c.h.b16 %v92
  %v810 = vunpack.c.l.b16 %v93
  %v811 = vunpack.c.h.b16 %v93
  %v812 = vunpack.c.l.b16 %v94
  %v813 = vunpack.c.h.b16 %v94
  %v814 = vunpack.c.l.b16 %v95
  %v815 = vunpack.c.h.b16 %v95
  %v816 = vunpack.c.l.b16 %v96
  %v817 = vunpack.c.h.b16 %v96
  %v818 = vunpack.c.l.b16 %v97
  %v819 = vunpack.c.h.b16 %v97
  %v820 = vunpack.c.l.b16 %v98
  %v821 = vunpack.c.h.b16 %v98
  %v822 = vunpack.c.l.b16 %v99
  %v823 = vunpack.c.h.b16 %v99
  %v824 = vunpack.c.l.b16 %v100
  %v825 = vunpack.c.h.b16 %v100
  %v826 = vunpack.c.l.b16 %v101
  %v827 = vunpack.c.h.b16 %v101
  %v828 = vunpack.c.l.b16 %v102
  %v829 = vunpack.c.h.b16 %v102
  %v830 = vunpack.c.l.b16 %v103
  %v831 = vunpack.c.h.b16 %v103
  %v832 = vunpack.c.l.b16 %v104
  %v833 = vunpack.c.h.b16 %v104
  %v834 = vunpack.c.l.b16 %v105
  %v835 = vunpack.c.h.b16 %v105
  %v836 = vunpack.c.l.b16 %v106
  %v837 = vunpack.c.h.b16 %v106
  %v838 = vunpack.c.l.b16 %v107
  %v839 = vunpack.c.h.b16 %v107
  %v840 = vunpack.c.l.b16 %v108
  %v841 = vunpack.c.h.b16 %v108
  %v842 = vunpack.c.l.b16 %v109
  %v843 = vunpack.c.h.b16 %v109
  %v844 = vunpack.c.l.b16 %v110
  %v845 = vunpack.c.h.b16 %v110
  %v846 = vunpack.c.l.b16 %v111
  %v847 = vunpack.c.h.b16 %v111
  %v848 = vunpack.c.l.b16 %v112
  %v849 = vunpack.c.h.b16 %v112
  %v850 = vunpack.c.l.b16 %v113
  %v851 = vunpack.c.h.b16 %v113
  %v852 = vunpack.c.l.b16 %v114
  %v853 = vunpack.c.h.b16 %v114
  %v854 = vunpack.c.l.b16 %v115
  %v855 = vunpack.c.h.b16 %v115
  %v856 = vunpack.c.l.b16 %v116
  %v857 = vunpack.c.h.b16 %v116
  %v858 = vunpack.c.l.b16 %v117
  %v859 = vunpack.c.h.b16 %v117
  %v860 = vunpack.c.l.b16 %v118
  %v861 = vunpack.c.h.b16 %v118
  %v862 = vunpack.c.l.b16 %v119
  %v863 = vunpack.c.h.b16 %v119
  %v864 = vunpack.c.l.b16 %v120
  %v865 = vunpack.c.h.b16 %v120
  %v866 = vunpack.c.l.b16 %v121
  %v867 = vunpack.c.h.b16 %v121
  %v868 = vunpack.c.l.b16 %v122
  %v869 = vunpack.c.h.b16 %v122
  %v870 = vunpack.c.l.b16 %v123
  %v871 = vunpack.c.h.b16 %v123
  %v872 = vunpack.c.l.b16 %v124
  %v873 = vunpack.c.h.b16 %v124
  %v874 = vunpack.c.l.b16 %v125
  %v875 = vunpack.c.h.b16 %v125
  %v876 = vunpack.c.l.b16 %v126
  %v877 = vunpack.c.h.b16 %v126
  %v878 = vunpack.c.l.b16 %v127
  %v879 = vunpack.c.h.b16 %v127
  %v880 = vunpack.c.l.b16 %v128
  %v881 = vunpack.c.h.b16 %v128
  %v882 = vunpack.c.l.b16 %v129
  %v883 = vunpack.c.h.b16 %v129
  %v884 = vunpack.c.l.b16 %v130
  %v885 = vunpack.c.h.b16 %v130
  %v886 = vunpack.c.l.b16 %v131
  %v887 = vunpack.c.h.b16 %v131
  %v888 = vunpack.c.l.b16 %v132
  %v889 = vunpack.c.h.b16 %v132
  %v890 = vunpack.c.l.b16 %v133
  %v891 = vunpack.c.h.b16 %v133
  %v892 = vunpack.c.l.b16 %v134
  %v893 = vunpack.c.h.b16 %v134
  %v894 = vunpack.c.l.b16 %v135
  %v895 = vunpack.c.h.b16 %v135
  %v896 = vunpack.c.l.b16 %v136
  %v897 = vunpack.c.h.b16 %v136
  %v898 = vunpack.c.l.b16 %v137
  %v899 = vunpack.c.h.b16 %v137
  %v900 = vunpack.c.l.b16 %v138
  %v901 = vunpack.c.h.b16 %v138
  %v902 = vunpack.c.l.b16 %v139
  %v903 = vunpack.c.h.b16 %v139
  %v904 = vunpack.c.l.b16 %v140
  %v905 = vunpack.c.h.b16 %v140
  %v906 = vunpack.c.l.b16 %v141
  %v907 = vunpack.c.h.b16 %v141
  %v908 = vunpack.c.l.b16 %v142
  %v909 = vunpack.c.h.b16 %v142
  %v910 = vunpack.c.l.b16 %v143
  %v911 = vunpack.c.h.b16 %v143
  %v912 = vunpack.c.l.b16 %v144
  %v913 = vunpack.c.h.b16 %v144
  %v914 = vunpack.c.l.b16 %v145
  %v915 = vunpack.c.h.b16 %v145
  %v916 = vunpack.c.l.b16 %v146
  %v917 = vunpack.c.h.b16 %v146
  %v918 = vunpack.c.l.b16 %v147
  %v919 = vunpack.c.h.b16 %v147
  %v920 = vunpack.c.l.b16 %v148
  %v921 = vunpack.c.h.b16 %v148
  %v922 = vunpack.c.l.b16 %v149
  %v923 = vunpack.c.h.b16 %v149
  %v924 = vunpack.c.l.b16 %v150
  %v925 = vunpack.c.h.b16 %v150
  %v926 = vunpack.c.l.b16 %v151
  %v927 = vunpack.c.h.b16 %v151
  %v928 = vunpack.c.l.b16 %v152
  %v929 = vunpack.c.h.b16 %v152
  %v930 = vunpack.c.l.b16 %v153
  %v931 = vunpack.c.h.b16 %v153
  %v932 = vunpack.c.l.b16 %v154
  %v933 = vunpack.c.h.b16 %v154
  %v934 = vunpack.c.l.b16 %v155
  %v935 = vunpack.c.h.b16 %v155
  %v936 = vunpack.c.l.b16 %v156
  %v937 = vunpack.c.h.b16 %v156
  %v938 = vunpack.c.l.b16 %v157
  %v939 = vunpack.c.h.b16 %v157
  %v940 = vunpack.c.l.b16 %v158
  %v941 = vunpack.c.h.b16 %v158
  %v942 = vunpack.c.l.b16 %v159
  %v943 = vunpack.c.h.b16 %v159
  %v944 = vunpack.c.l.b16 %v160
  %v945 = vunpack.c.h.b16 %v160
  %v946 = vunpack.c.l.b16 %v161
  %v947 = vunpack.c.h.b16 %v161
  %v948 = vunpack.c.l.b16 %v162
  %v949 = vunpack.c.h.b16 %v162
  %v950 = vunpack.c.l.b16 %v163
  %v951 = vunpack.c.h.b16 %v163
  %v952 = vunpack.c.l.b16 %v164
  %v953 = vunpack.c.h.b16 %v164
  %v954 = vunpack.c.l.b16 %v165
  %v955 = vunpack.c.h.b16 %v165
  %v956 = vunpack.c.l.b16 %v166
  %v957 = vunpack.c.h.b16 %v166
  %v958 = vunpack.c.l.b16 %v167
  %v959 = vunpack.c.h.b16 %v167
  %v960 = vunpack.c.l.b16 %v168
  %v961 = vunpack.c.h.b16 %v168
  %v962 = vunpack.c.l.b16 %v169
  %v963 = vunpack.c.h.b16 %v169
  %v964 = vunpack.c.l.b16 %v170
  %v965 = vunpack.c.h.b16 %v170
  %v966 = vunpack.c.l.b16 %v171
  %v967 = vunpack.c.h.b16 %v171
  %v968 = vunpack.c.l.b16 %v172
  %v969 = vunpack.c.h.b16 %v172
  %v970 = vunpack.c.l.b16 %v173
  %v971 = vunpack.c.h.b16 %v173
  %v972 = vunpack.c.l.b16 %v174
  %v973 = vunpack.c.h.b16 %v174
  %v974 = vunpack.c.l.b16 %v175
  %v975 = vunpack.c.h.b16 %v175
  %v976 = vunpack.c.l.b16 %v176
  %v977 = vunpack.c.h.b16 %v176
  %v978 = vunpack.c.l.b16 %v177
  %v979 = vunpack.c.h.b16 %v177
  %v980 = vunpack.c.l.b16 %v178
  %v981 = vunpack.c.h.b16 %v178
  %v982 = vunpack.c.l.b16 %v179
  %v983 = vunpack.c.h.b16 %v179
  %v984 = vunpack.c.l.b16 %v180
  %v985 = vunpack.c.h.b16 %v180
  %v986 = vunpack.c.l.b16 %v181
  %v987 = vunpack.c.h.b16 %v181
  %v988 = vunpack.c.l.b16 %v182
  %v989 = vunpack.c.h.b16 %v182
  %v990 = vunpack.c.l.b16 %v183
  %v991 = vunpack.c.h.b16 %v183
  %v992 = vunpack.c.l.b16 %v184
  %v993 = vunpack.c.h.b16 %v184
  %v994 = vunpack.c.l.b16 %v185
  %v995 = vunpack.c.h.b16 %v185
  %v996 = vunpack.c.l.b16 %v186
  %v997 = vunpack.c.h.b16 %v186
  %v998 = vunpack.c.l.b16 %v187
  %v999 = vunpack.c.h.b16 %v187
  %v1000 = vunpack.c.l.b16 %v188
  %v1001 = vunpack.c.h.b16 %v188
  %v1002 = vunpack.c.l.b16 %v189
  %v1003 = vunpack.c.h.b16 %v189
  %v1004 = vunpack.c.l.b16 %v190
  %v1005 = vunpack.c.h.b16 %v190
  %v1006 = vunpack.c.l.b16 %v191
  %v1007 = vunpack.c.h.b16 %v191
  %v1008 = vunpack.c.l.b16 %v192
  %v1009 = vunpack.c.h.b16 %v192
  %v1010 = vunpack.c.l.b16 %v193
  %v1011 = vunpack.c.h.b16 %v193
  %v1012 = vunpack.c.l.b16 %v194
  %v1013 = vunpack.c.h.b16 %v194
  %v1014 = vunpack.c.l.b16 %v195
  %v1015 = vunpack.c.h.b16 %v195
  %v1016 = vunpack.c.l.b16 %v196
  %v1017 = vunpack.c.h.b16 %v196
  %v1018 = vunpack.c.l.b16 %v197
  %v1019 = vunpack.c.h.b16 %v197
  %v1020 = vunpack.c.l.b16 %v198
  %v1021 = vunpack.c.h.b16 %v198
  %v1022 = vunpack.c.l.b16 %v199
  %v1023 = vunpack.c.h.b16 %v199
  %v1024 = vunpack.c.l.b16 %v200
  %v1025 = vunpack.c.h.b16 %v200
  %v1026 = vunpack.c.l.b16 %v201
  %v1027 = vunpack.c.h.b16 %v201
  %v1028 = vunpack.c.l.b16 %v202
  %v1029 = vunpack.c.h.b16 %v202
  %v1030 = vunpack.c.l.b16 %v203
  %v1031 = vunpack.c.h.b16 %v203
  %v1032 = vunpack.c.l.b16 %v204
  %v1033 = vunpack.c.h.b16 %v204
  %v1034 = vunpack.c.l.b16 %v205
  %v1035 = vunpack.c.h.b16 %v205
  %v1036 = vunpack.c.l.b16 %v206
  %v1037 = vunpack.c.h.b16 %v206
  %v1038 = vunpack.c.l.b16 %v207
  %v1039 = vunpack.c.h.b16 %v207
  %v1040 = vunpack.c.l.b16 %v208
  %v1041 = vunpack.c.h.b16 %v208
  %v1042 = vunpack.c.l.b16 %v209
  %v1043 = vunpack.c.h.b16 %v209
  %v1044 = vunpack.c.l.b16 %v210
  %v1045 = vunpack.c.h.b16 %v210
  %v1046 = vunpack.c.l.b16 %v211
  %v1047 = vunpack.c.h.b16 %v211
  %v1048 = vunpack.c.l.b16 %v212
  %v1049 = vunpack.c.h.b16 %v212
  %v1050 = vunpack.c.l.b16 %v213
  %v1051 = vunpack.c.h.b16 %v213
  %v1052 = vunpack.c.l.b16 %v214
  %v1053 = vunpack.c.h.b16 %v214
  %v1054 = vunpack.c.l.b16 %v215
  %v1055 = vunpack.c.h.b16 %v215
  %v1056 = vunpack.c.l.b16 %v216
  %v1057 = vunpack.c.h.b16 %v216
  %v1058 = vunpack.c.l.b16 %v217
  %v1059 = vunpack.c.h.b16 %v217
  %v1060 = vunpack.c.l.b16 %v218
  %v1061 = vunpack.c.h.b16 %v218
  %v1062 = vunpack.c.l.b16 %v219
  %v1063 = vunpack.c.h.b16 %v219
  %v1064 = vunpack.c.l.b16 %v220
  %v1065 = vunpack.c.h.b16 %v220
  %v1066 = vunpack.c.l.b16 %v221
  %v1067 = vunpack.c.h.b16 %v221
  %v1068 = vunpack.c.l.b16 %v222
  %v1069 = vunpack.c.h.b16 %v222
  %v1070 = vunpack.c.l.b16 %v223
  %v1071 = vunpack.c.h.b16 %v223
  %v1072 = vunpack.c.l.b16 %v224
  %v1073 = vunpack.c.h.b16 %v224
  %v1074 = vunpack.c.l.b16 %v225
  %v1075 = vunpack.c.h.b16 %v225
  %v1076 = vunpack.c.l.b16 %v226
  %v1077 = vunpack.c.h.b16 %v226
  %v1078 = vunpack.c.l.b16 %v227
  %v1079 = vunpack.c.h.b16 %v227
  %v1080 = vunpack.c.l.b16 %v228
  %v1081 = vunpack.c.h.b16 %v228
  %v1082 = vunpack.c.l.b16 %v229
  %v1083 = vunpack.c.h.b16 %v229
  %v1084 = vunpack.c.l.b16 %v230
  %v1085 = vunpack.c.h.b16 %v230
  %v1086 = vunpack.c.l.b16 %v231
  %v1087 = vunpack.c.h.b16 %v231
  %v1088 = vunpack.c.l.b16 %v232
  %v1089 = vunpack.c.h.b16 %v232
  %v1090 = vunpack.c.l.b16 %v233
  %v1091 = vunpack.c.h.b16 %v233
  %v1092 = vunpack.c.l.b16 %v234
  %v1093 = vunpack.c.h.b16 %v234
  %v1094 = vunpack.c.l.b16 %v235
  %v1095 = vunpack.c.h.b16 %v235
  %v1096 = vunpack.c.l.b16 %v236
  %v1097 = vunpack.c.h.b16 %v236
  %v1098 = vunpack.c.l.b16 %v237
  %v1099 = vunpack.c.h.b16 %v237
  %v1100 = vunpack.c.l.b16 %v238
  %v1101 = vunpack.c.h.b16 %v238
  %v1102 = vunpack.c.l.b16 %v239
  %v1103 = vunpack.c.h.b16 %v239
  %v1104 = vunpack.c.l.b16 %v240
  %v1105 = vunpack.c.h.b16 %v240
  %v1106 = vunpack.c.l.b16 %v241
  %v1107 = vunpack.c.h.b16 %v241
  %v1108 = vunpack.c.l.b16 %v242
  %v1109 = vunpack.c.h.b16 %v242
  %v1110 = vunpack.c.l.b16 %v243
  %v1111 = vunpack.c.h.b16 %v243
  %v1112 = vunpack.c.l.b16 %v244
  %v1113 = vunpack.c.h.b16 %v244
  %v1114 = vunpack.c.l.b16 %v245
  %v1115 = vunpack.c.h.b16 %v245
  %v1116 = vunpack.c.l.b16 %v246
  %v1117 = vunpack.c.h.b16 %v246
  %v1118 = vunpack.c.l.b16 %v247
  %v1119 = vunpack.c.h.b16 %v247
  %v1120 = vunpack.c.l.b16 %v248
  %v1121 = vunpack.c.h.b16 %v248
  %v1122 = vunpack.c.l.b16 %v249
  %v1123 = vunpack.c.h.b16 %v249
  %v1124 = vunpack.c.l.b16 %v250
  %v1125 = vunpack.c.h.b16 %v250
  %v1126 = vunpack.c.l.b16 %v251
  %v1127 = vunpack.c.h.b16 %v251
  %v1128 = vunpack.c.l.b16 %v252
  %v1129 = vunpack.c.h.b16 %v252
  %v1130 = vunpack.c.l.b16 %v253
  %v1131 = vunpack.c.h.b16 %v253
  %v1132 = vunpack.c.l.b16 %v254
  %v1133 = vunpack.c.h.b16 %v254
  %v1134 = vunpack.c.l.b16 %v255
  %v1135 = vunpack.c.h.b16 %v255
  %v1136 = vunpack.c.l.b16 %v256
  %v1137 = vunpack.c.h.b16 %v256
  %v1138 = vunpack.c.l.b16 %v257
  %v1139 = vunpack.c.h.b16 %v257
  %v1140 = vunpack.c.l.b16 %v258
  %v1141 = vunpack.c.h.b16 %v258
  %v1142 = vunpack.c.l.b16 %v259
  %v1143 = vunpack.c.h.b16 %v259
  %v1144 = vunpack.c.l.b16 %v260
  %v1145 = vunpack.c.h.b16 %v260
  %v1146 = vunpack.c.l.b16 %v261
  %v1147 = vunpack.c.h.b16 %v261
  %v1148 = vunpack.c.l.b16 %v262
  %v1149 = vunpack.c.h.b16 %v262
  %v1150 = vunpack.c.l.b16 %v263
  %v1151 = vunpack.c.h.b16 %v263
  %v1152 = vunpack.c.l.b16 %v264
  %v1153 = vunpack.c.h.b16 %v264
  %v1154 = vunpack.c.l.b16 %v265
  %v1155 = vunpack.c.h.b16 %v265
  %v1156 = vunpack.c.l.b16 %v266
  %v1157 = vunpack.c.h.b16 %v266
  %v1158 = vunpack.c.l.b16 %v267
  %v1159 = vunpack.c.h.b16 %v267
  %v1160 = vunpack.c.l.b16 %v268
  %v1161 = vunpack.c.h.b16 %v268
  %v1162 = vunpack.c.l.b16 %v269
  %v1163 = vunpack.c.h.b16 %v269
  %v1164 = vunpack.c.l.b16 %v270
  %v1165 = vunpack.c.h.b16 %v270
  %v1166 = vunpack.c.l.b16 %v271
  %v1167 = vunpack.c.h.b16 %v271
  %v1168 = vpack.c.b16 %v658, %v656
  %v1169 = vpack.c.b16 %v659, %v657
  %v1170 = vpack.c.b16 %v662, %v660
  %v1171 = vpack.c.b16 %v663, %v661
  %v1172 = vpack.c.b16 %v666, %v664
  %v1173 = vpack.c.b16 %v667, %v665
  %v1174 = vpack.c.b16 %v670, %v668
  %v1175 = vpack.c.b16 %v671, %v669
  %v1176 = vpack.c.b16 %v674, %v672
  %v1177 = vpack.c.b16 %v675, %v673
  %v1178 = vpack.c.b16 %v678, %v676
  %v1179 = vpack.c.b16 %v679, %v677
  %v1180 = vpack.c.b16 %v682, %v680
  %v1181 = vpack.c.b16 %v683, %v681
  %v1182 = vpack.c.b16 %v686, %v684
  %v1183 = vpack.c.b16 %v687, %v685
  %v1184 = vpack.c.b16 %v690, %v688
  %v1185 = vpack.c.b16 %v691, %v689
  %v1186 = vpack.c.b16 %v694, %v692
  %v1187 = vpack.c.b16 %v695, %v693
  %v1188 = vpack.c.b16 %v698, %v696
  %v1189 = vpack.c.b16 %v699, %v697
  %v1190 = vpack.c.b16 %v702, %v700
  %v1191 = vpack.c.b16 %v703, %v701
  %v1192 = vpack.c.b16 %v706, %v704
  %v1193 = vpack.c.b16 %v707, %v705
  %v1194 = vpack.c.b16 %v710, %v708
  %v1195 = vpack.c.b16 %v711, %v709
  %v1196 = vpack.c.b16 %v714, %v712
  %v1197 = vpack.c.b16 %v715, %v713
  %v1198 = vpack.c.b16 %v718, %v716
  %v1199 = vpack.c.b16 %v719, %v717
  %v1200 = vpack.c.b16 %v722, %v720
  %v1201 = vpack.c.b16 %v723, %v721
  %v1202 = vpack.c.b16 %v726, %v724
  %v1203 = vpack.c.b16 %v727, %v725
  %v1204 = vpack.c.b16 %v730, %v728
  %v1205 = vpack.c.b16 %v731, %v729
  %v1206 = vpack.c.b16 %v734, %v732
  %v1207 = vpack.c.b16 %v735, %v733
  %v1208 = vpack.c.b16 %v738, %v736
  %v1209 = vpack.c.b16 %v739, %v737
  %v1210 = vpack.c.b16 %v742, %v740
  %v1211 = vpack.c.b16 %v743, %v741
  %v1212 = vpack.c.b16 %v746, %v744
  %v1213 = vpack.c.b16 %v747, %v745
  %v1214 = vpack.c.b16 %v750, %v748
  %v1215 = vpack.c.b16 %v751, %v749
  %v1216 = vpack.c.b16 %v754, %v752
  %v1217 = vpack.c.b16 %v755, %v753
  %v1218 = vpack.c.b16 %v758, %v756
  %v1219 = vpack.c.b16 %v759, %v757
  %v1220 = vpack.c.b16 %v762, %v760
  %v1221 = vpack.c.b16 %v763, %v761
  %v1222 = vpack.c.b16 %v766, %v764
  %v1223 = vpack.c.b16 %v767, %v765
  %v1224 = vpack.c.b16 %v770, %v768
  %v1225 = vpack.c.b16 %v771, %v769
  %v1226 = vpack.c.b16 %v774, %v772
  %v1227 = vpack.c.b16 %v775, %v773
  %v1228 = vpack.c.b16 %v778, %v776
  %v1229 = vpack.c.b16 %v779, %v777
  %v1230 = vpack.c.b16 %v782, %v780
  %v1231 = vpack.c.b16 %v783, %v781
  %v1232 = vpack.c.b16 %v786, %v784
  %v1233 = vpack.c.b16 %v787, %v785
  %v1234 = vpack.c.b16 %v790, %v788
  %v1235 = vpack.c.b16 %v791, %v789
  %v1236 = vpack.c.b16 %v794, %v792
  %v1237 = vpack.c.b16 %v795, %v793
  %v1238 = vpack.c.b16 %v798, %v796
  %v1239 = vpack.c.b16 %v799, %v797
  %v1240 = vpack.c.b16 %v802, %v800
  %v1241 = vpack.c.b16 %v803, %v801
  %v1242 = vpack.c.b16 %v806, %v804
  %v1243 = vpack.c.b16 %v807, %v805
  %v1244 = vpack.c.b16 %v810, %v808
  %v1245 = vpack.c.b16 %v811, %v809
  %v1246 = vpack.c.b16 %v814, %v812
  %v1247 = vpack.c.b16 %v815, %v813
  %v1248 = vpack.c.b16 %v818, %v816
  %v1249 = vpack.c.b16 %v819, %v817
  %v1250 = vpack.c.b16 %v822, %v820
  %v1251 = vpack.c.b16 %v823, %v821
  %v1252 = vpack.c.b16 %v826, %v824
  %v1253 = vpack.c.b16 %v827, %v825
  %v1254 = vpack.c.b16 %v830, %v828
  %v1255 = vpack.c.b16 %v831, %v829
  %v1256 = vpack.c.b16 %v834, %v832
  %v1257 = vpack.c.b16 %v835, %v833
  %v1258 = vpack.c.b16 %v838, %v836
  %v1259 = vpack.c.b16 %v839, %v837
  %v1260 = vpack.c.b16 %v842, %v840
  %v1261 = vpack.c.b16 %v843, %v841
  %v1262 = vpack.c.b16 %v846, %v844
  %v1263 = vpack.c.b16 %v847, %v845
  %v1264 = vpack.c.b16 %v850, %v848
  %v1265 = vpack.c.b16 %v851, %v849
  %v1266 = vpack.c.b16 %v854, %v852
  %v1267 = vpack.c.b16 %v855, %v853
  %v1268 = vpack.c.b16 %v858, %v856
  %v1269 = vpack.c.b16 %v859, %v857
  %v1270 = vpack.c.b16 %v862, %v860
  %v1271 = vpack.c.b16 %v863, %v861
  %v1272 = vpack.c.b16 %v866, %v864
  %v1273 = vpack.c.b16 %v867, %v865
  %v1274 = vpack.c.b16 %v870, %v868
  %v1275 = vpack.c.b16 %v871, %v869
  %v1276 = vpack.c.b16 %v874, %v872
  %v1277 = vpack.c.b16 %v875, %v873
  %v1278 = vpack.c.b16 %v878, %v876
  %v1279 = vpack.c.b16 %v879, %v877
  %v1280 = vpack.c.b16 %v882, %v880
  %v1281 = vpack.c.b16 %v883, %v881
  %v1282 = vpack.c.b16 %v886, %v884
  %v1283 = vpack.c.b16 %v887, %v885
  %v1284 = vpack.c.b16 %v890, %v888
  %v1285 = vpack.c.b16 %v891, %v889
  %v1286 = vpack.c.b16 %v894, %v892
  %v1287 = vpack.c.b16 %v895, %v893
  %v1288 = vpack.c.b16 %v898, %v896
  %v1289 = vpack.c.b16 %v899, %v897
  %v1290 = vpack.c.b16 %v902, %v900
  %v1291 = vpack.c.b16 %v903, %v901
  %v1292 = vpack.c.b16 %v906, %v904
  %v1293 = vpack.c.b16 %v907, %v905
  %v1294 = vpack.c.b16 %v910, %v908
  %v1295 = vpack.c.b16 %v911, %v909
  %v1296 = vpack.c.b16 %v914, %v912
  %v1297 = vpack.c.b16 %v915, %v913
  %v1298 = vpack.c.b16 %v918, %v916
  %v1299 = vpack.c.b16 %v919, %v917
  %v1300 = vpack.c.b16 %v922, %v920
  %v1301 = vpack.c.b16 %v923, %v921
  %v1302 = vpack.c.b16 %v926, %v924
  %v1303 = vpack.c.b16 %v927, %v925
  %v1304 = vpack.c.b16 %v930, %v928
  %v1305 = vpack.c.b16 %v931, %v929
  %v1306 = vpack.c.b16 %v934, %v932
  %v1307 = vpack.c.b16 %v935, %v933
  %v1308 = vpack.c.b16 %v938, %v936
  %v1309 = vpack.c.b16 %v939, %v937
  %v1310 = vpack.c.b16 %v942, %v940
  %v1311 = vpack.c.b16 %v943, %v941
  %v1312 = vpack.c.b16 %v946, %v944
  %v1313 = vpack.c.b16 %v947, %v945
  %v1314 = vpack.c.b16 %v950, %v948
  %v1315 = vpack.c.b16 %v951, %v949
  %v1316 = vpack.c.b16 %v954, %v952
  %v1317 = vpack.c.b16 %v955, %v953
  %v1318 = vpack.c.b16 %v958, %v956
  %v1319 = vpack.c.b16 %v959, %v957
  %v1320 = vpack.c.b16 %v962, %v960
  %v1321 = vpack.c.b16 %v963, %v961
  %v1322 = vpack.c.b16 %v966, %v964
  %v1323 = vpack.c.b16 %v967, %v965
  %v1324 = vpack.c.b16 %v970, %v968
  %v1325 = vpack.c.b16 %v971, %v969
  %v1326 = vpack.c.b16 %v974, %v972
  %v1327 = vpack.c.b16 %v975, %v973
  %v1328 = vpack.c.b16 %v978, %v976
  %v1329 = vpack.c.b16 %v979, %v977
  %v1330 = vpack.c.b16 %v982, %v980
  %v1331 = vpack.c.b16 %v983, %v981
  %v1332 = vpack.c.b16 %v986, %v984
  %v1333 = vpack.c.b16 %v987, %v985
  %v1334 = vpack.c.b16 %v990, %v988
  %v1335 = vpack.c.b16 %v991, %v989
  %v1336 = vpack.c.b16 %v994, %v992
  %v1337 = vpack.c.b16 %v995, %v993
  %v1338 = vpack.c.b16 %v998, %v996
  %v1339 = vpack.c.b16 %v999, %v997
  %v1340 = vpack.c.b16 %v1002, %v1000
  %v1341 = vpack.c.b16 %v1003, %v1001
  %v1342 = vpack.c.b16 %v1006, %v1004
  %v1343 = vpack.c.b16 %v1007, %v1005
  %v1344 = vpack.c.b16 %v1010, %v1008
  %v1345 = vpack.c.b16 %v1011, %v1009
  %v1346 = vpack.c.b16 %v1014, %v1012
  %v1347 = vpack.c.b16 %v1015, %v1013
  %v1348 = vpack.c.b16 %v1018, %v1016
  %v1349 = vpack.c.b16 %v1019, %v1017
  %v1350 = vpack.c.b16 %v1022, %v1020
  %v1351 = vpack.c.b16 %v1023, %v1021
  %v1352 = vpack.c.b16 %v1026, %v1024
  %v1353 = vpack.c.b16 %v1027, %v1025
  %v1354 = vpack.c.b16 %v1030, %v1028
  %v1355 = vpack.c.b16 %v1031, %v1029
  %v1356 = vpack.c.b16 %v1034, %v1032
  %v1357 = vpack.c.b16 %v1035, %v1033
  %v1358 = vpack.c.b16 %v1038, %v1036
  %v1359 = vpack.c.b16 %v1039, %v1037
  %v1360 = vpack.c.b16 %v1042, %v1040
  %v1361 = vpack.c.b16 %v1043, %v1041
  %v1362 = vpack.c.b16 %v1046, %v1044
  %v1363 = vpack.c.b16 %v1047, %v1045
  %v1364 = vpack.c.b16 %v1050, %v1048
  %v1365 = vpack.c.b16 %v1051, %v1049
  %v1366 = vpack.c.b16 %v1054, %v1052
  %v1367 = vpack.c.b16 %v1055, %v1053
  %v1368 = vpack.c.b16 %v1058, %v1056
  %v1369 = vpack.c.b16 %v1059, %v1057
  %v1370 = vpack.c.b16 %v1062, %v1060
  %v1371 = vpack.c.b16 %v1063, %v1061
  %v1372 = vpack.c.b16 %v1066, %v1064
  %v1373 = vpack.c.b16 %v1067, %v1065
  %v1374 = vpack.c.b16 %v1070, %v1068
  %v1375 = vpack.c.b16 %v1071, %v1069
  %v1376 = vpack.c.b16 %v1074, %v1072
  %v1377 = vpack.c.b16 %v1075, %v1073
  %v1378 = vpack.c.b16 %v1078, %v1076
  %v1379 = vpack.c.b16 %v1079, %v1077
  %v1380 = vpack.c.b16 %v1082, %v1080
  %v1381 = vpack.c.b16 %v1083, %v1081
  %v1382 = vpack.c.b16 %v1086, %v1084
  %v1383 = vpack.c.b16 %v1087, %v1085
  %v1384 = vpack.c.b16 %v1090, %v1088
  %v1385 = vpack.c.b16 %v1091, %v1089
  %v1386 = vpack.c.b16 %v1094, %v1092
  %v1387 = vpack.c.b16 %v1095, %v1093
  %v1388 = vpack.c.b16 %v1098, %v1096
  %v1389 = vpack.c.b16 %v1099, %v1097
  %v1390 = vpack.c.b16 %v1102, %v1100
  %v1391 = vpack.c.b16 %v1103, %v1101
  %v1392 = vpack.c.b16 %v1106, %v1104
  %v1393 = vpack.c.b16 %v1107, %v1105
  %v1394 = vpack.c.b16 %v1110, %v1108
  %v1395 = vpack.c.b16 %v1111, %v1109
  %v1396 = vpack.c.b16 %v1114, %v1112
  %v1397 = vpack.c.b16 %v1115, %v1113
  %v1398 = vpack.c.b16 %v1118, %v1116
  %v1399 = vpack.c.b16 %v1119, %v1117
  %v1400 = vpack.c.b16 %v1122, %v1120
  %v1401 = vpack.c.b16 %v1123, %v1121
  %v1402 = vpack.c.b16 %v1126, %v1124
  %v1403 = vpack.c.b16 %v1127, %v1125
  %v1404 = vpack.c.b16 %v1130, %v1128
  %v1405 = vpack.c.b16 %v1131, %v1129
  %v1406 = vpack.c.b16 %v1134, %v1132
  %v1407 = vpack.c.b16 %v1135, %v1133
  %v1408 = vpack.c.b16 %v1138, %v1136
  %v1409 = vpack.c.b16 %v1139, %v1137
  %v1410 = vpack.c.b16 %v1142, %v1140
  %v1411 = vpack.c.b16 %v1143, %v1141
  %v1412 = vpack.c.b16 %v1146, %v1144
  %v1413 = vpack.c.b16 %v1147, %v1145
  %v1414 = vpack.c.b16 %v1150, %v1148
  %v1415 = vpack.c.b16 %v1151, %v1149
  %v1416 = vpack.c.b16 %v1154, %v1152
  %v1417 = vpack.c.b16 %v1155, %v1153
  %v1418 = vpack.c.b16 %v1158, %v1156
  %v1419 = vpack.c.b16 %v1159, %v1157
  %v1420 = vpack.c.b16 %v1162, %v1160
  %v1421 = vpack.c.b16 %v1163, %v1161
  %v1422 = vpack.c.b16 %v1166, %v1164
  %v1423 = vpack.c.b16 %v1167, %v1165
  %1680 = vmatprep.subr.bf16.mxu0 %v1169
  %1681 = vmatpush1.bf16.msra.mxu0 %v1168
  %1682 = vmatprep.subr.bf16.mxu0 %v1171
  %1683 = vmatpush1.bf16.msra.mxu0 %v1170
  %1684 = vmatprep.subr.bf16.mxu0 %v1173
  %1685 = vmatpush1.bf16.msra.mxu0 %v1172
  %1686 = vmatprep.subr.bf16.mxu0 %v1175
  %1687 = vmatpush1.bf16.msra.mxu0 %v1174
  %1688 = vmatprep.subr.bf16.mxu0 %v1177
  %1689 = vmatpush1.bf16.msra.mxu0 %v1176
  %1690 = vmatprep.subr.bf16.mxu0 %v1179
  %1691 = vmatpush1.bf16.msra.mxu0 %v1178
  %1692 = vmatprep.subr.bf16.mxu0 %v1181
  %1693 = vmatpush1.bf16.msra.mxu0 %v1180
  %1694 = vmatprep.subr.bf16.mxu0 %v1183
  %1695 = vmatpush1.bf16.msra.mxu0 %v1182
  %1696 = vmatprep.subr.bf16.mxu0 %v1185
  %1697 = vmatpush1.bf16.msra.mxu0 %v1184
  %1698 = vmatprep.subr.bf16.mxu0 %v1187
  %1699 = vmatpush1.bf16.msra.mxu0 %v1186
  %1700 = vmatprep.subr.bf16.mxu0 %v1189
  %1701 = vmatpush1.bf16.msra.mxu0 %v1188
  %1702 = vmatprep.subr.bf16.mxu0 %v1191
  %1703 = vmatpush1.bf16.msra.mxu0 %v1190
  %1704 = vmatprep.subr.bf16.mxu0 %v1193
  %1705 = vmatpush1.bf16.msra.mxu0 %v1192
  %1706 = vmatprep.subr.bf16.mxu0 %v1195
  %1707 = vmatpush1.bf16.msra.mxu0 %v1194
  %1708 = vmatprep.subr.bf16.mxu0 %v1197
  %1709 = vmatpush1.bf16.msra.mxu0 %v1196
  %1710 = vmatprep.subr.bf16.mxu0 %v1199
  %1711 = vmatpush1.bf16.msra.mxu0 %v1198
  %1712 = vmatprep.mubr.bf16.mxu0 %v323
  %1713 = vmatmul.mubr.bf16.gmra.mrb[0].mxu0 %v309
  %v1714 = vpop.f32.mrb[0].mxu0
  %v1715 = vadd.f32 %v277, %v1714
  %v1716 = vpop.f32.mrb[0].mxu0
  %v1717 = vadd.f32 %v281, %v1716
  %v1718 = vpop.f32.mrb[0].mxu0
  %v1719 = vpop.f32.mrb[0].mxu0
  %1720 = vdwg.mxu0
  %1721 = vmatprep.subr.bf16.mxu0 %v1201
  %1722 = vmatpush1.bf16.msra.mxu0 %v1200
  %1723 = vmatprep.subr.bf16.mxu0 %v1203
  %1724 = vmatpush1.bf16.msra.mxu0 %v1202
  %1725 = vmatprep.subr.bf16.mxu0 %v1205
  %1726 = vmatpush1.bf16.msra.mxu0 %v1204
  %1727 = vmatprep.subr.bf16.mxu0 %v1207
  %1728 = vmatpush1.bf16.msra.mxu0 %v1206
  %1729 = vmatprep.subr.bf16.mxu0 %v1209
  %1730 = vmatpush1.bf16.msra.mxu0 %v1208
  %1731 = vmatprep.subr.bf16.mxu0 %v1211
  %1732 = vmatpush1.bf16.msra.mxu0 %v1210
  %1733 = vmatprep.subr.bf16.mxu0 %v1213
  %1734 = vmatpush1.bf16.msra.mxu0 %v1212
  %1735 = vmatprep.subr.bf16.mxu0 %v1215
  %1736 = vmatpush1.bf16.msra.mxu0 %v1214
  %1737 = vmatprep.subr.bf16.mxu0 %v1217
  %1738 = vmatpush1.bf16.msra.mxu0 %v1216
  %1739 = vmatprep.subr.bf16.mxu0 %v1219
  %1740 = vmatpush1.bf16.msra.mxu0 %v1218
  %1741 = vmatprep.subr.bf16.mxu0 %v1221
  %1742 = vmatpush1.bf16.msra.mxu0 %v1220
  %1743 = vmatprep.subr.bf16.mxu0 %v1223
  %1744 = vmatpush1.bf16.msra.mxu0 %v1222
  %1745 = vmatprep.subr.bf16.mxu0 %v1225
  %1746 = vmatpush1.bf16.msra.mxu0 %v1224
  %1747 = vmatprep.subr.bf16.mxu0 %v1227
  %1748 = vmatpush1.bf16.msra.mxu0 %v1226
  %1749 = vmatprep.subr.bf16.mxu0 %v1229
  %1750 = vmatpush1.bf16.msra.mxu0 %v1228
  %1751 = vmatprep.subr.bf16.mxu0 %v1231
  %1752 = vmatpush1.bf16.msra.mxu0 %v1230
  %1753 = vmatprep.mubr.bf16.mxu0 %v333
  %1754 = vmatmul.mubr.bf16.gmra.mrb[0].mxu0 %v331
  %v1755 = vpop.f32.mrb[0].mxu0
  %v1756 = vadd.f32 %v1715, %v1755
  %v1757 = vpop.f32.mrb[0].mxu0
  %v1758 = vadd.f32 %v1717, %v1757
  %v1759 = vpop.f32.mrb[0].mxu0
  %v1760 = vpop.f32.mrb[0].mxu0
  %1761 = vdwg.mxu0
  %1762 = vmatprep.subr.bf16.mxu0 %v1233
  %1763 = vmatpush1.bf16.msra.mxu0 %v1232
  %1764 = vmatprep.subr.bf16.mxu0 %v1235
  %1765 = vmatpush1.bf16.msra.mxu0 %v1234
  %1766 = vmatprep.subr.bf16.mxu0 %v1237
  %1767 = vmatpush1.bf16.msra.mxu0 %v1236
  %1768 = vmatprep.subr.bf16.mxu0 %v1239
  %1769 = vmatpush1.bf16.msra.mxu0 %v1238
  %1770 = vmatprep.subr.bf16.mxu0 %v1241
  %1771 = vmatpush1.bf16.msra.mxu0 %v1240
  %1772 = vmatprep.subr.bf16.mxu0 %v1243
  %1773 = vmatpush1.bf16.msra.mxu0 %v1242
  %1774 = vmatprep.subr.bf16.mxu0 %v1245
  %1775 = vmatpush1.bf16.msra.mxu0 %v1244
  %1776 = vmatprep.subr.bf16.mxu0 %v1247
  %1777 = vmatpush1.bf16.msra.mxu0 %v1246
  %1778 = vmatprep.subr.bf16.mxu0 %v1249
  %1779 = vmatpush1.bf16.msra.mxu0 %v1248
  %1780 = vmatprep.subr.bf16.mxu0 %v1251
  %1781 = vmatpush1.bf16.msra.mxu0 %v1250
  %1782 = vmatprep.subr.bf16.mxu0 %v1253
  %1783 = vmatpush1.bf16.msra.mxu0 %v1252
  %1784 = vmatprep.subr.bf16.mxu0 %v1255
  %1785 = vmatpush1.bf16.msra.mxu0 %v1254
  %1786 = vmatprep.subr.bf16.mxu0 %v1257
  %1787 = vmatpush1.bf16.msra.mxu0 %v1256
  %1788 = vmatprep.subr.bf16.mxu0 %v1259
  %1789 = vmatpush1.bf16.msra.mxu0 %v1258
  %1790 = vmatprep.subr.bf16.mxu0 %v1261
  %1791 = vmatpush1.bf16.msra.mxu0 %v1260
  %1792 = vmatprep.subr.bf16.mxu0 %v1263
  %1793 = vmatpush1.bf16.msra.mxu0 %v1262
  %1794 = vmatprep.mubr.bf16.mxu0 %v330
  %1795 = vmatmul.mubr.bf16.gmra.mrb[0].mxu0 %v316
  %v1796 = vpop.f32.mrb[0].mxu0
  %v1797 = vadd.f32 %v1756, %v1796
  %v1798 = vpop.f32.mrb[0].mxu0
  %v1799 = vadd.f32 %v1758, %v1798
  %v1800 = vpop.f32.mrb[0].mxu0
  %v1801 = vpop.f32.mrb[0].mxu0
  %1802 = vdwg.mxu0
  %1803 = vmatprep.subr.bf16.mxu0 %v1265
  %1804 = vmatpush1.bf16.msra.mxu0 %v1264
  %1805 = vmatprep.subr.bf16.mxu0 %v1267
  %1806 = vmatpush1.bf16.msra.mxu0 %v1266
  %1807 = vmatprep.subr.bf16.mxu0 %v1269
  %1808 = vmatpush1.bf16.msra.mxu0 %v1268
  %1809 = vmatprep.subr.bf16.mxu0 %v1271
  %1810 = vmatpush1.bf16.msra.mxu0 %v1270
  %1811 = vmatprep.subr.bf16.mxu0 %v1273
  %1812 = vmatpush1.bf16.msra.mxu0 %v1272
  %1813 = vmatprep.subr.bf16.mxu0 %v1275
  %1814 = vmatpush1.bf16.msra.mxu0 %v1274
  %1815 = vmatprep.subr.bf16.mxu0 %v1277
  %1816 = vmatpush1.bf16.msra.mxu0 %v1276
  %1817 = vmatprep.subr.bf16.mxu0 %v1279
  %1818 = vmatpush1.bf16.msra.mxu0 %v1278
  %1819 = vmatprep.subr.bf16.mxu0 %v1281
  %1820 = vmatpush1.bf16.msra.mxu0 %v1280
  %1821 = vmatprep.subr.bf16.mxu0 %v1283
  %1822 = vmatpush1.bf16.msra.mxu0 %v1282
  %1823 = vmatprep.subr.bf16.mxu0 %v1285
  %1824 = vmatpush1.bf16.msra.mxu0 %v1284
  %1825 = vmatprep.subr.bf16.mxu0 %v1287
  %1826 = vmatpush1.bf16.msra.mxu0 %v1286
  %1827 = vmatprep.subr.bf16.mxu0 %v1289
  %1828 = vmatpush1.bf16.msra.mxu0 %v1288
  %1829 = vmatprep.subr.bf16.mxu0 %v1291
  %1830 = vmatpush1.bf16.msra.mxu0 %v1290
  %1831 = vmatprep.subr.bf16.mxu0 %v1293
  %1832 = vmatpush1.bf16.msra.mxu0 %v1292
  %1833 = vmatprep.subr.bf16.mxu0 %v1295
  %1834 = vmatpush1.bf16.msra.mxu0 %v1294
  %1835 = vmatprep.mubr.bf16.mxu0 %v334
  %1836 = vmatmul.mubr.bf16.gmra.mrb[0].mxu0 %v332
  %v1837 = vpop.f32.mrb[0].mxu0
  %v1838 = vadd.f32 %v1797, %v1837
  %v1839 = vpop.f32.mrb[0].mxu0
  %v1840 = vadd.f32 %v1799, %v1839
  %v1841 = vpop.f32.mrb[0].mxu0
  %v1842 = vpop.f32.mrb[0].mxu0
  %1843 = vdwg.mxu0
  %1844 = vmatprep.subr.bf16.mxu0 %v1297
  %1845 = vmatpush1.bf16.msra.mxu0 %v1296
  %1846 = vmatprep.subr.bf16.mxu0 %v1299
  %1847 = vmatpush1.bf16.msra.mxu0 %v1298
  %1848 = vmatprep.subr.bf16.mxu0 %v1301
  %1849 = vmatpush1.bf16.msra.mxu0 %v1300
  %1850 = vmatprep.subr.bf16.mxu0 %v1303
  %1851 = vmatpush1.bf16.msra.mxu0 %v1302
  %1852 = vmatprep.subr.bf16.mxu0 %v1305
  %1853 = vmatpush1.bf16.msra.mxu0 %v1304
  %1854 = vmatprep.subr.bf16.mxu0 %v1307
  %1855 = vmatpush1.bf16.msra.mxu0 %v1306
  %1856 = vmatprep.subr.bf16.mxu0 %v1309
  %1857 = vmatpush1.bf16.msra.mxu0 %v1308
  %1858 = vmatprep.subr.bf16.mxu0 %v1311
  %1859 = vmatpush1.bf16.msra.mxu0 %v1310
  %1860 = vmatprep.subr.bf16.mxu0 %v1313
  %1861 = vmatpush1.bf16.msra.mxu0 %v1312
  %1862 = vmatprep.subr.bf16.mxu0 %v1315
  %1863 = vmatpush1.bf16.msra.mxu0 %v1314
  %1864 = vmatprep.subr.bf16.mxu0 %v1317
  %1865 = vmatpush1.bf16.msra.mxu0 %v1316
  %1866 = vmatprep.subr.bf16.mxu0 %v1319
  %1867 = vmatpush1.bf16.msra.mxu0 %v1318
  %1868 = vmatprep.subr.bf16.mxu0 %v1321
  %1869 = vmatpush1.bf16.msra.mxu0 %v1320
  %1870 = vmatprep.subr.bf16.mxu0 %v1323
  %1871 = vmatpush1.bf16.msra.mxu0 %v1322
  %1872 = vmatprep.subr.bf16.mxu0 %v1325
  %1873 = vmatpush1.bf16.msra.mxu0 %v1324
  %1874 = vmatprep.subr.bf16.mxu0 %v1327
  %1875 = vmatpush1.bf16.msra.mxu0 %v1326
  %1876 = vmatprep.mubr.bf16.mxu0 %v372
  %1877 = vmatmul.mubr.bf16.gmra.mrb[0].mxu0 %v358
  %v1878 = vpop.f32.mrb[0].mxu0
  %v1879 = vadd.f32 %v1838, %v1878
  %v1880 = vpop.f32.mrb[0].mxu0
  %v1881 = vadd.f32 %v1840, %v1880
  %v1882 = vpop.f32.mrb[0].mxu0
  %v1883 = vpop.f32.mrb[0].mxu0
  %1884 = vdwg.mxu0
  %1885 = vmatprep.subr.bf16.mxu0 %v1329
  %1886 = vmatpush1.bf16.msra.mxu0 %v1328
  %1887 = vmatprep.subr.bf16.mxu0 %v1331
  %1888 = vmatpush1.bf16.msra.mxu0 %v1330
  %1889 = vmatprep.subr.bf16.mxu0 %v1333
  %1890 = vmatpush1.bf16.msra.mxu0 %v1332
  %1891 = vmatprep.subr.bf16.mxu0 %v1335
  %1892 = vmatpush1.bf16.msra.mxu0 %v1334
  %1893 = vmatprep.subr.bf16.mxu0 %v1337
  %1894 = vmatpush1.bf16.msra.mxu0 %v1336
  %1895 = vmatprep.subr.bf16.mxu0 %v1339
  %1896 = vmatpush1.bf16.msra.mxu0 %v1338
  %1897 = vmatprep.subr.bf16.mxu0 %v1341
  %1898 = vmatpush1.bf16.msra.mxu0 %v1340
  %1899 = vmatprep.subr.bf16.mxu0 %v1343
  %1900 = vmatpush1.bf16.msra.mxu0 %v1342
  %1901 = vmatprep.subr.bf16.mxu0 %v1345
  %1902 = vmatpush1.bf16.msra.mxu0 %v1344
  %1903 = vmatprep.subr.bf16.mxu0 %v1347
  %1904 = vmatpush1.bf16.msra.mxu0 %v1346
  %1905 = vmatprep.subr.bf16.mxu0 %v1349
  %1906 = vmatpush1.bf16.msra.mxu0 %v1348
  %1907 = vmatprep.subr.bf16.mxu0 %v1351
  %1908 = vmatpush1.bf16.msra.mxu0 %v1350
  %1909 = vmatprep.subr.bf16.mxu0 %v1353
  %1910 = vmatpush1.bf16.msra.mxu0 %v1352
  %1911 = vmatprep.subr.bf16.mxu0 %v1355
  %1912 = vmatpush1.bf16.msra.mxu0 %v1354
  %1913 = vmatprep.subr.bf16.mxu0 %v1357
  %1914 = vmatpush1.bf16.msra.mxu0 %v1356
  %1915 = vmatprep.subr.bf16.mxu0 %v1359
  %1916 = vmatpush1.bf16.msra.mxu0 %v1358
  %1917 = vmatprep.mubr.bf16.mxu0 %v382
  %1918 = vmatmul.mubr.bf16.gmra.mrb[0].mxu0 %v380
  %v1919 = vpop.f32.mrb[0].mxu0
  %v1920 = vadd.f32 %v1879, %v1919
  %v1921 = vpop.f32.mrb[0].mxu0
  %v1922 = vadd.f32 %v1881, %v1921
  %v1923 = vpop.f32.mrb[0].mxu0
  %v1924 = vpop.f32.mrb[0].mxu0
  %1925 = vdwg.mxu0
  %1926 = vmatprep.subr.bf16.mxu0 %v1361
  %1927 = vmatpush1.bf16.msra.mxu0 %v1360
  %1928 = vmatprep.subr.bf16.mxu0 %v1363
  %1929 = vmatpush1.bf16.msra.mxu0 %v1362
  %1930 = vmatprep.subr.bf16.mxu0 %v1365
  %1931 = vmatpush1.bf16.msra.mxu0 %v1364
  %1932 = vmatprep.subr.bf16.mxu0 %v1367
  %1933 = vmatpush1.bf16.msra.mxu0 %v1366
  %1934 = vmatprep.subr.bf16.mxu0 %v1369
  %1935 = vmatpush1.bf16.msra.mxu0 %v1368
  %1936 = vmatprep.subr.bf16.mxu0 %v1371
  %1937 = vmatpush1.bf16.msra.mxu0 %v1370
  %1938 = vmatprep.subr.bf16.mxu0 %v1373
  %1939 = vmatpush1.bf16.msra.mxu0 %v1372
  %1940 = vmatprep.subr.bf16.mxu0 %v1375
  %1941 = vmatpush1.bf16.msra.mxu0 %v1374
  %1942 = vmatprep.subr.bf16.mxu0 %v1377
  %1943 = vmatpush1.bf16.msra.mxu0 %v1376
  %1944 = vmatprep.subr.bf16.mxu0 %v1379
  %1945 = vmatpush1.bf16.msra.mxu0 %v1378
  %1946 = vmatprep.subr.bf16.mxu0 %v1381
  %1947 = vmatpush1.bf16.msra.mxu0 %v1380
  %1948 = vmatprep.subr.bf16.mxu0 %v1383
  %1949 = vmatpush1.bf16.msra.mxu0 %v1382
  %1950 = vmatprep.subr.bf16.mxu0 %v1385
  %1951 = vmatpush1.bf16.msra.mxu0 %v1384
  %1952 = vmatprep.subr.bf16.mxu0 %v1387
  %1953 = vmatpush1.bf16.msra.mxu0 %v1386
  %1954 = vmatprep.subr.bf16.mxu0 %v1389
  %1955 = vmatpush1.bf16.msra.mxu0 %v1388
  %1956 = vmatprep.subr.bf16.mxu0 %v1391
  %1957 = vmatpush1.bf16.msra.mxu0 %v1390
  %1958 = vmatprep.mubr.bf16.mxu0 %v379
  %1959 = vmatmul.mubr.bf16.gmra.mrb[0].mxu0 %v365
  %v1960 = vpop.f32.mrb[0].mxu0
  %v1961 = vadd.f32 %v1920, %v1960
  %v1962 = vpop.f32.mrb[0].mxu0
  %v1963 = vadd.f32 %v1922, %v1962
  %v1964 = vpop.f32.mrb[0].mxu0
  %v1965 = vpop.f32.mrb[0].mxu0
  %1966 = vdwg.mxu0
  %1967 = vmatprep.subr.bf16.mxu0 %v1393
  %1968 = vmatpush1.bf16.msra.mxu0 %v1392
  %1969 = vmatprep.subr.bf16.mxu0 %v1395
  %1970 = vmatpush1.bf16.msra.mxu0 %v1394
  %1971 = vmatprep.subr.bf16.mxu0 %v1397
  %1972 = vmatpush1.bf16.msra.mxu0 %v1396
  %1973 = vmatprep.subr.bf16.mxu0 %v1399
  %1974 = vmatpush1.bf16.msra.mxu0 %v1398
  %1975 = vmatprep.subr.bf16.mxu0 %v1401
  %1976 = vmatpush1.bf16.msra.mxu0 %v1400
  %1977 = vmatprep.subr.bf16.mxu0 %v1403
  %1978 = vmatpush1.bf16.msra.mxu0 %v1402
  %1979 = vmatprep.subr.bf16.mxu0 %v1405
  %1980 = vmatpush1.bf16.msra.mxu0 %v1404
  %1981 = vmatprep.subr.bf16.mxu0 %v1407
  %1982 = vmatpush1.bf16.msra.mxu0 %v1406
  %1983 = vmatprep.subr.bf16.mxu0 %v1409
  %1984 = vmatpush1.bf16.msra.mxu0 %v1408
  %1985 = vmatprep.subr.bf16.mxu0 %v1411
  %1986 = vmatpush1.bf16.msra.mxu0 %v1410
  %1987 = vmatprep.subr.bf16.mxu0 %v1413
  %1988 = vmatpush1.bf16.msra.mxu0 %v1412
  %1989 = vmatprep.subr.bf16.mxu0 %v1415
  %1990 = vmatpush1.bf16.msra.mxu0 %v1414
  %1991 = vmatprep.subr.bf16.mxu0 %v1417
  %1992 = vmatpush1.bf16.msra.mxu0 %v1416
  %1993 = vmatprep.subr.bf16.mxu0 %v1419
  %1994 = vmatpush1.bf16.msra.mxu0 %v1418
  %1995 = vmatprep.subr.bf16.mxu0 %v1421
  %1996 = vmatpush1.bf16.msra.mxu0 %v1420
  %1997 = vmatprep.subr.bf16.mxu0 %v1423
  %1998 = vmatpush1.bf16.msra.mxu0 %v1422
  %1999 = vmatprep.mubr.bf16.mxu0 %v383
  %2000 = vmatmul.mubr.bf16.gmra.mrb[0].mxu0 %v381
  %v2001 = vpop.f32.mrb[0].mxu0
  %v2002 = vadd.f32 %v1961, %v2001
  %v2003 = vpop.f32.mrb[0].mxu0
  %v2004 = vadd.f32 %v1963, %v2003
  %v2005 = vpop.f32.mrb[0].mxu0
  %v2006 = vpop.f32.mrb[0].mxu0
  %2007 = vdwg.mxu0
  %v2010 = vcombine.low %v2002, %v2004
  %v2012 = vunpack.c.l.s4 1983009808
  %v2013 = vunpack.c.0.s8 %v2012
  %v2014 = vlaneseq
  %v2015 = vshrl.u32 %v2014, 7
  %v2016 = vsub.s32 %v2013, %v2015
  %v2017 = vrot.slane %v2010, %v2016
  %2019 = vst [vmem:[%s3] sm:$0xf] %v2017
  // Predicated region
  $region14: #{vae_forward.11} parent=0 // pred_check
    _
  $region15: #{vae_forward.11} parent=0 // pred_check_branch
    %2021 = sbr.rel (0) target = $region17
  $region16: #{vae_forward.11} parent=0 // pred_region
    _
  $region17: #{vae_forward.11} parent=0 // pred_fallthru
    _
  // Predicated region
  $region18: #{vae_forward.11} parent=0 // pred_check
    _
  $region19: #{vae_forward.11} parent=0 // pred_check_branch
    %2023 = sbr.rel (0) target = $region21
  $region20: #{vae_forward.11} parent=0 // pred_region
    _
  $region21: #{vae_forward.11} parent=0 // pred_fallthru
    _

// kernel: vae_forward.12
$region0: #{vae_forward.12}
  #allocation0 [shape = 'u32[]', space=smem, size = 0x4, offset = 0x4, fixed_abs, tag = 'smem constant byte address 0x4 - core index']
  #allocation1 [shape = 'u32[144,128]{1,0:T(1,128)}', space=vmem, size = 0x12000, scoped, tag = 'internal scratch']
  %s0 = inlined_call_operand.vmem [shape: bf16[2,128], index: 0, kind: input, shape index: {}]
  %s1 = inlined_call_operand.vmem [shape: bf16[128,2048], index: 1, kind: input, shape index: {}]
  %s2 = inlined_call_operand.vmem [shape: f32[1,2048], index: 2, kind: input, shape index: {}]
  %s3 = inlined_call_operand.vmem [shape: bf16[2,2048], index: 3, kind: output, shape index: {}]
  %s4 = sld [smem:[#allocation0]]
  $region22: #{vae_forward.12} parent=0
    _
  %s6 = ssub.s32 1, %s4
  %s7 = scalar_select 0, %s6, %s4
  // Predicated region
  $region2: #{vae_forward.12} parent=0 // pred_check
    _
  $region3: #{vae_forward.12} parent=0 // pred_check_branch
    %9 = sbr.rel (0) target = $region5
  $region4: #{vae_forward.12} parent=0 // pred_region
    _
  $region5: #{vae_forward.12} parent=0 // pred_fallthru
    _
  // Predicated region
  $region6: #{vae_forward.12} parent=0 // pred_check
    _
  $region7: #{vae_forward.12} parent=0 // pred_check_branch
    %11 = sbr.rel (0) target = $region9
  $region8: #{vae_forward.12} parent=0 // pred_region
    _
  $region9: #{vae_forward.12} parent=0 // pred_fallthru
    _
  // Predicated region
  $region10: #{vae_forward.12} parent=0 // pred_check
    _
  $region11: #{vae_forward.12} parent=0 // pred_check_branch
    %13 = sbr.rel (0) target = $region13
  $region12: #{vae_forward.12} parent=0 // pred_region
    _
  $region13: #{vae_forward.12} parent=0 // pred_fallthru
    _
  %v15 = vld [vmem:[%s0] sm:$0x1]
  %v16 = vld [vmem:[%s1] sm:$0xff]
  %v17 = vld [vmem:[%s1 + $0x8] sm:$0xff]
  %v18 = vld [vmem:[%s1 + $0x10] sm:$0xff]
  %v19 = vld [vmem:[%s1 + $0x18] sm:$0xff]
  %v20 = vld [vmem:[%s1 + $0x20] sm:$0xff]
  %v21 = vld [vmem:[%s1 + $0x28] sm:$0xff]
  %v22 = vld [vmem:[%s1 + $0x30] sm:$0xff]
  %v23 = vld [vmem:[%s1 + $0x38] sm:$0xff]
  %v24 = vld [vmem:[%s1 + $0x40] sm:$0xff]
  %v25 = vld [vmem:[%s1 + $0x48] sm:$0xff]
  %v26 = vld [vmem:[%s1 + $0x50] sm:$0xff]
  %v27 = vld [vmem:[%s1 + $0x58] sm:$0xff]
  %v28 = vld [vmem:[%s1 + $0x60] sm:$0xff]
  %v29 = vld [vmem:[%s1 + $0x68] sm:$0xff]
  %v30 = vld [vmem:[%s1 + $0x70] sm:$0xff]
  %v31 = vld [vmem:[%s1 + $0x78] sm:$0xff]
  %v32 = vld [vmem:[%s1 + $0x80] sm:$0xff]
  %v33 = vld [vmem:[%s1 + $0x88] sm:$0xff]
  %v34 = vld [vmem:[%s1 + $0x90] sm:$0xff]
  %v35 = vld [vmem:[%s1 + $0x98] sm:$0xff]
  %v36 = vld [vmem:[%s1 + $0xa0] sm:$0xff]
  %v37 = vld [vmem:[%s1 + $0xa8] sm:$0xff]
  %v38 = vld [vmem:[%s1 + $0xb0] sm:$0xff]
  %v39 = vld [vmem:[%s1 + $0xb8] sm:$0xff]
  %v40 = vld [vmem:[%s1 + $0xc0] sm:$0xff]
  %v41 = vld [vmem:[%s1 + $0xc8] sm:$0xff]
  %v42 = vld [vmem:[%s1 + $0xd0] sm:$0xff]
  %v43 = vld [vmem:[%s1 + $0xd8] sm:$0xff]
  %v44 = vld [vmem:[%s1 + $0xe0] sm:$0xff]
  %v45 = vld [vmem:[%s1 + $0xe8] sm:$0xff]
  %v46 = vld [vmem:[%s1 + $0xf0] sm:$0xff]
  %v47 = vld [vmem:[%s1 + $0xf8] sm:$0xff]
  %v48 = vld [vmem:[%s1 + $0x100] sm:$0xff]
  %v49 = vld [vmem:[%s1 + $0x108] sm:$0xff]
  %v50 = vld [vmem:[%s1 + $0x110] sm:$0xff]
  %v51 = vld [vmem:[%s1 + $0x118] sm:$0xff]
  %v52 = vld [vmem:[%s1 + $0x120] sm:$0xff]
  %v53 = vld [vmem:[%s1 + $0x128] sm:$0xff]
  %v54 = vld [vmem:[%s1 + $0x130] sm:$0xff]
  %v55 = vld [vmem:[%s1 + $0x138] sm:$0xff]
  %v56 = vld [vmem:[%s1 + $0x140] sm:$0xff]
  %v57 = vld [vmem:[%s1 + $0x148] sm:$0xff]
  %v58 = vld [vmem:[%s1 + $0x150] sm:$0xff]
  %v59 = vld [vmem:[%s1 + $0x158] sm:$0xff]
  %v60 = vld [vmem:[%s1 + $0x160] sm:$0xff]
  %v61 = vld [vmem:[%s1 + $0x168] sm:$0xff]
  %v62 = vld [vmem:[%s1 + $0x170] sm:$0xff]
  %v63 = vld [vmem:[%s1 + $0x178] sm:$0xff]
  %v64 = vld [vmem:[%s1 + $0x180] sm:$0xff]
  %v65 = vld [vmem:[%s1 + $0x188] sm:$0xff]
  %v66 = vld [vmem:[%s1 + $0x190] sm:$0xff]
  %v67 = vld [vmem:[%s1 + $0x198] sm:$0xff]
  %v68 = vld [vmem:[%s1 + $0x1a0] sm:$0xff]
  %v69 = vld [vmem:[%s1 + $0x1a8] sm:$0xff]
  %v70 = vld [vmem:[%s1 + $0x1b0] sm:$0xff]
  %v71 = vld [vmem:[%s1 + $0x1b8] sm:$0xff]
  %v72 = vld [vmem:[%s1 + $0x1c0] sm:$0xff]
  %v73 = vld [vmem:[%s1 + $0x1c8] sm:$0xff]
  %v74 = vld [vmem:[%s1 + $0x1d0] sm:$0xff]
  %v75 = vld [vmem:[%s1 + $0x1d8] sm:$0xff]
  %v76 = vld [vmem:[%s1 + $0x1e0] sm:$0xff]
  %v77 = vld [vmem:[%s1 + $0x1e8] sm:$0xff]
  %v78 = vld [vmem:[%s1 + $0x1f0] sm:$0xff]
  %v79 = vld [vmem:[%s1 + $0x1f8] sm:$0xff]
  %v80 = vld [vmem:[%s1 + $0x200] sm:$0xff]
  %v81 = vld [vmem:[%s1 + $0x208] sm:$0xff]
  %v82 = vld [vmem:[%s1 + $0x210] sm:$0xff]
  %v83 = vld [vmem:[%s1 + $0x218] sm:$0xff]
  %v84 = vld [vmem:[%s1 + $0x220] sm:$0xff]
  %v85 = vld [vmem:[%s1 + $0x228] sm:$0xff]
  %v86 = vld [vmem:[%s1 + $0x230] sm:$0xff]
  %v87 = vld [vmem:[%s1 + $0x238] sm:$0xff]
  %v88 = vld [vmem:[%s1 + $0x240] sm:$0xff]
  %v89 = vld [vmem:[%s1 + $0x248] sm:$0xff]
  %v90 = vld [vmem:[%s1 + $0x250] sm:$0xff]
  %v91 = vld [vmem:[%s1 + $0x258] sm:$0xff]
  %v92 = vld [vmem:[%s1 + $0x260] sm:$0xff]
  %v93 = vld [vmem:[%s1 + $0x268] sm:$0xff]
  %v94 = vld [vmem:[%s1 + $0x270] sm:$0xff]
  %v95 = vld [vmem:[%s1 + $0x278] sm:$0xff]
  %v96 = vld [vmem:[%s1 + $0x280] sm:$0xff]
  %v97 = vld [vmem:[%s1 + $0x288] sm:$0xff]
  %v98 = vld [vmem:[%s1 + $0x290] sm:$0xff]
  %v99 = vld [vmem:[%s1 + $0x298] sm:$0xff]
  %v100 = vld [vmem:[%s1 + $0x2a0] sm:$0xff]
  %v101 = vld [vmem:[%s1 + $0x2a8] sm:$0xff]
  %v102 = vld [vmem:[%s1 + $0x2b0] sm:$0xff]
  %v103 = vld [vmem:[%s1 + $0x2b8] sm:$0xff]
  %v104 = vld [vmem:[%s1 + $0x2c0] sm:$0xff]
  %v105 = vld [vmem:[%s1 + $0x2c8] sm:$0xff]
  %v106 = vld [vmem:[%s1 + $0x2d0] sm:$0xff]
  %v107 = vld [vmem:[%s1 + $0x2d8] sm:$0xff]
  %v108 = vld [vmem:[%s1 + $0x2e0] sm:$0xff]
  %v109 = vld [vmem:[%s1 + $0x2e8] sm:$0xff]
  %v110 = vld [vmem:[%s1 + $0x2f0] sm:$0xff]
  %v111 = vld [vmem:[%s1 + $0x2f8] sm:$0xff]
  %v112 = vld [vmem:[%s1 + $0x300] sm:$0xff]
  %v113 = vld [vmem:[%s1 + $0x308] sm:$0xff]
  %v114 = vld [vmem:[%s1 + $0x310] sm:$0xff]
  %v115 = vld [vmem:[%s1 + $0x318] sm:$0xff]
  %v116 = vld [vmem:[%s1 + $0x320] sm:$0xff]
  %v117 = vld [vmem:[%s1 + $0x328] sm:$0xff]
  %v118 = vld [vmem:[%s1 + $0x330] sm:$0xff]
  %v119 = vld [vmem:[%s1 + $0x338] sm:$0xff]
  %v120 = vld [vmem:[%s1 + $0x340] sm:$0xff]
  %v121 = vld [vmem:[%s1 + $0x348] sm:$0xff]
  %v122 = vld [vmem:[%s1 + $0x350] sm:$0xff]
  %v123 = vld [vmem:[%s1 + $0x358] sm:$0xff]
  %v124 = vld [vmem:[%s1 + $0x360] sm:$0xff]
  %v125 = vld [vmem:[%s1 + $0x368] sm:$0xff]
  %v126 = vld [vmem:[%s1 + $0x370] sm:$0xff]
  %v127 = vld [vmem:[%s1 + $0x378] sm:$0xff]
  %v128 = vld [vmem:[%s1 + $0x380] sm:$0xff]
  %v129 = vld [vmem:[%s1 + $0x388] sm:$0xff]
  %v130 = vld [vmem:[%s1 + $0x390] sm:$0xff]
  %v131 = vld [vmem:[%s1 + $0x398] sm:$0xff]
  %v132 = vld [vmem:[%s1 + $0x3a0] sm:$0xff]
  %v133 = vld [vmem:[%s1 + $0x3a8] sm:$0xff]
  %v134 = vld [vmem:[%s1 + $0x3b0] sm:$0xff]
  %v135 = vld [vmem:[%s1 + $0x3b8] sm:$0xff]
  %v136 = vld [vmem:[%s1 + $0x3c0] sm:$0xff]
  %v137 = vld [vmem:[%s1 + $0x3c8] sm:$0xff]
  %v138 = vld [vmem:[%s1 + $0x3d0] sm:$0xff]
  %v139 = vld [vmem:[%s1 + $0x3d8] sm:$0xff]
  %v140 = vld [vmem:[%s1 + $0x3e0] sm:$0xff]
  %v141 = vld [vmem:[%s1 + $0x3e8] sm:$0xff]
  %v142 = vld [vmem:[%s1 + $0x3f0] sm:$0xff]
  %v143 = vld [vmem:[%s1 + $0x3f8] sm:$0xff]
  %v144 = vld [vmem:[%s2] sm:$0xff]
  %v145 = vld [vmem:[%s2 + $0x8] sm:$0xff]
  %v148 = vlaneseq
  %v149 = vshrl.u32 %v148, 7
  %v150 = vsub.s32 0, %v149
  %v151 = vrot.slane %v144, %v150
  %v152 = vlaneseq
  %v153 = vshrl.u32 %v152, 7
  %v154 = vsub.s32 1, %v153
  %v155 = vrot.slane %v144, %v154
  %v156 = vlaneseq
  %v157 = vshrl.u32 %v156, 7
  %v158 = vsub.s32 2, %v157
  %v159 = vrot.slane %v144, %v158
  %v160 = vlaneseq
  %v161 = vshrl.u32 %v160, 7
  %v162 = vsub.s32 3, %v161
  %v163 = vrot.slane %v144, %v162
  %v164 = vlaneseq
  %v165 = vshrl.u32 %v164, 7
  %v166 = vsub.s32 4, %v165
  %v167 = vrot.slane %v144, %v166
  %v168 = vlaneseq
  %v169 = vshrl.u32 %v168, 7
  %v170 = vsub.s32 5, %v169
  %v171 = vrot.slane %v144, %v170
  %v172 = vlaneseq
  %v173 = vshrl.u32 %v172, 7
  %v174 = vsub.s32 6, %v173
  %v175 = vrot.slane %v144, %v174
  %v176 = vlaneseq
  %v177 = vshrl.u32 %v176, 7
  %v178 = vsub.s32 7, %v177
  %v179 = vrot.slane %v144, %v178
  %v180 = vlaneseq
  %v181 = vshrl.u32 %v180, 7
  %v182 = vsub.s32 0, %v181
  %v183 = vrot.slane %v145, %v182
  %v184 = vlaneseq
  %v185 = vshrl.u32 %v184, 7
  %v186 = vsub.s32 1, %v185
  %v187 = vrot.slane %v145, %v186
  %v188 = vlaneseq
  %v189 = vshrl.u32 %v188, 7
  %v190 = vsub.s32 2, %v189
  %v191 = vrot.slane %v145, %v190
  %v192 = vlaneseq
  %v193 = vshrl.u32 %v192, 7
  %v194 = vsub.s32 3, %v193
  %v195 = vrot.slane %v145, %v194
  %v196 = vlaneseq
  %v197 = vshrl.u32 %v196, 7
  %v198 = vsub.s32 4, %v197
  %v199 = vrot.slane %v145, %v198
  %v200 = vlaneseq
  %v201 = vshrl.u32 %v200, 7
  %v202 = vsub.s32 5, %v201
  %v203 = vrot.slane %v145, %v202
  %v204 = vlaneseq
  %v205 = vshrl.u32 %v204, 7
  %v206 = vsub.s32 6, %v205
  %v207 = vrot.slane %v145, %v206
  %v208 = vlaneseq
  %v209 = vshrl.u32 %v208, 7
  %v210 = vsub.s32 7, %v209
  %v211 = vrot.slane %v145, %v210
  %v356 = vunpack.c.l.b16 %v16
  %v357 = vunpack.c.h.b16 %v16
  %v358 = vunpack.c.l.b16 %v17
  %v359 = vunpack.c.h.b16 %v17
  %v360 = vunpack.c.l.b16 %v18
  %v361 = vunpack.c.h.b16 %v18
  %v362 = vunpack.c.l.b16 %v19
  %v363 = vunpack.c.h.b16 %v19
  %v364 = vunpack.c.l.b16 %v20
  %v365 = vunpack.c.h.b16 %v20
  %v366 = vunpack.c.l.b16 %v21
  %v367 = vunpack.c.h.b16 %v21
  %v368 = vunpack.c.l.b16 %v22
  %v369 = vunpack.c.h.b16 %v22
  %v370 = vunpack.c.l.b16 %v23
  %v371 = vunpack.c.h.b16 %v23
  %v372 = vunpack.c.l.b16 %v24
  %v373 = vunpack.c.h.b16 %v24
  %v374 = vunpack.c.l.b16 %v25
  %v375 = vunpack.c.h.b16 %v25
  %v376 = vunpack.c.l.b16 %v26
  %v377 = vunpack.c.h.b16 %v26
  %v378 = vunpack.c.l.b16 %v27
  %v379 = vunpack.c.h.b16 %v27
  %v380 = vunpack.c.l.b16 %v28
  %v381 = vunpack.c.h.b16 %v28
  %v382 = vunpack.c.l.b16 %v29
  %v383 = vunpack.c.h.b16 %v29
  %v384 = vunpack.c.l.b16 %v30
  %v385 = vunpack.c.h.b16 %v30
  %v386 = vunpack.c.l.b16 %v31
  %v387 = vunpack.c.h.b16 %v31
  %v388 = vunpack.c.l.b16 %v32
  %v389 = vunpack.c.h.b16 %v32
  %v390 = vunpack.c.l.b16 %v33
  %v391 = vunpack.c.h.b16 %v33
  %v392 = vunpack.c.l.b16 %v34
  %v393 = vunpack.c.h.b16 %v34
  %v394 = vunpack.c.l.b16 %v35
  %v395 = vunpack.c.h.b16 %v35
  %v396 = vunpack.c.l.b16 %v36
  %v397 = vunpack.c.h.b16 %v36
  %v398 = vunpack.c.l.b16 %v37
  %v399 = vunpack.c.h.b16 %v37
  %v400 = vunpack.c.l.b16 %v38
  %v401 = vunpack.c.h.b16 %v38
  %v402 = vunpack.c.l.b16 %v39
  %v403 = vunpack.c.h.b16 %v39
  %v404 = vunpack.c.l.b16 %v40
  %v405 = vunpack.c.h.b16 %v40
  %v406 = vunpack.c.l.b16 %v41
  %v407 = vunpack.c.h.b16 %v41
  %v408 = vunpack.c.l.b16 %v42
  %v409 = vunpack.c.h.b16 %v42
  %v410 = vunpack.c.l.b16 %v43
  %v411 = vunpack.c.h.b16 %v43
  %v412 = vunpack.c.l.b16 %v44
  %v413 = vunpack.c.h.b16 %v44
  %v414 = vunpack.c.l.b16 %v45
  %v415 = vunpack.c.h.b16 %v45
  %v416 = vunpack.c.l.b16 %v46
  %v417 = vunpack.c.h.b16 %v46
  %v418 = vunpack.c.l.b16 %v47
  %v419 = vunpack.c.h.b16 %v47
  %v420 = vunpack.c.l.b16 %v48
  %v421 = vunpack.c.h.b16 %v48
  %v422 = vunpack.c.l.b16 %v49
  %v423 = vunpack.c.h.b16 %v49
  %v424 = vunpack.c.l.b16 %v50
  %v425 = vunpack.c.h.b16 %v50
  %v426 = vunpack.c.l.b16 %v51
  %v427 = vunpack.c.h.b16 %v51
  %v428 = vunpack.c.l.b16 %v52
  %v429 = vunpack.c.h.b16 %v52
  %v430 = vunpack.c.l.b16 %v53
  %v431 = vunpack.c.h.b16 %v53
  %v432 = vunpack.c.l.b16 %v54
  %v433 = vunpack.c.h.b16 %v54
  %v434 = vunpack.c.l.b16 %v55
  %v435 = vunpack.c.h.b16 %v55
  %v436 = vunpack.c.l.b16 %v56
  %v437 = vunpack.c.h.b16 %v56
  %v438 = vunpack.c.l.b16 %v57
  %v439 = vunpack.c.h.b16 %v57
  %v440 = vunpack.c.l.b16 %v58
  %v441 = vunpack.c.h.b16 %v58
  %v442 = vunpack.c.l.b16 %v59
  %v443 = vunpack.c.h.b16 %v59
  %v444 = vunpack.c.l.b16 %v60
  %v445 = vunpack.c.h.b16 %v60
  %v446 = vunpack.c.l.b16 %v61
  %v447 = vunpack.c.h.b16 %v61
  %v448 = vunpack.c.l.b16 %v62
  %v449 = vunpack.c.h.b16 %v62
  %v450 = vunpack.c.l.b16 %v63
  %v451 = vunpack.c.h.b16 %v63
  %v452 = vunpack.c.l.b16 %v64
  %v453 = vunpack.c.h.b16 %v64
  %v454 = vunpack.c.l.b16 %v65
  %v455 = vunpack.c.h.b16 %v65
  %v456 = vunpack.c.l.b16 %v66
  %v457 = vunpack.c.h.b16 %v66
  %v458 = vunpack.c.l.b16 %v67
  %v459 = vunpack.c.h.b16 %v67
  %v460 = vunpack.c.l.b16 %v68
  %v461 = vunpack.c.h.b16 %v68
  %v462 = vunpack.c.l.b16 %v69
  %v463 = vunpack.c.h.b16 %v69
  %v464 = vunpack.c.l.b16 %v70
  %v465 = vunpack.c.h.b16 %v70
  %v466 = vunpack.c.l.b16 %v71
  %v467 = vunpack.c.h.b16 %v71
  %v468 = vunpack.c.l.b16 %v72
  %v469 = vunpack.c.h.b16 %v72
  %v470 = vunpack.c.l.b16 %v73
  %v471 = vunpack.c.h.b16 %v73
  %v472 = vunpack.c.l.b16 %v74
  %v473 = vunpack.c.h.b16 %v74
  %v474 = vunpack.c.l.b16 %v75
  %v475 = vunpack.c.h.b16 %v75
  %v476 = vunpack.c.l.b16 %v76
  %v477 = vunpack.c.h.b16 %v76
  %v478 = vunpack.c.l.b16 %v77
  %v479 = vunpack.c.h.b16 %v77
  %v480 = vunpack.c.l.b16 %v78
  %v481 = vunpack.c.h.b16 %v78
  %v482 = vunpack.c.l.b16 %v79
  %v483 = vunpack.c.h.b16 %v79
  %v484 = vunpack.c.l.b16 %v80
  %v485 = vunpack.c.h.b16 %v80
  %v486 = vunpack.c.l.b16 %v81
  %v487 = vunpack.c.h.b16 %v81
  %v488 = vunpack.c.l.b16 %v82
  %v489 = vunpack.c.h.b16 %v82
  %v490 = vunpack.c.l.b16 %v83
  %v491 = vunpack.c.h.b16 %v83
  %v492 = vunpack.c.l.b16 %v84
  %v493 = vunpack.c.h.b16 %v84
  %v494 = vunpack.c.l.b16 %v85
  %v495 = vunpack.c.h.b16 %v85
  %v496 = vunpack.c.l.b16 %v86
  %v497 = vunpack.c.h.b16 %v86
  %v498 = vunpack.c.l.b16 %v87
  %v499 = vunpack.c.h.b16 %v87
  %v500 = vunpack.c.l.b16 %v88
  %v501 = vunpack.c.h.b16 %v88
  %v502 = vunpack.c.l.b16 %v89
  %v503 = vunpack.c.h.b16 %v89
  %v504 = vunpack.c.l.b16 %v90
  %v505 = vunpack.c.h.b16 %v90
  %v506 = vunpack.c.l.b16 %v91
  %v507 = vunpack.c.h.b16 %v91
  %v508 = vunpack.c.l.b16 %v92
  %v509 = vunpack.c.h.b16 %v92
  %v510 = vunpack.c.l.b16 %v93
  %v511 = vunpack.c.h.b16 %v93
  %v512 = vunpack.c.l.b16 %v94
  %v513 = vunpack.c.h.b16 %v94
  %v514 = vunpack.c.l.b16 %v95
  %v515 = vunpack.c.h.b16 %v95
  %v516 = vunpack.c.l.b16 %v96
  %v517 = vunpack.c.h.b16 %v96
  %v518 = vunpack.c.l.b16 %v97
  %v519 = vunpack.c.h.b16 %v97
  %v520 = vunpack.c.l.b16 %v98
  %v521 = vunpack.c.h.b16 %v98
  %v522 = vunpack.c.l.b16 %v99
  %v523 = vunpack.c.h.b16 %v99
  %v524 = vunpack.c.l.b16 %v100
  %v525 = vunpack.c.h.b16 %v100
  %v526 = vunpack.c.l.b16 %v101
  %v527 = vunpack.c.h.b16 %v101
  %v528 = vunpack.c.l.b16 %v102
  %v529 = vunpack.c.h.b16 %v102
  %v530 = vunpack.c.l.b16 %v103
  %v531 = vunpack.c.h.b16 %v103
  %v532 = vunpack.c.l.b16 %v104
  %v533 = vunpack.c.h.b16 %v104
  %v534 = vunpack.c.l.b16 %v105
  %v535 = vunpack.c.h.b16 %v105
  %v536 = vunpack.c.l.b16 %v106
  %v537 = vunpack.c.h.b16 %v106
  %v538 = vunpack.c.l.b16 %v107
  %v539 = vunpack.c.h.b16 %v107
  %v540 = vunpack.c.l.b16 %v108
  %v541 = vunpack.c.h.b16 %v108
  %v542 = vunpack.c.l.b16 %v109
  %v543 = vunpack.c.h.b16 %v109
  %v544 = vunpack.c.l.b16 %v110
  %v545 = vunpack.c.h.b16 %v110
  %v546 = vunpack.c.l.b16 %v111
  %v547 = vunpack.c.h.b16 %v111
  %v548 = vunpack.c.l.b16 %v112
  %v549 = vunpack.c.h.b16 %v112
  %v550 = vunpack.c.l.b16 %v113
  %v551 = vunpack.c.h.b16 %v113
  %v552 = vunpack.c.l.b16 %v114
  %v553 = vunpack.c.h.b16 %v114
  %v554 = vunpack.c.l.b16 %v115
  %v555 = vunpack.c.h.b16 %v115
  %v556 = vunpack.c.l.b16 %v116
  %v557 = vunpack.c.h.b16 %v116
  %v558 = vunpack.c.l.b16 %v117
  %v559 = vunpack.c.h.b16 %v117
  %v560 = vunpack.c.l.b16 %v118
  %v561 = vunpack.c.h.b16 %v118
  %v562 = vunpack.c.l.b16 %v119
  %v563 = vunpack.c.h.b16 %v119
  %v564 = vunpack.c.l.b16 %v120
  %v565 = vunpack.c.h.b16 %v120
  %v566 = vunpack.c.l.b16 %v121
  %v567 = vunpack.c.h.b16 %v121
  %v568 = vunpack.c.l.b16 %v122
  %v569 = vunpack.c.h.b16 %v122
  %v570 = vunpack.c.l.b16 %v123
  %v571 = vunpack.c.h.b16 %v123
  %v572 = vunpack.c.l.b16 %v124
  %v573 = vunpack.c.h.b16 %v124
  %v574 = vunpack.c.l.b16 %v125
  %v575 = vunpack.c.h.b16 %v125
  %v576 = vunpack.c.l.b16 %v126
  %v577 = vunpack.c.h.b16 %v126
  %v578 = vunpack.c.l.b16 %v127
  %v579 = vunpack.c.h.b16 %v127
  %v580 = vunpack.c.l.b16 %v128
  %v581 = vunpack.c.h.b16 %v128
  %v582 = vunpack.c.l.b16 %v129
  %v583 = vunpack.c.h.b16 %v129
  %v584 = vunpack.c.l.b16 %v130
  %v585 = vunpack.c.h.b16 %v130
  %v586 = vunpack.c.l.b16 %v131
  %v587 = vunpack.c.h.b16 %v131
  %v588 = vunpack.c.l.b16 %v132
  %v589 = vunpack.c.h.b16 %v132
  %v590 = vunpack.c.l.b16 %v133
  %v591 = vunpack.c.h.b16 %v133
  %v592 = vunpack.c.l.b16 %v134
  %v593 = vunpack.c.h.b16 %v134
  %v594 = vunpack.c.l.b16 %v135
  %v595 = vunpack.c.h.b16 %v135
  %v596 = vunpack.c.l.b16 %v136
  %v597 = vunpack.c.h.b16 %v136
  %v598 = vunpack.c.l.b16 %v137
  %v599 = vunpack.c.h.b16 %v137
  %v600 = vunpack.c.l.b16 %v138
  %v601 = vunpack.c.h.b16 %v138
  %v602 = vunpack.c.l.b16 %v139
  %v603 = vunpack.c.h.b16 %v139
  %v604 = vunpack.c.l.b16 %v140
  %v605 = vunpack.c.h.b16 %v140
  %v606 = vunpack.c.l.b16 %v141
  %v607 = vunpack.c.h.b16 %v141
  %v608 = vunpack.c.l.b16 %v142
  %v609 = vunpack.c.h.b16 %v142
  %v610 = vunpack.c.l.b16 %v143
  %v611 = vunpack.c.h.b16 %v143
  %v612 = vpack.c.b16 %v372, %v356
  %v613 = vpack.c.b16 %v373, %v357
  %v614 = vpack.c.b16 %v374, %v358
  %v615 = vpack.c.b16 %v375, %v359
  %v616 = vpack.c.b16 %v376, %v360
  %v617 = vpack.c.b16 %v377, %v361
  %v618 = vpack.c.b16 %v378, %v362
  %v619 = vpack.c.b16 %v379, %v363
  %v620 = vpack.c.b16 %v380, %v364
  %v621 = vpack.c.b16 %v381, %v365
  %v622 = vpack.c.b16 %v382, %v366
  %v623 = vpack.c.b16 %v383, %v367
  %v624 = vpack.c.b16 %v384, %v368
  %v625 = vpack.c.b16 %v385, %v369
  %v626 = vpack.c.b16 %v386, %v370
  %v627 = vpack.c.b16 %v387, %v371
  %v628 = vpack.c.b16 %v404, %v388
  %v629 = vpack.c.b16 %v405, %v389
  %v630 = vpack.c.b16 %v406, %v390
  %v631 = vpack.c.b16 %v407, %v391
  %v632 = vpack.c.b16 %v408, %v392
  %v633 = vpack.c.b16 %v409, %v393
  %v634 = vpack.c.b16 %v410, %v394
  %v635 = vpack.c.b16 %v411, %v395
  %v636 = vpack.c.b16 %v412, %v396
  %v637 = vpack.c.b16 %v413, %v397
  %v638 = vpack.c.b16 %v414, %v398
  %v639 = vpack.c.b16 %v415, %v399
  %v640 = vpack.c.b16 %v416, %v400
  %v641 = vpack.c.b16 %v417, %v401
  %v642 = vpack.c.b16 %v418, %v402
  %v643 = vpack.c.b16 %v419, %v403
  %v644 = vpack.c.b16 %v436, %v420
  %v645 = vpack.c.b16 %v437, %v421
  %v646 = vpack.c.b16 %v438, %v422
  %v647 = vpack.c.b16 %v439, %v423
  %v648 = vpack.c.b16 %v440, %v424
  %v649 = vpack.c.b16 %v441, %v425
  %v650 = vpack.c.b16 %v442, %v426
  %v651 = vpack.c.b16 %v443, %v427
  %v652 = vpack.c.b16 %v444, %v428
  %v653 = vpack.c.b16 %v445, %v429
  %v654 = vpack.c.b16 %v446, %v430
  %v655 = vpack.c.b16 %v447, %v431
  %v656 = vpack.c.b16 %v448, %v432
  %v657 = vpack.c.b16 %v449, %v433
  %v658 = vpack.c.b16 %v450, %v434
  %v659 = vpack.c.b16 %v451, %v435
  %v660 = vpack.c.b16 %v468, %v452
  %v661 = vpack.c.b16 %v469, %v453
  %v662 = vpack.c.b16 %v470, %v454
  %v663 = vpack.c.b16 %v471, %v455
  %v664 = vpack.c.b16 %v472, %v456
  %v665 = vpack.c.b16 %v473, %v457
  %v666 = vpack.c.b16 %v474, %v458
  %v667 = vpack.c.b16 %v475, %v459
  %v668 = vpack.c.b16 %v476, %v460
  %v669 = vpack.c.b16 %v477, %v461
  %v670 = vpack.c.b16 %v478, %v462
  %v671 = vpack.c.b16 %v479, %v463
  %v672 = vpack.c.b16 %v480, %v464
  %v673 = vpack.c.b16 %v481, %v465
  %v674 = vpack.c.b16 %v482, %v466
  %v675 = vpack.c.b16 %v483, %v467
  %v676 = vpack.c.b16 %v500, %v484
  %v677 = vpack.c.b16 %v501, %v485
  %v678 = vpack.c.b16 %v502, %v486
  %v679 = vpack.c.b16 %v503, %v487
  %v680 = vpack.c.b16 %v504, %v488
  %v681 = vpack.c.b16 %v505, %v489
  %v682 = vpack.c.b16 %v506, %v490
  %v683 = vpack.c.b16 %v507, %v491
  %v684 = vpack.c.b16 %v508, %v492
  %v685 = vpack.c.b16 %v509, %v493
  %v686 = vpack.c.b16 %v510, %v494
  %v687 = vpack.c.b16 %v511, %v495
  %v688 = vpack.c.b16 %v512, %v496
  %v689 = vpack.c.b16 %v513, %v497
  %v690 = vpack.c.b16 %v514, %v498
  %v691 = vpack.c.b16 %v515, %v499
  %v692 = vpack.c.b16 %v532, %v516
  %v693 = vpack.c.b16 %v533, %v517
  %v694 = vpack.c.b16 %v534, %v518
  %v695 = vpack.c.b16 %v535, %v519
  %v696 = vpack.c.b16 %v536, %v520
  %v697 = vpack.c.b16 %v537, %v521
  %v698 = vpack.c.b16 %v538, %v522
  %v699 = vpack.c.b16 %v539, %v523
  %v700 = vpack.c.b16 %v540, %v524
  %v701 = vpack.c.b16 %v541, %v525
  %v702 = vpack.c.b16 %v542, %v526
  %v703 = vpack.c.b16 %v543, %v527
  %v704 = vpack.c.b16 %v544, %v528
  %v705 = vpack.c.b16 %v545, %v529
  %v706 = vpack.c.b16 %v546, %v530
  %v707 = vpack.c.b16 %v547, %v531
  %v708 = vpack.c.b16 %v564, %v548
  %v709 = vpack.c.b16 %v565, %v549
  %v710 = vpack.c.b16 %v566, %v550
  %v711 = vpack.c.b16 %v567, %v551
  %v712 = vpack.c.b16 %v568, %v552
  %v713 = vpack.c.b16 %v569, %v553
  %v714 = vpack.c.b16 %v570, %v554
  %v715 = vpack.c.b16 %v571, %v555
  %v716 = vpack.c.b16 %v572, %v556
  %v717 = vpack.c.b16 %v573, %v557
  %v718 = vpack.c.b16 %v574, %v558
  %v719 = vpack.c.b16 %v575, %v559
  %v720 = vpack.c.b16 %v576, %v560
  %v721 = vpack.c.b16 %v577, %v561
  %v722 = vpack.c.b16 %v578, %v562
  %v723 = vpack.c.b16 %v579, %v563
  %v724 = vpack.c.b16 %v596, %v580
  %v725 = vpack.c.b16 %v597, %v581
  %v726 = vpack.c.b16 %v598, %v582
  %v727 = vpack.c.b16 %v599, %v583
  %v728 = vpack.c.b16 %v600, %v584
  %v729 = vpack.c.b16 %v601, %v585
  %v730 = vpack.c.b16 %v602, %v586
  %v731 = vpack.c.b16 %v603, %v587
  %v732 = vpack.c.b16 %v604, %v588
  %v733 = vpack.c.b16 %v605, %v589
  %v734 = vpack.c.b16 %v606, %v590
  %v735 = vpack.c.b16 %v607, %v591
  %v736 = vpack.c.b16 %v608, %v592
  %v737 = vpack.c.b16 %v609, %v593
  %v738 = vpack.c.b16 %v610, %v594
  %v739 = vpack.c.b16 %v611, %v595
  %868 = vmatprep.subr.bf16.mxu0 %v613
  %869 = vmatpush1.bf16.msra.mxu0 %v612
  %870 = vmatprep.subr.bf16.mxu0 %v629
  %871 = vmatpush1.bf16.msra.mxu0 %v628
  %872 = vmatprep.subr.bf16.mxu0 %v645
  %873 = vmatpush1.bf16.msra.mxu0 %v644
  %874 = vmatprep.subr.bf16.mxu0 %v661
  %875 = vmatpush1.bf16.msra.mxu0 %v660
  %876 = vmatprep.subr.bf16.mxu0 %v677
  %877 = vmatpush1.bf16.msra.mxu0 %v676
  %878 = vmatprep.subr.bf16.mxu0 %v693
  %879 = vmatpush1.bf16.msra.mxu0 %v692
  %880 = vmatprep.subr.bf16.mxu0 %v709
  %881 = vmatpush1.bf16.msra.mxu0 %v708
  %882 = vmatprep.subr.bf16.mxu0 %v725
  %883 = vmatpush1.bf16.msra.mxu0 %v724
  %884 = vmatprep.subr.bf16.mxu0 0
  %885 = vmatpush1.bf16.msra.mxu0 0
  %886 = vmatprep.subr.bf16.mxu0 0
  %887 = vmatpush1.bf16.msra.mxu0 0
  %888 = vmatprep.subr.bf16.mxu0 0
  %889 = vmatpush1.bf16.msra.mxu0 0
  %890 = vmatprep.subr.bf16.mxu0 0
  %891 = vmatpush1.bf16.msra.mxu0 0
  %892 = vmatprep.subr.bf16.mxu0 0
  %893 = vmatpush1.bf16.msra.mxu0 0
  %894 = vmatprep.subr.bf16.mxu0 0
  %895 = vmatpush1.bf16.msra.mxu0 0
  %896 = vmatprep.subr.bf16.mxu0 0
  %897 = vmatpush1.bf16.msra.mxu0 0
  %898 = vmatprep.subr.bf16.mxu0 0
  %899 = vmatpush1.bf16.msra.mxu0 0
  %900 = vmatprep.mubr.bf16.mxu0 0
  %901 = vmatmul.mubr.bf16.gmra.mrb[0].mxu0 %v15
  %v902 = vpop.f32.mrb[0].mxu0
  %v903 = vadd.f32 %v151, %v902
  %v904 = vpop.f32.mrb[0].mxu0
  %v905 = vadd.f32 %v155, %v904
  %v906 = vpop.f32.mrb[0].mxu0
  %v907 = vpop.f32.mrb[0].mxu0
  %908 = vdwg.mxu0
  %909 = vmatprep.subr.bf16.mxu0 %v615
  %910 = vmatpush1.bf16.msra.mxu0 %v614
  %911 = vmatprep.subr.bf16.mxu0 %v631
  %912 = vmatpush1.bf16.msra.mxu0 %v630
  %913 = vmatprep.subr.bf16.mxu0 %v647
  %914 = vmatpush1.bf16.msra.mxu0 %v646
  %915 = vmatprep.subr.bf16.mxu0 %v663
  %916 = vmatpush1.bf16.msra.mxu0 %v662
  %917 = vmatprep.subr.bf16.mxu0 %v679
  %918 = vmatpush1.bf16.msra.mxu0 %v678
  %919 = vmatprep.subr.bf16.mxu0 %v695
  %920 = vmatpush1.bf16.msra.mxu0 %v694
  %921 = vmatprep.subr.bf16.mxu0 %v711
  %922 = vmatpush1.bf16.msra.mxu0 %v710
  %923 = vmatprep.subr.bf16.mxu0 %v727
  %924 = vmatpush1.bf16.msra.mxu0 %v726
  %925 = vmatprep.subr.bf16.mxu0 0
  %926 = vmatpush1.bf16.msra.mxu0 0
  %927 = vmatprep.subr.bf16.mxu0 0
  %928 = vmatpush1.bf16.msra.mxu0 0
  %929 = vmatprep.subr.bf16.mxu0 0
  %930 = vmatpush1.bf16.msra.mxu0 0
  %931 = vmatprep.subr.bf16.mxu0 0
  %932 = vmatpush1.bf16.msra.mxu0 0
  %933 = vmatprep.subr.bf16.mxu0 0
  %934 = vmatpush1.bf16.msra.mxu0 0
  %935 = vmatprep.subr.bf16.mxu0 0
  %936 = vmatpush1.bf16.msra.mxu0 0
  %937 = vmatprep.subr.bf16.mxu0 0
  %938 = vmatpush1.bf16.msra.mxu0 0
  %939 = vmatprep.subr.bf16.mxu0 0
  %940 = vmatpush1.bf16.msra.mxu0 0
  %941 = vmatprep.mubr.bf16.mxu0 0
  %942 = vmatmul.mubr.bf16.gmra.mrb[0].mxu0 %v15
  %v943 = vpop.f32.mrb[0].mxu0
  %v944 = vadd.f32 %v159, %v943
  %v945 = vpop.f32.mrb[0].mxu0
  %v946 = vadd.f32 %v163, %v945
  %v947 = vpop.f32.mrb[0].mxu0
  %v948 = vpop.f32.mrb[0].mxu0
  %949 = vdwg.mxu0
  %950 = vmatprep.subr.bf16.mxu0 %v617
  %951 = vmatpush1.bf16.msra.mxu0 %v616
  %952 = vmatprep.subr.bf16.mxu0 %v633
  %953 = vmatpush1.bf16.msra.mxu0 %v632
  %954 = vmatprep.subr.bf16.mxu0 %v649
  %955 = vmatpush1.bf16.msra.mxu0 %v648
  %956 = vmatprep.subr.bf16.mxu0 %v665
  %957 = vmatpush1.bf16.msra.mxu0 %v664
  %958 = vmatprep.subr.bf16.mxu0 %v681
  %959 = vmatpush1.bf16.msra.mxu0 %v680
  %960 = vmatprep.subr.bf16.mxu0 %v697
  %961 = vmatpush1.bf16.msra.mxu0 %v696
  %962 = vmatprep.subr.bf16.mxu0 %v713
  %963 = vmatpush1.bf16.msra.mxu0 %v712
  %964 = vmatprep.subr.bf16.mxu0 %v729
  %965 = vmatpush1.bf16.msra.mxu0 %v728
  %966 = vmatprep.subr.bf16.mxu0 0
  %967 = vmatpush1.bf16.msra.mxu0 0
  %968 = vmatprep.subr.bf16.mxu0 0
  %969 = vmatpush1.bf16.msra.mxu0 0
  %970 = vmatprep.subr.bf16.mxu0 0
  %971 = vmatpush1.bf16.msra.mxu0 0
  %972 = vmatprep.subr.bf16.mxu0 0
  %973 = vmatpush1.bf16.msra.mxu0 0
  %974 = vmatprep.subr.bf16.mxu0 0
  %975 = vmatpush1.bf16.msra.mxu0 0
  %976 = vmatprep.subr.bf16.mxu0 0
  %977 = vmatpush1.bf16.msra.mxu0 0
  %978 = vmatprep.subr.bf16.mxu0 0
  %979 = vmatpush1.bf16.msra.mxu0 0
  %980 = vmatprep.subr.bf16.mxu0 0
  %981 = vmatpush1.bf16.msra.mxu0 0
  %982 = vmatprep.mubr.bf16.mxu0 0
  %983 = vmatmul.mubr.bf16.gmra.mrb[0].mxu0 %v15
  %v984 = vpop.f32.mrb[0].mxu0
  %v985 = vadd.f32 %v167, %v984
  %v986 = vpop.f32.mrb[0].mxu0
  %v987 = vadd.f32 %v171, %v986
  %v988 = vpop.f32.mrb[0].mxu0
  %v989 = vpop.f32.mrb[0].mxu0
  %990 = vdwg.mxu0
  %991 = vmatprep.subr.bf16.mxu0 %v619
  %992 = vmatpush1.bf16.msra.mxu0 %v618
  %993 = vmatprep.subr.bf16.mxu0 %v635
  %994 = vmatpush1.bf16.msra.mxu0 %v634
  %995 = vmatprep.subr.bf16.mxu0 %v651
  %996 = vmatpush1.bf16.msra.mxu0 %v650
  %997 = vmatprep.subr.bf16.mxu0 %v667
  %998 = vmatpush1.bf16.msra.mxu0 %v666
  %999 = vmatprep.subr.bf16.mxu0 %v683
  %1000 = vmatpush1.bf16.msra.mxu0 %v682
  %1001 = vmatprep.subr.bf16.mxu0 %v699
  %1002 = vmatpush1.bf16.msra.mxu0 %v698
  %1003 = vmatprep.subr.bf16.mxu0 %v715
  %1004 = vmatpush1.bf16.msra.mxu0 %v714
  %1005 = vmatprep.subr.bf16.mxu0 %v731
  %1006 = vmatpush1.bf16.msra.mxu0 %v730
  %1007 = vmatprep.subr.bf16.mxu0 0
  %1008 = vmatpush1.bf16.msra.mxu0 0
  %1009 = vmatprep.subr.bf16.mxu0 0
  %1010 = vmatpush1.bf16.msra.mxu0 0
  %1011 = vmatprep.subr.bf16.mxu0 0
  %1012 = vmatpush1.bf16.msra.mxu0 0
  %1013 = vmatprep.subr.bf16.mxu0 0
  %1014 = vmatpush1.bf16.msra.mxu0 0
  %1015 = vmatprep.subr.bf16.mxu0 0
  %1016 = vmatpush1.bf16.msra.mxu0 0
  %1017 = vmatprep.subr.bf16.mxu0 0
  %1018 = vmatpush1.bf16.msra.mxu0 0
  %1019 = vmatprep.subr.bf16.mxu0 0
  %1020 = vmatpush1.bf16.msra.mxu0 0
  %1021 = vmatprep.subr.bf16.mxu0 0
  %1022 = vmatpush1.bf16.msra.mxu0 0
  %1023 = vmatprep.mubr.bf16.mxu0 0
  %1024 = vmatmul.mubr.bf16.gmra.mrb[0].mxu0 %v15
  %v1025 = vpop.f32.mrb[0].mxu0
  %v1026 = vadd.f32 %v175, %v1025
  %v1027 = vpop.f32.mrb[0].mxu0
  %v1028 = vadd.f32 %v179, %v1027
  %v1029 = vpop.f32.mrb[0].mxu0
  %v1030 = vpop.f32.mrb[0].mxu0
  %1031 = vdwg.mxu0
  %1032 = vmatprep.subr.bf16.mxu0 %v621
  %1033 = vmatpush1.bf16.msra.mxu0 %v620
  %1034 = vmatprep.subr.bf16.mxu0 %v637
  %1035 = vmatpush1.bf16.msra.mxu0 %v636
  %1036 = vmatprep.subr.bf16.mxu0 %v653
  %1037 = vmatpush1.bf16.msra.mxu0 %v652
  %1038 = vmatprep.subr.bf16.mxu0 %v669
  %1039 = vmatpush1.bf16.msra.mxu0 %v668
  %1040 = vmatprep.subr.bf16.mxu0 %v685
  %1041 = vmatpush1.bf16.msra.mxu0 %v684
  %1042 = vmatprep.subr.bf16.mxu0 %v701
  %1043 = vmatpush1.bf16.msra.mxu0 %v700
  %1044 = vmatprep.subr.bf16.mxu0 %v717
  %1045 = vmatpush1.bf16.msra.mxu0 %v716
  %1046 = vmatprep.subr.bf16.mxu0 %v733
  %1047 = vmatpush1.bf16.msra.mxu0 %v732
  %1048 = vmatprep.subr.bf16.mxu0 0
  %1049 = vmatpush1.bf16.msra.mxu0 0
  %1050 = vmatprep.subr.bf16.mxu0 0
  %1051 = vmatpush1.bf16.msra.mxu0 0
  %1052 = vmatprep.subr.bf16.mxu0 0
  %1053 = vmatpush1.bf16.msra.mxu0 0
  %1054 = vmatprep.subr.bf16.mxu0 0
  %1055 = vmatpush1.bf16.msra.mxu0 0
  %1056 = vmatprep.subr.bf16.mxu0 0
  %1057 = vmatpush1.bf16.msra.mxu0 0
  %1058 = vmatprep.subr.bf16.mxu0 0
  %1059 = vmatpush1.bf16.msra.mxu0 0
  %1060 = vmatprep.subr.bf16.mxu0 0
  %1061 = vmatpush1.bf16.msra.mxu0 0
  %1062 = vmatprep.subr.bf16.mxu0 0
  %1063 = vmatpush1.bf16.msra.mxu0 0
  %1064 = vmatprep.mubr.bf16.mxu0 0
  %1065 = vmatmul.mubr.bf16.gmra.mrb[0].mxu0 %v15
  %v1066 = vpop.f32.mrb[0].mxu0
  %v1067 = vadd.f32 %v183, %v1066
  %v1068 = vpop.f32.mrb[0].mxu0
  %v1069 = vadd.f32 %v187, %v1068
  %v1070 = vpop.f32.mrb[0].mxu0
  %v1071 = vpop.f32.mrb[0].mxu0
  %1072 = vdwg.mxu0
  %1073 = vmatprep.subr.bf16.mxu0 %v623
  %1074 = vmatpush1.bf16.msra.mxu0 %v622
  %1075 = vmatprep.subr.bf16.mxu0 %v639
  %1076 = vmatpush1.bf16.msra.mxu0 %v638
  %1077 = vmatprep.subr.bf16.mxu0 %v655
  %1078 = vmatpush1.bf16.msra.mxu0 %v654
  %1079 = vmatprep.subr.bf16.mxu0 %v671
  %1080 = vmatpush1.bf16.msra.mxu0 %v670
  %1081 = vmatprep.subr.bf16.mxu0 %v687
  %1082 = vmatpush1.bf16.msra.mxu0 %v686
  %1083 = vmatprep.subr.bf16.mxu0 %v703
  %1084 = vmatpush1.bf16.msra.mxu0 %v702
  %1085 = vmatprep.subr.bf16.mxu0 %v719
  %1086 = vmatpush1.bf16.msra.mxu0 %v718
  %1087 = vmatprep.subr.bf16.mxu0 %v735
  %1088 = vmatpush1.bf16.msra.mxu0 %v734
  %1089 = vmatprep.subr.bf16.mxu0 0
  %1090 = vmatpush1.bf16.msra.mxu0 0
  %1091 = vmatprep.subr.bf16.mxu0 0
  %1092 = vmatpush1.bf16.msra.mxu0 0
  %1093 = vmatprep.subr.bf16.mxu0 0
  %1094 = vmatpush1.bf16.msra.mxu0 0
  %1095 = vmatprep.subr.bf16.mxu0 0
  %1096 = vmatpush1.bf16.msra.mxu0 0
  %1097 = vmatprep.subr.bf16.mxu0 0
  %1098 = vmatpush1.bf16.msra.mxu0 0
  %1099 = vmatprep.subr.bf16.mxu0 0
  %1100 = vmatpush1.bf16.msra.mxu0 0
  %1101 = vmatprep.subr.bf16.mxu0 0
  %1102 = vmatpush1.bf16.msra.mxu0 0
  %1103 = vmatprep.subr.bf16.mxu0 0
  %1104 = vmatpush1.bf16.msra.mxu0 0
  %1105 = vmatprep.mubr.bf16.mxu0 0
  %1106 = vmatmul.mubr.bf16.gmra.mrb[0].mxu0 %v15
  %v1107 = vpop.f32.mrb[0].mxu0
  %v1108 = vadd.f32 %v191, %v1107
  %v1109 = vpop.f32.mrb[0].mxu0
  %v1110 = vadd.f32 %v195, %v1109
  %v1111 = vpop.f32.mrb[0].mxu0
  %v1112 = vpop.f32.mrb[0].mxu0
  %1113 = vdwg.mxu0
  %1114 = vmatprep.subr.bf16.mxu0 %v625
  %1115 = vmatpush1.bf16.msra.mxu0 %v624
  %1116 = vmatprep.subr.bf16.mxu0 %v641
  %1117 = vmatpush1.bf16.msra.mxu0 %v640
  %1118 = vmatprep.subr.bf16.mxu0 %v657
  %1119 = vmatpush1.bf16.msra.mxu0 %v656
  %1120 = vmatprep.subr.bf16.mxu0 %v673
  %1121 = vmatpush1.bf16.msra.mxu0 %v672
  %1122 = vmatprep.subr.bf16.mxu0 %v689
  %1123 = vmatpush1.bf16.msra.mxu0 %v688
  %1124 = vmatprep.subr.bf16.mxu0 %v705
  %1125 = vmatpush1.bf16.msra.mxu0 %v704
  %1126 = vmatprep.subr.bf16.mxu0 %v721
  %1127 = vmatpush1.bf16.msra.mxu0 %v720
  %1128 = vmatprep.subr.bf16.mxu0 %v737
  %1129 = vmatpush1.bf16.msra.mxu0 %v736
  %1130 = vmatprep.subr.bf16.mxu0 0
  %1131 = vmatpush1.bf16.msra.mxu0 0
  %1132 = vmatprep.subr.bf16.mxu0 0
  %1133 = vmatpush1.bf16.msra.mxu0 0
  %1134 = vmatprep.subr.bf16.mxu0 0
  %1135 = vmatpush1.bf16.msra.mxu0 0
  %1136 = vmatprep.subr.bf16.mxu0 0
  %1137 = vmatpush1.bf16.msra.mxu0 0
  %1138 = vmatprep.subr.bf16.mxu0 0
  %1139 = vmatpush1.bf16.msra.mxu0 0
  %1140 = vmatprep.subr.bf16.mxu0 0
  %1141 = vmatpush1.bf16.msra.mxu0 0
  %1142 = vmatprep.subr.bf16.mxu0 0
  %1143 = vmatpush1.bf16.msra.mxu0 0
  %1144 = vmatprep.subr.bf16.mxu0 0
  %1145 = vmatpush1.bf16.msra.mxu0 0
  %1146 = vmatprep.mubr.bf16.mxu0 0
  %1147 = vmatmul.mubr.bf16.gmra.mrb[0].mxu0 %v15
  %v1148 = vpop.f32.mrb[0].mxu0
  %v1149 = vadd.f32 %v199, %v1148
  %v1150 = vpop.f32.mrb[0].mxu0
  %v1151 = vadd.f32 %v203, %v1150
  %v1152 = vpop.f32.mrb[0].mxu0
  %v1153 = vpop.f32.mrb[0].mxu0
  %1154 = vdwg.mxu0
  %1155 = vmatprep.subr.bf16.mxu0 %v627
  %1156 = vmatpush1.bf16.msra.mxu0 %v626
  %1157 = vmatprep.subr.bf16.mxu0 %v643
  %1158 = vmatpush1.bf16.msra.mxu0 %v642
  %1159 = vmatprep.subr.bf16.mxu0 %v659
  %1160 = vmatpush1.bf16.msra.mxu0 %v658
  %1161 = vmatprep.subr.bf16.mxu0 %v675
  %1162 = vmatpush1.bf16.msra.mxu0 %v674
  %1163 = vmatprep.subr.bf16.mxu0 %v691
  %1164 = vmatpush1.bf16.msra.mxu0 %v690
  %1165 = vmatprep.subr.bf16.mxu0 %v707
  %1166 = vmatpush1.bf16.msra.mxu0 %v706
  %1167 = vmatprep.subr.bf16.mxu0 %v723
  %1168 = vmatpush1.bf16.msra.mxu0 %v722
  %1169 = vmatprep.subr.bf16.mxu0 %v739
  %1170 = vmatpush1.bf16.msra.mxu0 %v738
  %1171 = vmatprep.subr.bf16.mxu0 0
  %1172 = vmatpush1.bf16.msra.mxu0 0
  %1173 = vmatprep.subr.bf16.mxu0 0
  %1174 = vmatpush1.bf16.msra.mxu0 0
  %1175 = vmatprep.subr.bf16.mxu0 0
  %1176 = vmatpush1.bf16.msra.mxu0 0
  %1177 = vmatprep.subr.bf16.mxu0 0
  %1178 = vmatpush1.bf16.msra.mxu0 0
  %1179 = vmatprep.subr.bf16.mxu0 0
  %1180 = vmatpush1.bf16.msra.mxu0 0
  %1181 = vmatprep.subr.bf16.mxu0 0
  %1182 = vmatpush1.bf16.msra.mxu0 0
  %1183 = vmatprep.subr.bf16.mxu0 0
  %1184 = vmatpush1.bf16.msra.mxu0 0
  %1185 = vmatprep.subr.bf16.mxu0 0
  %1186 = vmatpush1.bf16.msra.mxu0 0
  %1187 = vmatprep.mubr.bf16.mxu0 0
  %1188 = vmatmul.mubr.bf16.gmra.mrb[0].mxu0 %v15
  %v1189 = vpop.f32.mrb[0].mxu0
  %v1190 = vadd.f32 %v207, %v1189
  %v1191 = vpop.f32.mrb[0].mxu0
  %v1192 = vadd.f32 %v211, %v1191
  %v1193 = vpop.f32.mrb[0].mxu0
  %v1194 = vpop.f32.mrb[0].mxu0
  %1195 = vdwg.mxu0
  %v1196 = vpack.c.bf16 %v903, %v903
  %v1197 = vpack.c.bf16 %v905, %v905
  %v1198 = vpack.c.bf16 %v944, %v944
  %v1199 = vpack.c.bf16 %v946, %v946
  %v1200 = vpack.c.bf16 %v985, %v985
  %v1201 = vpack.c.bf16 %v987, %v987
  %v1202 = vpack.c.bf16 %v1026, %v1026
  %v1203 = vpack.c.bf16 %v1028, %v1028
  %v1204 = vpack.c.bf16 %v1067, %v1067
  %v1205 = vpack.c.bf16 %v1069, %v1069
  %v1206 = vpack.c.bf16 %v1108, %v1108
  %v1207 = vpack.c.bf16 %v1110, %v1110
  %v1208 = vpack.c.bf16 %v1149, %v1149
  %v1209 = vpack.c.bf16 %v1151, %v1151
  %v1210 = vpack.c.bf16 %v1190, %v1190
  %v1211 = vpack.c.bf16 %v1192, %v1192
  %v1228 = vcombine.low %v1196, %v1197
  %v1229 = vcombine.low %v1198, %v1199
  %v1230 = vcombine.low %v1200, %v1201
  %v1231 = vcombine.low %v1202, %v1203
  %v1233 = vunpack.c.l.s4 1966171168
  %v1234 = vunpack.c.0.s8 %v1233
  %v1235 = vlaneseq
  %v1236 = vshrl.u32 %v1235, 7
  %v1237 = vsub.s32 %v1234, %v1236
  %v1238 = vrot.slane %v1228, %v1237
  %v1240 = vunpack.c.l.s4 1966171168
  %v1241 = vunpack.c.0.s8 %v1240
  %v1242 = vlaneseq
  %v1243 = vshrl.u32 %v1242, 7
  %v1244 = vsub.s32 %v1241, %v1243
  %v1245 = vrot.slane %v1229, %v1244
  %v1247 = vunpack.c.l.s4 1966171168
  %v1248 = vunpack.c.0.s8 %v1247
  %v1249 = vlaneseq
  %v1250 = vshrl.u32 %v1249, 7
  %v1251 = vsub.s32 %v1248, %v1250
  %v1252 = vrot.slane %v1230, %v1251
  %v1254 = vunpack.c.l.s4 1966171168
  %v1255 = vunpack.c.0.s8 %v1254
  %v1256 = vlaneseq
  %v1257 = vshrl.u32 %v1256, 7
  %v1258 = vsub.s32 %v1255, %v1257
  %v1259 = vrot.slane %v1231, %v1258
  %v1260 = vcombine.low %v1238, %v1245
  %v1261 = vcombine.low %v1252, %v1259
  %v1263 = vunpack.c.l.s4 1966171168
  %v1264 = vunpack.c.0.s8 %v1263
  %v1265 = vlaneseq
  %v1266 = vshrl.u32 %v1265, 7
  %v1267 = vsub.s32 %v1264, %v1266
  %v1268 = vrot.slane %v1260, %v1267
  %v1270 = vunpack.c.l.s4 1966171168
  %v1271 = vunpack.c.0.s8 %v1270
  %v1272 = vlaneseq
  %v1273 = vshrl.u32 %v1272, 7
  %v1274 = vsub.s32 %v1271, %v1273
  %v1275 = vrot.slane %v1261, %v1274
  %v1276 = vcombine.low %v1268, %v1275
  %v1277 = vcombine.low %v1204, %v1205
  %v1278 = vcombine.low %v1206, %v1207
  %v1279 = vcombine.low %v1208, %v1209
  %v1280 = vcombine.low %v1210, %v1211
  %v1282 = vunpack.c.l.s4 1966171168
  %v1283 = vunpack.c.0.s8 %v1282
  %v1284 = vlaneseq
  %v1285 = vshrl.u32 %v1284, 7
  %v1286 = vsub.s32 %v1283, %v1285
  %v1287 = vrot.slane %v1277, %v1286
  %v1289 = vunpack.c.l.s4 1966171168
  %v1290 = vunpack.c.0.s8 %v1289
  %v1291 = vlaneseq
  %v1292 = vshrl.u32 %v1291, 7
  %v1293 = vsub.s32 %v1290, %v1292
  %v1294 = vrot.slane %v1278, %v1293
  %v1296 = vunpack.c.l.s4 1966171168
  %v1297 = vunpack.c.0.s8 %v1296
  %v1298 = vlaneseq
  %v1299 = vshrl.u32 %v1298, 7
  %v1300 = vsub.s32 %v1297, %v1299
  %v1301 = vrot.slane %v1279, %v1300
  %v1303 = vunpack.c.l.s4 1966171168
  %v1304 = vunpack.c.0.s8 %v1303
  %v1305 = vlaneseq
  %v1306 = vshrl.u32 %v1305, 7
  %v1307 = vsub.s32 %v1304, %v1306
  %v1308 = vrot.slane %v1280, %v1307
  %v1309 = vcombine.low %v1287, %v1294
  %v1310 = vcombine.low %v1301, %v1308
  %v1312 = vunpack.c.l.s4 1966171168
  %v1313 = vunpack.c.0.s8 %v1312
  %v1314 = vlaneseq
  %v1315 = vshrl.u32 %v1314, 7
  %v1316 = vsub.s32 %v1313, %v1315
  %v1317 = vrot.slane %v1309, %v1316
  %v1319 = vunpack.c.l.s4 1966171168
  %v1320 = vunpack.c.0.s8 %v1319
  %v1321 = vlaneseq
  %v1322 = vshrl.u32 %v1321, 7
  %v1323 = vsub.s32 %v1320, %v1322
  %v1324 = vrot.slane %v1310, %v1323
  %v1325 = vcombine.low %v1317, %v1324
  %1328 = vst [vmem:[%s3] sm:$0xff] %v1276
  %1329 = vst [vmem:[%s3 + $0x8] sm:$0xff] %v1325
  // Predicated region
  $region14: #{vae_forward.12} parent=0 // pred_check
    _
  $region15: #{vae_forward.12} parent=0 // pred_check_branch
    %1331 = sbr.rel (0) target = $region17
  $region16: #{vae_forward.12} parent=0 // pred_region
    _
  $region17: #{vae_forward.12} parent=0 // pred_fallthru
    _
  // Predicated region
  $region18: #{vae_forward.12} parent=0 // pred_check
    _
  $region19: #{vae_forward.12} parent=0 // pred_check_branch
    %1333 = sbr.rel (0) target = $region21
  $region20: #{vae_forward.12} parent=0 // pred_region
    _
  $region21: #{vae_forward.12} parent=0 // pred_fallthru
    _

// kernel: tile.18
$region0: #{tile.18}
  #allocation0 [shape = 's32[1]{0}', space=sflag, size = 0x4, scoped, tag = 'scoped memory for tile.18']
  %s0 = inlined_call_operand.vmem [shape: f32[64], index: 0, kind: input, shape index: {}]
  %s1 = inlined_call_operand.vmem [shape: f32[4,64], index: 1, kind: output, shape index: {}]
  // Predicated region
  $region2: #{tile.18} parent=0 // pred_check
    _
  $region3: #{tile.18} parent=0 // pred_check_branch
    %3 = sbr.rel (0) target = $region5
  $region4: #{tile.18} parent=0 // pred_region
    _
  $region5: #{tile.18} parent=0 // pred_fallthru
    _
  %v4 = vld [vmem:[%s0] ss:$0 sm:$0xff]
  %5 = vst [vmem:[%s1] sm:$0xf] %v4

// kernel: tile.19
$region0: #{tile.19}
  %s0 = inlined_call_operand.vmem [shape: f32[4,64], index: 0, kind: input, shape index: {}]
  %s1 = inlined_call_operand.vmem [shape: f32[1,256], index: 1, kind: output, shape index: {}]
  $region1: #{tile.19} parent=0
    #allocation0 [shape = 'u8[8192]{0}', space=vmem, size = 0x2000, scoped, tag = 'scoped mem for output reshape']
    #allocation1 [shape = 'u8[4096]{0}', space=vmem, size = 0x1000, scoped, tag = 'scoped mem for input reshape']
    %s3 = sshllo.u32 0, 4
    %v4 = vld [vmem:[%s0] sm:%s3]
    %5 = vst [vmem:[#allocation1] sm:%s3] %v4
    %s6 = smov 3
    %v7 = vld [vmem:[#allocation1] ss:$2 sm:%s6]
    %vm8 = vcmask 523264
    %9 = vst.msk [vmem:[#allocation0] ss:$8 sm:$0x3] %vm8, %v7
    %s10 = scalar_lea.vmem [#allocation1], 1
    %s11 = smov 3
    %v12 = vld [vmem:[%s10] ss:$2 sm:%s11]
    %13 = vrot.lane.b32.xlu0 %v12, 64
    %v14 = vpop.permute.xlu0 %13
    %vm15 = vcmask 1048064
    %16 = vst.msk [vmem:[#allocation0] ss:$8 sm:$0x3] %vm15, %v14
    %s18 = sshllo.u32 0, 1
    %v20 = vld [vmem:[#allocation0] sm:%s18]
    %s21 = sshllo.u32 0, 1
    %22 = vst [vmem:[%s1] sm:%s21] %v20
    %s23 = scalar_lea.vmem [#allocation0], 8
    %v24 = vld [vmem:[%s23] sm:%s18]
    %s25 = sshllo.u32 0, 1
    %s26 = scalar_lea.vmem %s1, 1
    %27 = vst [vmem:[%s26] sm:%s25] %v24

// kernel: vae_forward.13
$region0: #{vae_forward.13}
  #allocation0 [shape = 'u32[]', space=smem, size = 0x4, offset = 0x4, fixed_abs, tag = 'smem constant byte address 0x4 - core index']
  #allocation1 [shape = 'u32[144,128]{1,0:T(1,128)}', space=vmem, size = 0x12000, scoped, tag = 'internal scratch']
  %s0 = inlined_call_operand.vmem [shape: bf16[32,512], index: 0, kind: input, shape index: {}]
  %s1 = inlined_call_operand.vmem [shape: bf16[512,256], index: 1, kind: input, shape index: {}]
  %s2 = inlined_call_operand.vmem [shape: f32[1,256], index: 2, kind: input, shape index: {}]
  %s3 = inlined_call_operand.vmem [shape: bf16[32,256], index: 3, kind: output, shape index: {}]
  %s4 = sld [smem:[#allocation0]]
  $region22: #{vae_forward.13} parent=0
    _
  %s6 = ssub.s32 1, %s4
  %s7 = scalar_select 0, %s6, %s4
  // Predicated region
  $region2: #{vae_forward.13} parent=0 // pred_check
    _
  $region3: #{vae_forward.13} parent=0 // pred_check_branch
    %9 = sbr.rel (0) target = $region5
  $region4: #{vae_forward.13} parent=0 // pred_region
    _
  $region5: #{vae_forward.13} parent=0 // pred_fallthru
    _
  // Predicated region
  $region6: #{vae_forward.13} parent=0 // pred_check
    _
  $region7: #{vae_forward.13} parent=0 // pred_check_branch
    %11 = sbr.rel (0) target = $region9
  $region8: #{vae_forward.13} parent=0 // pred_region
    _
  $region9: #{vae_forward.13} parent=0 // pred_fallthru
    _
  // Predicated region
  $region10: #{vae_forward.13} parent=0 // pred_check
    _
  $region11: #{vae_forward.13} parent=0 // pred_check_branch
    %13 = sbr.rel (0) target = $region13
  $region12: #{vae_forward.13} parent=0 // pred_region
    _
  $region13: #{vae_forward.13} parent=0 // pred_fallthru
    _
  %v14 = vld [vmem:[%s0] sm:$0xff]
  %v15 = vld [vmem:[%s0 + $0x8] sm:$0xff]
  %v16 = vld [vmem:[%s0 + $0x10] sm:$0xff]
  %v17 = vld [vmem:[%s0 + $0x18] sm:$0xff]
  %v18 = vld [vmem:[%s0 + $0x20] sm:$0xff]
  %v19 = vld [vmem:[%s0 + $0x28] sm:$0xff]
  %v20 = vld [vmem:[%s0 + $0x30] sm:$0xff]
  %v21 = vld [vmem:[%s0 + $0x38] sm:$0xff]
  %v22 = vld [vmem:[%s1] sm:$0xff]
  %v23 = vld [vmem:[%s1 + $0x8] sm:$0xff]
  %v24 = vld [vmem:[%s1 + $0x10] sm:$0xff]
  %v25 = vld [vmem:[%s1 + $0x18] sm:$0xff]
  %v26 = vld [vmem:[%s1 + $0x20] sm:$0xff]
  %v27 = vld [vmem:[%s1 + $0x28] sm:$0xff]
  %v28 = vld [vmem:[%s1 + $0x30] sm:$0xff]
  %v29 = vld [vmem:[%s1 + $0x38] sm:$0xff]
  %v30 = vld [vmem:[%s1 + $0x40] sm:$0xff]
  %v31 = vld [vmem:[%s1 + $0x48] sm:$0xff]
  %v32 = vld [vmem:[%s1 + $0x50] sm:$0xff]
  %v33 = vld [vmem:[%s1 + $0x58] sm:$0xff]
  %v34 = vld [vmem:[%s1 + $0x60] sm:$0xff]
  %v35 = vld [vmem:[%s1 + $0x68] sm:$0xff]
  %v36 = vld [vmem:[%s1 + $0x70] sm:$0xff]
  %v37 = vld [vmem:[%s1 + $0x78] sm:$0xff]
  %v38 = vld [vmem:[%s1 + $0x80] sm:$0xff]
  %v39 = vld [vmem:[%s1 + $0x88] sm:$0xff]
  %v40 = vld [vmem:[%s1 + $0x90] sm:$0xff]
  %v41 = vld [vmem:[%s1 + $0x98] sm:$0xff]
  %v42 = vld [vmem:[%s1 + $0xa0] sm:$0xff]
  %v43 = vld [vmem:[%s1 + $0xa8] sm:$0xff]
  %v44 = vld [vmem:[%s1 + $0xb0] sm:$0xff]
  %v45 = vld [vmem:[%s1 + $0xb8] sm:$0xff]
  %v46 = vld [vmem:[%s1 + $0xc0] sm:$0xff]
  %v47 = vld [vmem:[%s1 + $0xc8] sm:$0xff]
  %v48 = vld [vmem:[%s1 + $0xd0] sm:$0xff]
  %v49 = vld [vmem:[%s1 + $0xd8] sm:$0xff]
  %v50 = vld [vmem:[%s1 + $0xe0] sm:$0xff]
  %v51 = vld [vmem:[%s1 + $0xe8] sm:$0xff]
  %v52 = vld [vmem:[%s1 + $0xf0] sm:$0xff]
  %v53 = vld [vmem:[%s1 + $0xf8] sm:$0xff]
  %v54 = vld [vmem:[%s1 + $0x100] sm:$0xff]
  %v55 = vld [vmem:[%s1 + $0x108] sm:$0xff]
  %v56 = vld [vmem:[%s1 + $0x110] sm:$0xff]
  %v57 = vld [vmem:[%s1 + $0x118] sm:$0xff]
  %v58 = vld [vmem:[%s1 + $0x120] sm:$0xff]
  %v59 = vld [vmem:[%s1 + $0x128] sm:$0xff]
  %v60 = vld [vmem:[%s1 + $0x130] sm:$0xff]
  %v61 = vld [vmem:[%s1 + $0x138] sm:$0xff]
  %v62 = vld [vmem:[%s1 + $0x140] sm:$0xff]
  %v63 = vld [vmem:[%s1 + $0x148] sm:$0xff]
  %v64 = vld [vmem:[%s1 + $0x150] sm:$0xff]
  %v65 = vld [vmem:[%s1 + $0x158] sm:$0xff]
  %v66 = vld [vmem:[%s1 + $0x160] sm:$0xff]
  %v67 = vld [vmem:[%s1 + $0x168] sm:$0xff]
  %v68 = vld [vmem:[%s1 + $0x170] sm:$0xff]
  %v69 = vld [vmem:[%s1 + $0x178] sm:$0xff]
  %v70 = vld [vmem:[%s1 + $0x180] sm:$0xff]
  %v71 = vld [vmem:[%s1 + $0x188] sm:$0xff]
  %v72 = vld [vmem:[%s1 + $0x190] sm:$0xff]
  %v73 = vld [vmem:[%s1 + $0x198] sm:$0xff]
  %v74 = vld [vmem:[%s1 + $0x1a0] sm:$0xff]
  %v75 = vld [vmem:[%s1 + $0x1a8] sm:$0xff]
  %v76 = vld [vmem:[%s1 + $0x1b0] sm:$0xff]
  %v77 = vld [vmem:[%s1 + $0x1b8] sm:$0xff]
  %v78 = vld [vmem:[%s1 + $0x1c0] sm:$0xff]
  %v79 = vld [vmem:[%s1 + $0x1c8] sm:$0xff]
  %v80 = vld [vmem:[%s1 + $0x1d0] sm:$0xff]
  %v81 = vld [vmem:[%s1 + $0x1d8] sm:$0xff]
  %v82 = vld [vmem:[%s1 + $0x1e0] sm:$0xff]
  %v83 = vld [vmem:[%s1 + $0x1e8] sm:$0xff]
  %v84 = vld [vmem:[%s1 + $0x1f0] sm:$0xff]
  %v85 = vld [vmem:[%s1 + $0x1f8] sm:$0xff]
  %v86 = vld [vmem:[%s2] sm:$0x3]
  %v88 = vlaneseq
  %v89 = vshrl.u32 %v88, 7
  %v90 = vsub.s32 0, %v89
  %v91 = vrot.slane %v86, %v90
  %v92 = vlaneseq
  %v93 = vshrl.u32 %v92, 7
  %v94 = vsub.s32 1, %v93
  %v95 = vrot.slane %v86, %v94
  %v106 = vunpack.c.l.b16 %v14
  %v107 = vunpack.c.h.b16 %v14
  %v108 = vunpack.c.l.b16 %v15
  %v109 = vunpack.c.h.b16 %v15
  %v110 = vunpack.c.l.b16 %v16
  %v111 = vunpack.c.h.b16 %v16
  %v112 = vunpack.c.l.b16 %v17
  %v113 = vunpack.c.h.b16 %v17
  %v114 = vunpack.c.l.b16 %v18
  %v115 = vunpack.c.h.b16 %v18
  %v116 = vunpack.c.l.b16 %v19
  %v117 = vunpack.c.h.b16 %v19
  %v118 = vunpack.c.l.b16 %v20
  %v119 = vunpack.c.h.b16 %v20
  %v120 = vunpack.c.l.b16 %v21
  %v121 = vunpack.c.h.b16 %v21
  %v122 = vpack.c.b16 %v110, %v106
  %v123 = vpack.c.b16 %v111, %v107
  %v124 = vpack.c.b16 %v112, %v108
  %v125 = vpack.c.b16 %v113, %v109
  %v126 = vpack.c.b16 %v118, %v114
  %v127 = vpack.c.b16 %v119, %v115
  %v128 = vpack.c.b16 %v120, %v116
  %v129 = vpack.c.b16 %v121, %v117
  %v202 = vunpack.c.l.b16 %v22
  %v203 = vunpack.c.h.b16 %v22
  %v204 = vunpack.c.l.b16 %v23
  %v205 = vunpack.c.h.b16 %v23
  %v206 = vunpack.c.l.b16 %v24
  %v207 = vunpack.c.h.b16 %v24
  %v208 = vunpack.c.l.b16 %v25
  %v209 = vunpack.c.h.b16 %v25
  %v210 = vunpack.c.l.b16 %v26
  %v211 = vunpack.c.h.b16 %v26
  %v212 = vunpack.c.l.b16 %v27
  %v213 = vunpack.c.h.b16 %v27
  %v214 = vunpack.c.l.b16 %v28
  %v215 = vunpack.c.h.b16 %v28
  %v216 = vunpack.c.l.b16 %v29
  %v217 = vunpack.c.h.b16 %v29
  %v218 = vunpack.c.l.b16 %v30
  %v219 = vunpack.c.h.b16 %v30
  %v220 = vunpack.c.l.b16 %v31
  %v221 = vunpack.c.h.b16 %v31
  %v222 = vunpack.c.l.b16 %v32
  %v223 = vunpack.c.h.b16 %v32
  %v224 = vunpack.c.l.b16 %v33
  %v225 = vunpack.c.h.b16 %v33
  %v226 = vunpack.c.l.b16 %v34
  %v227 = vunpack.c.h.b16 %v34
  %v228 = vunpack.c.l.b16 %v35
  %v229 = vunpack.c.h.b16 %v35
  %v230 = vunpack.c.l.b16 %v36
  %v231 = vunpack.c.h.b16 %v36
  %v232 = vunpack.c.l.b16 %v37
  %v233 = vunpack.c.h.b16 %v37
  %v234 = vunpack.c.l.b16 %v38
  %v235 = vunpack.c.h.b16 %v38
  %v236 = vunpack.c.l.b16 %v39
  %v237 = vunpack.c.h.b16 %v39
  %v238 = vunpack.c.l.b16 %v40
  %v239 = vunpack.c.h.b16 %v40
  %v240 = vunpack.c.l.b16 %v41
  %v241 = vunpack.c.h.b16 %v41
  %v242 = vunpack.c.l.b16 %v42
  %v243 = vunpack.c.h.b16 %v42
  %v244 = vunpack.c.l.b16 %v43
  %v245 = vunpack.c.h.b16 %v43
  %v246 = vunpack.c.l.b16 %v44
  %v247 = vunpack.c.h.b16 %v44
  %v248 = vunpack.c.l.b16 %v45
  %v249 = vunpack.c.h.b16 %v45
  %v250 = vunpack.c.l.b16 %v46
  %v251 = vunpack.c.h.b16 %v46
  %v252 = vunpack.c.l.b16 %v47
  %v253 = vunpack.c.h.b16 %v47
  %v254 = vunpack.c.l.b16 %v48
  %v255 = vunpack.c.h.b16 %v48
  %v256 = vunpack.c.l.b16 %v49
  %v257 = vunpack.c.h.b16 %v49
  %v258 = vunpack.c.l.b16 %v50
  %v259 = vunpack.c.h.b16 %v50
  %v260 = vunpack.c.l.b16 %v51
  %v261 = vunpack.c.h.b16 %v51
  %v262 = vunpack.c.l.b16 %v52
  %v263 = vunpack.c.h.b16 %v52
  %v264 = vunpack.c.l.b16 %v53
  %v265 = vunpack.c.h.b16 %v53
  %v266 = vunpack.c.l.b16 %v54
  %v267 = vunpack.c.h.b16 %v54
  %v268 = vunpack.c.l.b16 %v55
  %v269 = vunpack.c.h.b16 %v55
  %v270 = vunpack.c.l.b16 %v56
  %v271 = vunpack.c.h.b16 %v56
  %v272 = vunpack.c.l.b16 %v57
  %v273 = vunpack.c.h.b16 %v57
  %v274 = vunpack.c.l.b16 %v58
  %v275 = vunpack.c.h.b16 %v58
  %v276 = vunpack.c.l.b16 %v59
  %v277 = vunpack.c.h.b16 %v59
  %v278 = vunpack.c.l.b16 %v60
  %v279 = vunpack.c.h.b16 %v60
  %v280 = vunpack.c.l.b16 %v61
  %v281 = vunpack.c.h.b16 %v61
  %v282 = vunpack.c.l.b16 %v62
  %v283 = vunpack.c.h.b16 %v62
  %v284 = vunpack.c.l.b16 %v63
  %v285 = vunpack.c.h.b16 %v63
  %v286 = vunpack.c.l.b16 %v64
  %v287 = vunpack.c.h.b16 %v64
  %v288 = vunpack.c.l.b16 %v65
  %v289 = vunpack.c.h.b16 %v65
  %v290 = vunpack.c.l.b16 %v66
  %v291 = vunpack.c.h.b16 %v66
  %v292 = vunpack.c.l.b16 %v67
  %v293 = vunpack.c.h.b16 %v67
  %v294 = vunpack.c.l.b16 %v68
  %v295 = vunpack.c.h.b16 %v68
  %v296 = vunpack.c.l.b16 %v69
  %v297 = vunpack.c.h.b16 %v69
  %v298 = vunpack.c.l.b16 %v70
  %v299 = vunpack.c.h.b16 %v70
  %v300 = vunpack.c.l.b16 %v71
  %v301 = vunpack.c.h.b16 %v71
  %v302 = vunpack.c.l.b16 %v72
  %v303 = vunpack.c.h.b16 %v72
  %v304 = vunpack.c.l.b16 %v73
  %v305 = vunpack.c.h.b16 %v73
  %v306 = vunpack.c.l.b16 %v74
  %v307 = vunpack.c.h.b16 %v74
  %v308 = vunpack.c.l.b16 %v75
  %v309 = vunpack.c.h.b16 %v75
  %v310 = vunpack.c.l.b16 %v76
  %v311 = vunpack.c.h.b16 %v76
  %v312 = vunpack.c.l.b16 %v77
  %v313 = vunpack.c.h.b16 %v77
  %v314 = vunpack.c.l.b16 %v78
  %v315 = vunpack.c.h.b16 %v78
  %v316 = vunpack.c.l.b16 %v79
  %v317 = vunpack.c.h.b16 %v79
  %v318 = vunpack.c.l.b16 %v80
  %v319 = vunpack.c.h.b16 %v80
  %v320 = vunpack.c.l.b16 %v81
  %v321 = vunpack.c.h.b16 %v81
  %v322 = vunpack.c.l.b16 %v82
  %v323 = vunpack.c.h.b16 %v82
  %v324 = vunpack.c.l.b16 %v83
  %v325 = vunpack.c.h.b16 %v83
  %v326 = vunpack.c.l.b16 %v84
  %v327 = vunpack.c.h.b16 %v84
  %v328 = vunpack.c.l.b16 %v85
  %v329 = vunpack.c.h.b16 %v85
  %v330 = vpack.c.b16 %v204, %v202
  %v331 = vpack.c.b16 %v205, %v203
  %v332 = vpack.c.b16 %v208, %v206
  %v333 = vpack.c.b16 %v209, %v207
  %v334 = vpack.c.b16 %v212, %v210
  %v335 = vpack.c.b16 %v213, %v211
  %v336 = vpack.c.b16 %v216, %v214
  %v337 = vpack.c.b16 %v217, %v215
  %v338 = vpack.c.b16 %v220, %v218
  %v339 = vpack.c.b16 %v221, %v219
  %v340 = vpack.c.b16 %v224, %v222
  %v341 = vpack.c.b16 %v225, %v223
  %v342 = vpack.c.b16 %v228, %v226
  %v343 = vpack.c.b16 %v229, %v227
  %v344 = vpack.c.b16 %v232, %v230
  %v345 = vpack.c.b16 %v233, %v231
  %v346 = vpack.c.b16 %v236, %v234
  %v347 = vpack.c.b16 %v237, %v235
  %v348 = vpack.c.b16 %v240, %v238
  %v349 = vpack.c.b16 %v241, %v239
  %v350 = vpack.c.b16 %v244, %v242
  %v351 = vpack.c.b16 %v245, %v243
  %v352 = vpack.c.b16 %v248, %v246
  %v353 = vpack.c.b16 %v249, %v247
  %v354 = vpack.c.b16 %v252, %v250
  %v355 = vpack.c.b16 %v253, %v251
  %v356 = vpack.c.b16 %v256, %v254
  %v357 = vpack.c.b16 %v257, %v255
  %v358 = vpack.c.b16 %v260, %v258
  %v359 = vpack.c.b16 %v261, %v259
  %v360 = vpack.c.b16 %v264, %v262
  %v361 = vpack.c.b16 %v265, %v263
  %v362 = vpack.c.b16 %v268, %v266
  %v363 = vpack.c.b16 %v269, %v267
  %v364 = vpack.c.b16 %v272, %v270
  %v365 = vpack.c.b16 %v273, %v271
  %v366 = vpack.c.b16 %v276, %v274
  %v367 = vpack.c.b16 %v277, %v275
  %v368 = vpack.c.b16 %v280, %v278
  %v369 = vpack.c.b16 %v281, %v279
  %v370 = vpack.c.b16 %v284, %v282
  %v371 = vpack.c.b16 %v285, %v283
  %v372 = vpack.c.b16 %v288, %v286
  %v373 = vpack.c.b16 %v289, %v287
  %v374 = vpack.c.b16 %v292, %v290
  %v375 = vpack.c.b16 %v293, %v291
  %v376 = vpack.c.b16 %v296, %v294
  %v377 = vpack.c.b16 %v297, %v295
  %v378 = vpack.c.b16 %v300, %v298
  %v379 = vpack.c.b16 %v301, %v299
  %v380 = vpack.c.b16 %v304, %v302
  %v381 = vpack.c.b16 %v305, %v303
  %v382 = vpack.c.b16 %v308, %v306
  %v383 = vpack.c.b16 %v309, %v307
  %v384 = vpack.c.b16 %v312, %v310
  %v385 = vpack.c.b16 %v313, %v311
  %v386 = vpack.c.b16 %v316, %v314
  %v387 = vpack.c.b16 %v317, %v315
  %v388 = vpack.c.b16 %v320, %v318
  %v389 = vpack.c.b16 %v321, %v319
  %v390 = vpack.c.b16 %v324, %v322
  %v391 = vpack.c.b16 %v325, %v323
  %v392 = vpack.c.b16 %v328, %v326
  %v393 = vpack.c.b16 %v329, %v327
  %458 = vmatprep.subr.bf16.mxu0 %v331
  %459 = vmatpush1.bf16.msra.mxu0 %v330
  %460 = vmatprep.subr.bf16.mxu0 %v333
  %461 = vmatpush1.bf16.msra.mxu0 %v332
  %462 = vmatprep.subr.bf16.mxu0 %v335
  %463 = vmatpush1.bf16.msra.mxu0 %v334
  %464 = vmatprep.subr.bf16.mxu0 %v337
  %465 = vmatpush1.bf16.msra.mxu0 %v336
  %466 = vmatprep.subr.bf16.mxu0 %v339
  %467 = vmatpush1.bf16.msra.mxu0 %v338
  %468 = vmatprep.subr.bf16.mxu0 %v341
  %469 = vmatpush1.bf16.msra.mxu0 %v340
  %470 = vmatprep.subr.bf16.mxu0 %v343
  %471 = vmatpush1.bf16.msra.mxu0 %v342
  %472 = vmatprep.subr.bf16.mxu0 %v345
  %473 = vmatpush1.bf16.msra.mxu0 %v344
  %474 = vmatprep.subr.bf16.mxu0 %v347
  %475 = vmatpush1.bf16.msra.mxu0 %v346
  %476 = vmatprep.subr.bf16.mxu0 %v349
  %477 = vmatpush1.bf16.msra.mxu0 %v348
  %478 = vmatprep.subr.bf16.mxu0 %v351
  %479 = vmatpush1.bf16.msra.mxu0 %v350
  %480 = vmatprep.subr.bf16.mxu0 %v353
  %481 = vmatpush1.bf16.msra.mxu0 %v352
  %482 = vmatprep.subr.bf16.mxu0 %v355
  %483 = vmatpush1.bf16.msra.mxu0 %v354
  %484 = vmatprep.subr.bf16.mxu0 %v357
  %485 = vmatpush1.bf16.msra.mxu0 %v356
  %486 = vmatprep.subr.bf16.mxu0 %v359
  %487 = vmatpush1.bf16.msra.mxu0 %v358
  %488 = vmatprep.subr.bf16.mxu0 %v361
  %489 = vmatpush1.bf16.msra.mxu0 %v360
  %490 = vmatprep.mubr.bf16.mxu0 %v123
  %491 = vmatmul.mubr.bf16.gmra.mrb[0].mxu0 %v122
  %v492 = vpop.f32.mrb[0].mxu0
  %v493 = vadd.f32 %v91, %v492
  %v494 = vpop.f32.mrb[0].mxu0
  %v495 = vadd.f32 %v95, %v494
  %v496 = vpop.f32.mrb[0].mxu0
  %v497 = vadd.f32 %v91, %v496
  %v498 = vpop.f32.mrb[0].mxu0
  %v499 = vadd.f32 %v95, %v498
  %500 = vmatprep.mubr.bf16.mxu0 %v127
  %501 = vmatmul.mubr.bf16.gmra.mrb[0].mxu0 %v126
  %v502 = vpop.f32.mrb[0].mxu0
  %v503 = vadd.f32 %v91, %v502
  %v504 = vpop.f32.mrb[0].mxu0
  %v505 = vadd.f32 %v95, %v504
  %v506 = vpop.f32.mrb[0].mxu0
  %v507 = vadd.f32 %v91, %v506
  %v508 = vpop.f32.mrb[0].mxu0
  %v509 = vadd.f32 %v95, %v508
  %510 = vdwg.mxu0
  %511 = vmatprep.subr.bf16.mxu0 %v363
  %512 = vmatpush1.bf16.msra.mxu0 %v362
  %513 = vmatprep.subr.bf16.mxu0 %v365
  %514 = vmatpush1.bf16.msra.mxu0 %v364
  %515 = vmatprep.subr.bf16.mxu0 %v367
  %516 = vmatpush1.bf16.msra.mxu0 %v366
  %517 = vmatprep.subr.bf16.mxu0 %v369
  %518 = vmatpush1.bf16.msra.mxu0 %v368
  %519 = vmatprep.subr.bf16.mxu0 %v371
  %520 = vmatpush1.bf16.msra.mxu0 %v370
  %521 = vmatprep.subr.bf16.mxu0 %v373
  %522 = vmatpush1.bf16.msra.mxu0 %v372
  %523 = vmatprep.subr.bf16.mxu0 %v375
  %524 = vmatpush1.bf16.msra.mxu0 %v374
  %525 = vmatprep.subr.bf16.mxu0 %v377
  %526 = vmatpush1.bf16.msra.mxu0 %v376
  %527 = vmatprep.subr.bf16.mxu0 %v379
  %528 = vmatpush1.bf16.msra.mxu0 %v378
  %529 = vmatprep.subr.bf16.mxu0 %v381
  %530 = vmatpush1.bf16.msra.mxu0 %v380
  %531 = vmatprep.subr.bf16.mxu0 %v383
  %532 = vmatpush1.bf16.msra.mxu0 %v382
  %533 = vmatprep.subr.bf16.mxu0 %v385
  %534 = vmatpush1.bf16.msra.mxu0 %v384
  %535 = vmatprep.subr.bf16.mxu0 %v387
  %536 = vmatpush1.bf16.msra.mxu0 %v386
  %537 = vmatprep.subr.bf16.mxu0 %v389
  %538 = vmatpush1.bf16.msra.mxu0 %v388
  %539 = vmatprep.subr.bf16.mxu0 %v391
  %540 = vmatpush1.bf16.msra.mxu0 %v390
  %541 = vmatprep.subr.bf16.mxu0 %v393
  %542 = vmatpush1.bf16.msra.mxu0 %v392
  %543 = vmatprep.mubr.bf16.mxu0 %v125
  %544 = vmatmul.mubr.bf16.gmra.mrb[0].mxu0 %v124
  %v545 = vpop.f32.mrb[0].mxu0
  %v546 = vadd.f32 %v493, %v545
  %v547 = vpop.f32.mrb[0].mxu0
  %v548 = vadd.f32 %v495, %v547
  %v549 = vpop.f32.mrb[0].mxu0
  %v550 = vadd.f32 %v497, %v549
  %v551 = vpop.f32.mrb[0].mxu0
  %v552 = vadd.f32 %v499, %v551
  %553 = vmatprep.mubr.bf16.mxu0 %v129
  %554 = vmatmul.mubr.bf16.gmra.mrb[0].mxu0 %v128
  %v555 = vpop.f32.mrb[0].mxu0
  %v556 = vadd.f32 %v503, %v555
  %v557 = vpop.f32.mrb[0].mxu0
  %v558 = vadd.f32 %v505, %v557
  %v559 = vpop.f32.mrb[0].mxu0
  %v560 = vadd.f32 %v507, %v559
  %v561 = vpop.f32.mrb[0].mxu0
  %v562 = vadd.f32 %v509, %v561
  %563 = vdwg.mxu0
  %v564 = vmax.f32 %v546, 0.0
  %v565 = vmax.f32 %v548, 0.0
  %v566 = vmax.f32 %v550, 0.0
  %v567 = vmax.f32 %v552, 0.0
  %v568 = vmax.f32 %v556, 0.0
  %v569 = vmax.f32 %v558, 0.0
  %v570 = vmax.f32 %v560, 0.0
  %v571 = vmax.f32 %v562, 0.0
  %v572 = vpack.c.bf16 %v566, %v564
  %v573 = vpack.c.bf16 %v567, %v565
  %v574 = vpack.c.bf16 %v570, %v568
  %v575 = vpack.c.bf16 %v571, %v569
  %v580 = vunpack.c.l.b16 %v572
  %v581 = vunpack.c.l.b16 %v573
  %v582 = vunpack.c.h.b16 %v572
  %v583 = vunpack.c.h.b16 %v573
  %v584 = vunpack.c.l.b16 %v574
  %v585 = vunpack.c.l.b16 %v575
  %v586 = vunpack.c.h.b16 %v574
  %v587 = vunpack.c.h.b16 %v575
  %v588 = vpack.c.b16 %v581, %v580
  %v589 = vpack.c.b16 %v583, %v582
  %v590 = vpack.c.b16 %v585, %v584
  %v591 = vpack.c.b16 %v587, %v586
  %596 = vst [vmem:[%s3] sm:$0xff] %v588
  %597 = vst [vmem:[%s3 + $0x8] sm:$0xff] %v589
  %598 = vst [vmem:[%s3 + $0x10] sm:$0xff] %v590
  %599 = vst [vmem:[%s3 + $0x18] sm:$0xff] %v591
  // Predicated region
  $region14: #{vae_forward.13} parent=0 // pred_check
    _
  $region15: #{vae_forward.13} parent=0 // pred_check_branch
    %601 = sbr.rel (0) target = $region17
  $region16: #{vae_forward.13} parent=0 // pred_region
    _
  $region17: #{vae_forward.13} parent=0 // pred_fallthru
    _
  // Predicated region
  $region18: #{vae_forward.13} parent=0 // pred_check
    _
  $region19: #{vae_forward.13} parent=0 // pred_check_branch
    %603 = sbr.rel (0) target = $region21
  $region20: #{vae_forward.13} parent=0 // pred_region
    _
  $region21: #{vae_forward.13} parent=0 // pred_fallthru
    _

// kernel: tile.23
$region0: #{tile.23}
  #allocation0 [shape = 's32[1]{0}', space=sflag, size = 0x4, scoped, tag = 'scoped memory for tile.23']
  %s0 = inlined_call_operand.vmem [shape: f32[32], index: 0, kind: input, shape index: {}]
  %s1 = inlined_call_operand.vmem [shape: f32[4,32], index: 1, kind: output, shape index: {}]
  // Predicated region
  $region2: #{tile.23} parent=0 // pred_check
    _
  $region3: #{tile.23} parent=0 // pred_check_branch
    %3 = sbr.rel (0) target = $region5
  $region4: #{tile.23} parent=0 // pred_region
    _
  $region5: #{tile.23} parent=0 // pred_fallthru
    _
  %v4 = vld [vmem:[%s0] ss:$0 sm:$0xff]
  %5 = vst [vmem:[%s1] sm:$0xf] %v4

// kernel: tile.24
$region0: #{tile.24}
  %s0 = inlined_call_operand.vmem [shape: f32[4,32], index: 0, kind: input, shape index: {}]
  %s1 = inlined_call_operand.vmem [shape: f32[1,128], index: 1, kind: output, shape index: {}]
  $region1: #{tile.24} parent=0
    #allocation0 [shape = 'u8[4096]{0}', space=vmem, size = 0x1000, scoped, tag = 'scoped mem for output reshape']
    #allocation1 [shape = 'u8[4096]{0}', space=vmem, size = 0x1000, scoped, tag = 'scoped mem for input reshape']
    %s3 = sshllo.u32 0, 4
    %v4 = vld [vmem:[%s0] sm:%s3]
    %5 = vst [vmem:[#allocation1] sm:%s3] %v4
    %v6 = vld [vmem:[#allocation1] sm:$0x1]
    %vm7 = vcmask 261120
    %8 = vst.msk [vmem:[#allocation0] sm:$0x1] %vm7, %v6
    %s9 = scalar_lea.vmem [#allocation1], 3
    %v10 = vld [vmem:[%s9] sm:$0x1]
    %11 = vrot.lane.b32.xlu0 %v10, 96
    %v12 = vpop.permute.xlu0 %11
    %vm13 = vcmask 1048320
    %14 = vst.msk [vmem:[#allocation0] sm:$0x1] %vm13, %v12
    %s15 = scalar_lea.vmem [#allocation1], 2
    %v16 = vld [vmem:[%s15] sm:$0x1]
    %17 = vrot.lane.b32.xlu0 %v16, 64
    %v18 = vpop.permute.xlu0 %17
    %vm19 = vcmask 785920
    %20 = vst.msk [vmem:[#allocation0] sm:$0x1] %vm19, %v18
    %s21 = scalar_lea.vmem [#allocation1], 1
    %v22 = vld [vmem:[%s21] sm:$0x1]
    %23 = vrot.lane.b32.xlu0 %v22, 32
    %v24 = vpop.permute.xlu0 %23
    %vm25 = vcmask 523520
    %26 = vst.msk [vmem:[#allocation0] sm:$0x1] %vm25, %v24
    %s28 = sshllo.u32 0, 1
    %v30 = vld [vmem:[#allocation0] sm:%s28]
    %s31 = sshllo.u32 0, 1
    %32 = vst [vmem:[%s1] sm:%s31] %v30

// kernel: vae_forward.14
$region0: #{vae_forward.14}
  #allocation0 [shape = 'u32[]', space=smem, size = 0x4, offset = 0x4, fixed_abs, tag = 'smem constant byte address 0x4 - core index']
  #allocation1 [shape = 'u32[144,128]{1,0:T(1,128)}', space=vmem, size = 0x12000, scoped, tag = 'internal scratch']
  %s0 = inlined_call_operand.vmem [shape: bf16[128,256], index: 0, kind: input, shape index: {}]
  %s1 = inlined_call_operand.vmem [shape: bf16[256,128], index: 1, kind: input, shape index: {}]
  %s2 = inlined_call_operand.vmem [shape: f32[1,128], index: 2, kind: input, shape index: {}]
  %s3 = inlined_call_operand.vmem [shape: bf16[128,128], index: 3, kind: output, shape index: {}]
  %s4 = sld [smem:[#allocation0]]
  $region22: #{vae_forward.14} parent=0
    _
  %s6 = ssub.s32 1, %s4
  %s7 = scalar_select 0, %s6, %s4
  // Predicated region
  $region2: #{vae_forward.14} parent=0 // pred_check
    _
  $region3: #{vae_forward.14} parent=0 // pred_check_branch
    %9 = sbr.rel (0) target = $region5
  $region4: #{vae_forward.14} parent=0 // pred_region
    _
  $region5: #{vae_forward.14} parent=0 // pred_fallthru
    _
  // Predicated region
  $region6: #{vae_forward.14} parent=0 // pred_check
    _
  $region7: #{vae_forward.14} parent=0 // pred_check_branch
    %11 = sbr.rel (0) target = $region9
  $region8: #{vae_forward.14} parent=0 // pred_region
    _
  $region9: #{vae_forward.14} parent=0 // pred_fallthru
    _
  // Predicated region
  $region10: #{vae_forward.14} parent=0 // pred_check
    _
  $region11: #{vae_forward.14} parent=0 // pred_check_branch
    %13 = sbr.rel (0) target = $region13
  $region12: #{vae_forward.14} parent=0 // pred_region
    _
  $region13: #{vae_forward.14} parent=0 // pred_fallthru
    _
  %v15 = vld [vmem:[%s0] sm:$0xff]
  %v16 = vld [vmem:[%s0 + $0x8] sm:$0xff]
  %v17 = vld [vmem:[%s0 + $0x10] sm:$0xff]
  %v18 = vld [vmem:[%s0 + $0x18] sm:$0xff]
  %v19 = vld [vmem:[%s0 + $0x20] sm:$0xff]
  %v20 = vld [vmem:[%s0 + $0x28] sm:$0xff]
  %v21 = vld [vmem:[%s0 + $0x30] sm:$0xff]
  %v22 = vld [vmem:[%s0 + $0x38] sm:$0xff]
  %v23 = vld [vmem:[%s0 + $0x40] sm:$0xff]
  %v24 = vld [vmem:[%s0 + $0x48] sm:$0xff]
  %v25 = vld [vmem:[%s0 + $0x50] sm:$0xff]
  %v26 = vld [vmem:[%s0 + $0x58] sm:$0xff]
  %v27 = vld [vmem:[%s0 + $0x60] sm:$0xff]
  %v28 = vld [vmem:[%s0 + $0x68] sm:$0xff]
  %v29 = vld [vmem:[%s0 + $0x70] sm:$0xff]
  %v30 = vld [vmem:[%s0 + $0x78] sm:$0xff]
  %v31 = vld [vmem:[%s1] sm:$0xf]
  %v32 = vld [vmem:[%s1 + $0x4] sm:$0xf]
  %v33 = vld [vmem:[%s1 + $0x8] sm:$0xf]
  %v34 = vld [vmem:[%s1 + $0xc] sm:$0xf]
  %v35 = vld [vmem:[%s1 + $0x10] sm:$0xf]
  %v36 = vld [vmem:[%s1 + $0x14] sm:$0xf]
  %v37 = vld [vmem:[%s1 + $0x18] sm:$0xf]
  %v38 = vld [vmem:[%s1 + $0x1c] sm:$0xf]
  %v39 = vld [vmem:[%s1 + $0x20] sm:$0xf]
  %v40 = vld [vmem:[%s1 + $0x24] sm:$0xf]
  %v41 = vld [vmem:[%s1 + $0x28] sm:$0xf]
  %v42 = vld [vmem:[%s1 + $0x2c] sm:$0xf]
  %v43 = vld [vmem:[%s1 + $0x30] sm:$0xf]
  %v44 = vld [vmem:[%s1 + $0x34] sm:$0xf]
  %v45 = vld [vmem:[%s1 + $0x38] sm:$0xf]
  %v46 = vld [vmem:[%s1 + $0x3c] sm:$0xf]
  %v47 = vld [vmem:[%s1 + $0x40] sm:$0xf]
  %v48 = vld [vmem:[%s1 + $0x44] sm:$0xf]
  %v49 = vld [vmem:[%s1 + $0x48] sm:$0xf]
  %v50 = vld [vmem:[%s1 + $0x4c] sm:$0xf]
  %v51 = vld [vmem:[%s1 + $0x50] sm:$0xf]
  %v52 = vld [vmem:[%s1 + $0x54] sm:$0xf]
  %v53 = vld [vmem:[%s1 + $0x58] sm:$0xf]
  %v54 = vld [vmem:[%s1 + $0x5c] sm:$0xf]
  %v55 = vld [vmem:[%s1 + $0x60] sm:$0xf]
  %v56 = vld [vmem:[%s1 + $0x64] sm:$0xf]
  %v57 = vld [vmem:[%s1 + $0x68] sm:$0xf]
  %v58 = vld [vmem:[%s1 + $0x6c] sm:$0xf]
  %v59 = vld [vmem:[%s1 + $0x70] sm:$0xf]
  %v60 = vld [vmem:[%s1 + $0x74] sm:$0xf]
  %v61 = vld [vmem:[%s1 + $0x78] sm:$0xf]
  %v62 = vld [vmem:[%s1 + $0x7c] sm:$0xf]
  %v63 = vld [vmem:[%s2] sm:$0x1]
  %v65 = vlaneseq
  %v66 = vshrl.u32 %v65, 7
  %v67 = vsub.s32 0, %v66
  %v68 = vrot.slane %v63, %v67
  %v86 = vunpack.c.l.b16 %v15
  %v87 = vunpack.c.h.b16 %v15
  %v88 = vunpack.c.l.b16 %v16
  %v89 = vunpack.c.h.b16 %v16
  %v90 = vunpack.c.l.b16 %v17
  %v91 = vunpack.c.h.b16 %v17
  %v92 = vunpack.c.l.b16 %v18
  %v93 = vunpack.c.h.b16 %v18
  %v94 = vunpack.c.l.b16 %v19
  %v95 = vunpack.c.h.b16 %v19
  %v96 = vunpack.c.l.b16 %v20
  %v97 = vunpack.c.h.b16 %v20
  %v98 = vunpack.c.l.b16 %v21
  %v99 = vunpack.c.h.b16 %v21
  %v100 = vunpack.c.l.b16 %v22
  %v101 = vunpack.c.h.b16 %v22
  %v102 = vunpack.c.l.b16 %v23
  %v103 = vunpack.c.h.b16 %v23
  %v104 = vunpack.c.l.b16 %v24
  %v105 = vunpack.c.h.b16 %v24
  %v106 = vunpack.c.l.b16 %v25
  %v107 = vunpack.c.h.b16 %v25
  %v108 = vunpack.c.l.b16 %v26
  %v109 = vunpack.c.h.b16 %v26
  %v110 = vunpack.c.l.b16 %v27
  %v111 = vunpack.c.h.b16 %v27
  %v112 = vunpack.c.l.b16 %v28
  %v113 = vunpack.c.h.b16 %v28
  %v114 = vunpack.c.l.b16 %v29
  %v115 = vunpack.c.h.b16 %v29
  %v116 = vunpack.c.l.b16 %v30
  %v117 = vunpack.c.h.b16 %v30
  %v118 = vpack.c.b16 %v88, %v86
  %v119 = vpack.c.b16 %v89, %v87
  %v120 = vpack.c.b16 %v92, %v90
  %v121 = vpack.c.b16 %v93, %v91
  %v122 = vpack.c.b16 %v96, %v94
  %v123 = vpack.c.b16 %v97, %v95
  %v124 = vpack.c.b16 %v100, %v98
  %v125 = vpack.c.b16 %v101, %v99
  %v126 = vpack.c.b16 %v104, %v102
  %v127 = vpack.c.b16 %v105, %v103
  %v128 = vpack.c.b16 %v108, %v106
  %v129 = vpack.c.b16 %v109, %v107
  %v130 = vpack.c.b16 %v112, %v110
  %v131 = vpack.c.b16 %v113, %v111
  %v132 = vpack.c.b16 %v116, %v114
  %v133 = vpack.c.b16 %v117, %v115
  %v182 = vunpack.c.l.b16 %v31
  %v183 = vunpack.c.l.b16 %v32
  %v184 = vunpack.c.l.b16 %v33
  %v185 = vunpack.c.l.b16 %v34
  %v186 = vunpack.c.l.b16 %v35
  %v187 = vunpack.c.l.b16 %v36
  %v188 = vunpack.c.l.b16 %v37
  %v189 = vunpack.c.l.b16 %v38
  %v190 = vunpack.c.l.b16 %v39
  %v191 = vunpack.c.l.b16 %v40
  %v192 = vunpack.c.l.b16 %v41
  %v193 = vunpack.c.l.b16 %v42
  %v194 = vunpack.c.l.b16 %v43
  %v195 = vunpack.c.l.b16 %v44
  %v196 = vunpack.c.l.b16 %v45
  %v197 = vunpack.c.l.b16 %v46
  %v198 = vunpack.c.l.b16 %v47
  %v199 = vunpack.c.l.b16 %v48
  %v200 = vunpack.c.l.b16 %v49
  %v201 = vunpack.c.l.b16 %v50
  %v202 = vunpack.c.l.b16 %v51
  %v203 = vunpack.c.l.b16 %v52
  %v204 = vunpack.c.l.b16 %v53
  %v205 = vunpack.c.l.b16 %v54
  %v206 = vunpack.c.l.b16 %v55
  %v207 = vunpack.c.l.b16 %v56
  %v208 = vunpack.c.l.b16 %v57
  %v209 = vunpack.c.l.b16 %v58
  %v210 = vunpack.c.l.b16 %v59
  %v211 = vunpack.c.l.b16 %v60
  %v212 = vunpack.c.l.b16 %v61
  %v213 = vunpack.c.l.b16 %v62
  %v214 = vpack.c.b16 %v183, %v182
  %v215 = vpack.c.b16 %v185, %v184
  %v216 = vpack.c.b16 %v187, %v186
  %v217 = vpack.c.b16 %v189, %v188
  %v218 = vpack.c.b16 %v191, %v190
  %v219 = vpack.c.b16 %v193, %v192
  %v220 = vpack.c.b16 %v195, %v194
  %v221 = vpack.c.b16 %v197, %v196
  %v222 = vpack.c.b16 %v199, %v198
  %v223 = vpack.c.b16 %v201, %v200
  %v224 = vpack.c.b16 %v203, %v202
  %v225 = vpack.c.b16 %v205, %v204
  %v226 = vpack.c.b16 %v207, %v206
  %v227 = vpack.c.b16 %v209, %v208
  %v228 = vpack.c.b16 %v211, %v210
  %v229 = vpack.c.b16 %v213, %v212
  %246 = vmatprep.subr.bf16.mxu0 0
  %247 = vmatpush1.bf16.msra.mxu0 %v214
  %248 = vmatprep.subr.bf16.mxu0 0
  %249 = vmatpush1.bf16.msra.mxu0 %v215
  %250 = vmatprep.subr.bf16.mxu0 0
  %251 = vmatpush1.bf16.msra.mxu0 %v216
  %252 = vmatprep.subr.bf16.mxu0 0
  %253 = vmatpush1.bf16.msra.mxu0 %v217
  %254 = vmatprep.subr.bf16.mxu0 0
  %255 = vmatpush1.bf16.msra.mxu0 %v218
  %256 = vmatprep.subr.bf16.mxu0 0
  %257 = vmatpush1.bf16.msra.mxu0 %v219
  %258 = vmatprep.subr.bf16.mxu0 0
  %259 = vmatpush1.bf16.msra.mxu0 %v220
  %260 = vmatprep.subr.bf16.mxu0 0
  %261 = vmatpush1.bf16.msra.mxu0 %v221
  %262 = vmatprep.subr.bf16.mxu0 0
  %263 = vmatpush1.bf16.msra.mxu0 %v222
  %264 = vmatprep.subr.bf16.mxu0 0
  %265 = vmatpush1.bf16.msra.mxu0 %v223
  %266 = vmatprep.subr.bf16.mxu0 0
  %267 = vmatpush1.bf16.msra.mxu0 %v224
  %268 = vmatprep.subr.bf16.mxu0 0
  %269 = vmatpush1.bf16.msra.mxu0 %v225
  %270 = vmatprep.subr.bf16.mxu0 0
  %271 = vmatpush1.bf16.msra.mxu0 %v226
  %272 = vmatprep.subr.bf16.mxu0 0
  %273 = vmatpush1.bf16.msra.mxu0 %v227
  %274 = vmatprep.subr.bf16.mxu0 0
  %275 = vmatpush1.bf16.msra.mxu0 %v228
  %276 = vmatprep.subr.bf16.mxu0 0
  %277 = vmatpush1.bf16.msra.mxu0 %v229
  %278 = vmatprep.mubr.bf16.mxu0 %v119
  %279 = vmatmul.mubr.bf16.gmra.mrb[0].mxu0 %v118
  %v280 = vpop.f32.mrb[0].mxu0
  %v281 = vadd.f32 %v68, %v280
  %v282 = vpop.f32.mrb[0].mxu0
  %v283 = vpop.f32.mrb[0].mxu0
  %v284 = vadd.f32 %v68, %v283
  %v285 = vpop.f32.mrb[0].mxu0
  %286 = vmatprep.mubr.bf16.mxu0 %v121
  %287 = vmatmul.mubr.bf16.gmra.mrb[0].mxu0 %v120
  %v288 = vpop.f32.mrb[0].mxu0
  %v289 = vadd.f32 %v68, %v288
  %v290 = vpop.f32.mrb[0].mxu0
  %v291 = vpop.f32.mrb[0].mxu0
  %v292 = vadd.f32 %v68, %v291
  %v293 = vpop.f32.mrb[0].mxu0
  %294 = vmatprep.mubr.bf16.mxu0 %v123
  %295 = vmatmul.mubr.bf16.gmra.mrb[0].mxu0 %v122
  %v296 = vpop.f32.mrb[0].mxu0
  %v297 = vadd.f32 %v68, %v296
  %v298 = vpop.f32.mrb[0].mxu0
  %v299 = vpop.f32.mrb[0].mxu0
  %v300 = vadd.f32 %v68, %v299
  %v301 = vpop.f32.mrb[0].mxu0
  %302 = vmatprep.mubr.bf16.mxu0 %v125
  %303 = vmatmul.mubr.bf16.gmra.mrb[0].mxu0 %v124
  %v304 = vpop.f32.mrb[0].mxu0
  %v305 = vadd.f32 %v68, %v304
  %v306 = vpop.f32.mrb[0].mxu0
  %v307 = vpop.f32.mrb[0].mxu0
  %v308 = vadd.f32 %v68, %v307
  %v309 = vpop.f32.mrb[0].mxu0
  %310 = vmatprep.mubr.bf16.mxu0 %v127
  %311 = vmatmul.mubr.bf16.gmra.mrb[0].mxu0 %v126
  %v312 = vpop.f32.mrb[0].mxu0
  %v313 = vadd.f32 %v68, %v312
  %v314 = vpop.f32.mrb[0].mxu0
  %v315 = vpop.f32.mrb[0].mxu0
  %v316 = vadd.f32 %v68, %v315
  %v317 = vpop.f32.mrb[0].mxu0
  %318 = vmatprep.mubr.bf16.mxu0 %v129
  %319 = vmatmul.mubr.bf16.gmra.mrb[0].mxu0 %v128
  %v320 = vpop.f32.mrb[0].mxu0
  %v321 = vadd.f32 %v68, %v320
  %v322 = vpop.f32.mrb[0].mxu0
  %v323 = vpop.f32.mrb[0].mxu0
  %v324 = vadd.f32 %v68, %v323
  %v325 = vpop.f32.mrb[0].mxu0
  %326 = vmatprep.mubr.bf16.mxu0 %v131
  %327 = vmatmul.mubr.bf16.gmra.mrb[0].mxu0 %v130
  %v328 = vpop.f32.mrb[0].mxu0
  %v329 = vadd.f32 %v68, %v328
  %v330 = vpop.f32.mrb[0].mxu0
  %v331 = vpop.f32.mrb[0].mxu0
  %v332 = vadd.f32 %v68, %v331
  %v333 = vpop.f32.mrb[0].mxu0
  %334 = vmatprep.mubr.bf16.mxu0 %v133
  %335 = vmatmul.mubr.bf16.gmra.mrb[0].mxu0 %v132
  %v336 = vpop.f32.mrb[0].mxu0
  %v337 = vadd.f32 %v68, %v336
  %v338 = vpop.f32.mrb[0].mxu0
  %v339 = vpop.f32.mrb[0].mxu0
  %v340 = vadd.f32 %v68, %v339
  %v341 = vpop.f32.mrb[0].mxu0
  %342 = vdwg.mxu0
  %v343 = vmax.f32 %v281, 0.0
  %v344 = vmax.f32 %v284, 0.0
  %v345 = vmax.f32 %v289, 0.0
  %v346 = vmax.f32 %v292, 0.0
  %v347 = vmax.f32 %v297, 0.0
  %v348 = vmax.f32 %v300, 0.0
  %v349 = vmax.f32 %v305, 0.0
  %v350 = vmax.f32 %v308, 0.0
  %v351 = vmax.f32 %v313, 0.0
  %v352 = vmax.f32 %v316, 0.0
  %v353 = vmax.f32 %v321, 0.0
  %v354 = vmax.f32 %v324, 0.0
  %v355 = vmax.f32 %v329, 0.0
  %v356 = vmax.f32 %v332, 0.0
  %v357 = vmax.f32 %v337, 0.0
  %v358 = vmax.f32 %v340, 0.0
  %v359 = vpack.c.bf16 %v344, %v343
  %v360 = vpack.c.bf16 %v346, %v345
  %v361 = vpack.c.bf16 %v348, %v347
  %v362 = vpack.c.bf16 %v350, %v349
  %v363 = vpack.c.bf16 %v352, %v351
  %v364 = vpack.c.bf16 %v354, %v353
  %v365 = vpack.c.bf16 %v356, %v355
  %v366 = vpack.c.bf16 %v358, %v357
  %v375 = vunpack.c.l.b16 %v359
  %v376 = vunpack.c.h.b16 %v359
  %v377 = vunpack.c.l.b16 %v360
  %v378 = vunpack.c.h.b16 %v360
  %v379 = vunpack.c.l.b16 %v361
  %v380 = vunpack.c.h.b16 %v361
  %v381 = vunpack.c.l.b16 %v362
  %v382 = vunpack.c.h.b16 %v362
  %v383 = vunpack.c.l.b16 %v363
  %v384 = vunpack.c.h.b16 %v363
  %v385 = vunpack.c.l.b16 %v364
  %v386 = vunpack.c.h.b16 %v364
  %v387 = vunpack.c.l.b16 %v365
  %v388 = vunpack.c.h.b16 %v365
  %v389 = vunpack.c.l.b16 %v366
  %v390 = vunpack.c.h.b16 %v366
  %v391 = vpack.c.b16 %v375, %v375
  %v392 = vpack.c.b16 %v376, %v376
  %v393 = vpack.c.b16 %v377, %v377
  %v394 = vpack.c.b16 %v378, %v378
  %v395 = vpack.c.b16 %v379, %v379
  %v396 = vpack.c.b16 %v380, %v380
  %v397 = vpack.c.b16 %v381, %v381
  %v398 = vpack.c.b16 %v382, %v382
  %v399 = vpack.c.b16 %v383, %v383
  %v400 = vpack.c.b16 %v384, %v384
  %v401 = vpack.c.b16 %v385, %v385
  %v402 = vpack.c.b16 %v386, %v386
  %v403 = vpack.c.b16 %v387, %v387
  %v404 = vpack.c.b16 %v388, %v388
  %v405 = vpack.c.b16 %v389, %v389
  %v406 = vpack.c.b16 %v390, %v390
  %423 = vst [vmem:[%s3] sm:$0xf] %v391
  %424 = vst [vmem:[%s3 + $0x4] sm:$0xf] %v392
  %425 = vst [vmem:[%s3 + $0x8] sm:$0xf] %v393
  %426 = vst [vmem:[%s3 + $0xc] sm:$0xf] %v394
  %427 = vst [vmem:[%s3 + $0x10] sm:$0xf] %v395
  %428 = vst [vmem:[%s3 + $0x14] sm:$0xf] %v396
  %429 = vst [vmem:[%s3 + $0x18] sm:$0xf] %v397
  %430 = vst [vmem:[%s3 + $0x1c] sm:$0xf] %v398
  %431 = vst [vmem:[%s3 + $0x20] sm:$0xf] %v399
  %432 = vst [vmem:[%s3 + $0x24] sm:$0xf] %v400
  %433 = vst [vmem:[%s3 + $0x28] sm:$0xf] %v401
  %434 = vst [vmem:[%s3 + $0x2c] sm:$0xf] %v402
  %435 = vst [vmem:[%s3 + $0x30] sm:$0xf] %v403
  %436 = vst [vmem:[%s3 + $0x34] sm:$0xf] %v404
  %437 = vst [vmem:[%s3 + $0x38] sm:$0xf] %v405
  %438 = vst [vmem:[%s3 + $0x3c] sm:$0xf] %v406
  // Predicated region
  $region14: #{vae_forward.14} parent=0 // pred_check
    _
  $region15: #{vae_forward.14} parent=0 // pred_check_branch
    %440 = sbr.rel (0) target = $region17
  $region16: #{vae_forward.14} parent=0 // pred_region
    _
  $region17: #{vae_forward.14} parent=0 // pred_fallthru
    _
  // Predicated region
  $region18: #{vae_forward.14} parent=0 // pred_check
    _
  $region19: #{vae_forward.14} parent=0 // pred_check_branch
    %442 = sbr.rel (0) target = $region21
  $region20: #{vae_forward.14} parent=0 // pred_region
    _
  $region21: #{vae_forward.14} parent=0 // pred_fallthru
    _

// kernel: tile.28
$region0: #{tile.28}
  #allocation0 [shape = 's32[1]{0}', space=sflag, size = 0x4, scoped, tag = 'scoped memory for tile.28']
  %s0 = inlined_call_operand.vmem [shape: f32[3], index: 0, kind: input, shape index: {}]
  %s1 = inlined_call_operand.vmem [shape: f32[4,3], index: 1, kind: output, shape index: {}]
  // Predicated region
  $region2: #{tile.28} parent=0 // pred_check
    _
  $region3: #{tile.28} parent=0 // pred_check_branch
    %3 = sbr.rel (0) target = $region5
  $region4: #{tile.28} parent=0 // pred_region
    _
  $region5: #{tile.28} parent=0 // pred_fallthru
    _
  %v4 = vld [vmem:[%s0] ss:$0 sm:$0xff]
  %5 = vst [vmem:[%s1] sm:$0xf] %v4

// kernel: tile.29
$region0: #{tile.29}
  %s0 = inlined_call_operand.vmem [shape: f32[4,3], index: 0, kind: input, shape index: {}]
  %s1 = inlined_call_operand.vmem [shape: f32[1,12], index: 1, kind: output, shape index: {}]
  $region1: #{tile.29} parent=0
    #allocation0 [shape = 'u8[4096]{0}', space=vmem, size = 0x1000, scoped, tag = 'scoped mem for output reshape']
    #allocation1 [shape = 'u8[4096]{0}', space=vmem, size = 0x1000, scoped, tag = 'scoped mem for input reshape']
    %s3 = sshllo.u32 0, 4
    %v4 = vld [vmem:[%s0] sm:%s3]
    %5 = vst [vmem:[#allocation1] sm:%s3] %v4
    %v6 = vld [vmem:[#allocation1] sm:$0x1]
    %vm7 = vcmask 23552
    %8 = vst.msk [vmem:[#allocation0] sm:$0x1] %vm7, %v6
    %s9 = scalar_lea.vmem [#allocation1], 3
    %v10 = vld [vmem:[%s9] sm:$0x1]
    %11 = vrot.lane.b32.xlu0 %v10, 9
    %v12 = vpop.permute.xlu0 %11
    %vm13 = vcmask 97352
    %14 = vst.msk [vmem:[#allocation0] sm:$0x1] %vm13, %v12
    %s15 = scalar_lea.vmem [#allocation1], 2
    %v16 = vld [vmem:[%s15] sm:$0x1]
    %17 = vrot.lane.b32.xlu0 %v16, 6
    %v18 = vpop.permute.xlu0 %17
    %vm19 = vcmask 72752
    %20 = vst.msk [vmem:[#allocation0] sm:$0x1] %vm19, %v18
    %s21 = scalar_lea.vmem [#allocation1], 1
    %v22 = vld [vmem:[%s21] sm:$0x1]
    %23 = vrot.lane.b32.xlu0 %v22, 3
    %v24 = vpop.permute.xlu0 %23
    %vm25 = vcmask 48152
    %26 = vst.msk [vmem:[#allocation0] sm:$0x1] %vm25, %v24
    %s28 = sshllo.u32 0, 1
    %v30 = vld [vmem:[#allocation0] sm:%s28]
    %s31 = sshllo.u32 0, 1
    %32 = vst [vmem:[%s1] sm:%s31] %v30

// kernel: vae_forward.15
$region0: #{vae_forward.15}
  #allocation0 [shape = 'u32[]', space=smem, size = 0x4, offset = 0x4, fixed_abs, tag = 'smem constant byte address 0x4 - core index']
  #allocation1 [shape = 'u32[144,128]{1,0:T(1,128)}', space=vmem, size = 0x12000, scoped, tag = 'internal scratch']
  %s0 = inlined_call_operand.vmem [shape: bf16[512,128], index: 0, kind: input, shape index: {}]
  %s1 = inlined_call_operand.vmem [shape: bf16[128,12], index: 1, kind: input, shape index: {}]
  %s2 = inlined_call_operand.vmem [shape: f32[1,12], index: 2, kind: input, shape index: {}]
  %s3 = inlined_call_operand.vmem [shape: f32[512,12], index: 3, kind: output, shape index: {}]
  %s4 = sld [smem:[#allocation0]]
  $region45: #{vae_forward.15} parent=0
    _
  %s6 = ssub.s32 1, %s4
  %s7 = scalar_select 0, %s6, %s4
  loop: start=0, step=1, limit=4
  $region2: #{vae_forward.15} parent=0 // loop_pre_header
    _
  $region3: #{vae_forward.15} parent=0 // loop_header
    %s9 = sphi 0, %s13
    %p10 = scmp.ge.s32.totalorder %s9, 4
    %s19 = sphi 0, %s21
    %s22 = sphi 0, %s19
    %s23 = sphi 0, %s22
    %s39 = sphi 0, %s23
    %s43 = sphi 0, %s43
    %s45 = sphi 0, %s43
    %s46 = sphi 0, %s45
    %s60 = sphi 0, %s46
    %s64 = sphi 0, %s64
    %s66 = sphi 0, %s64
    %s67 = sphi 0, %s66
    %s81 = sphi 0, %s67
    %s87 = sphi 0, %s89
    %s90 = sphi 0, %s87
    %s91 = sphi 0, %s90
    %s107 = sphi 0, %s91
  $region4: #{vae_forward.15} parent=0 // loop_header_branch
    %12 = sbr.rel (%p10) target = $region8
  $region5: #{vae_forward.15} parent=0 // loop_body
    %s14 = ssub.s32 %s9, 1
    %s15 = ssub.s32 %s9, 2
    %s16 = sadd.s32 %s9, 1
    %s17 = ssub.s32 %s9, %s16
    %p18 = scmp.eq.s32.totalorder %s17, 0
    %s20 = sadd.s32 %s19, 1
    %s21 = scalar_select %p18, %s19, %s20
    %p24 = pneg %p18
    %p25 = scmp.eq.s32.totalorder %s9, 1
    %p26 = por %p24, %p25
    %p27 = scmp.ne.s32.totalorder %s19, %s22
    %p28 = scmp.eq.s32.totalorder %s9, 0
    %p29 = por %p27, %p28
    %p30 = scmp.ne.s32.totalorder %s19, %s22
    %p31 = scmp.eq.s32.totalorder %s14, 1
    %p32 = por %p30, %p31
    %p33 = scmp.ne.s32.totalorder %s22, %s23
    %p34 = scmp.eq.s32.totalorder %s14, 0
    %p35 = por %p33, %p34
    %p36 = scmp.ne.s32.totalorder %s22, %s23
    %p37 = scmp.eq.s32.totalorder %s15, 1
    %p38 = por %p36, %p37
    %p40 = scmp.ne.s32.totalorder %s23, %s39
    %p41 = scmp.eq.s32.totalorder %s15, 0
    %p42 = por %p40, %p41
    %s44 = sadd.s32 %s43, 1
    %p47 = scmp.eq.s32.totalorder %s9, 1
    %p48 = scmp.ne.s32.totalorder %s43, %s45
    %p49 = scmp.eq.s32.totalorder %s9, 0
    %p50 = por %p48, %p49
    %p51 = scmp.ne.s32.totalorder %s43, %s45
    %p52 = scmp.eq.s32.totalorder %s14, 1
    %p53 = por %p51, %p52
    %p54 = scmp.ne.s32.totalorder %s45, %s46
    %p55 = scmp.eq.s32.totalorder %s14, 0
    %p56 = por %p54, %p55
    %p57 = scmp.ne.s32.totalorder %s45, %s46
    %p58 = scmp.eq.s32.totalorder %s15, 1
    %p59 = por %p57, %p58
    %p61 = scmp.ne.s32.totalorder %s46, %s60
    %p62 = scmp.eq.s32.totalorder %s15, 0
    %p63 = por %p61, %p62
    %s65 = sadd.s32 %s64, 1
    %p68 = scmp.eq.s32.totalorder %s9, 1
    %p69 = scmp.ne.s32.totalorder %s64, %s66
    %p70 = scmp.eq.s32.totalorder %s9, 0
    %p71 = por %p69, %p70
    %p72 = scmp.ne.s32.totalorder %s64, %s66
    %p73 = scmp.eq.s32.totalorder %s14, 1
    %p74 = por %p72, %p73
    %p75 = scmp.ne.s32.totalorder %s66, %s67
    %p76 = scmp.eq.s32.totalorder %s14, 0
    %p77 = por %p75, %p76
    %p78 = scmp.ne.s32.totalorder %s66, %s67
    %p79 = scmp.eq.s32.totalorder %s15, 1
    %p80 = por %p78, %p79
    %p82 = scmp.ne.s32.totalorder %s67, %s81
    %p83 = scmp.eq.s32.totalorder %s15, 0
    %p84 = por %p82, %p83
    %s85 = ssub.s32 %s9, %s16
    %p86 = scmp.eq.s32.totalorder %s85, 0
    %s88 = sadd.s32 %s87, 1
    %s89 = scalar_select %p86, %s87, %s88
    %p92 = pneg %p86
    %p93 = scmp.eq.s32.totalorder %s9, 1
    %p94 = por %p92, %p93
    %p95 = scmp.ne.s32.totalorder %s87, %s90
    %p96 = scmp.eq.s32.totalorder %s9, 0
    %p97 = por %p95, %p96
    %p98 = scmp.ne.s32.totalorder %s87, %s90
    %p99 = scmp.eq.s32.totalorder %s14, 1
    %p100 = por %p98, %p99
    %p101 = scmp.ne.s32.totalorder %s90, %s91
    %p102 = scmp.eq.s32.totalorder %s14, 0
    %p103 = por %p101, %p102
    %p104 = scmp.ne.s32.totalorder %s90, %s91
    %p105 = scmp.eq.s32.totalorder %s15, 1
    %p106 = por %p104, %p105
    %p108 = scmp.ne.s32.totalorder %s91, %s107
    %p109 = scmp.eq.s32.totalorder %s15, 0
    %p110 = por %p108, %p109
    %p111 = scmp.le.s32.totalorder 1, %s9
    %p112 = scmp.lt.s32.totalorder %s9, 3
    %p113 = pnand %p111, %p112
    %p114 = pneg %p113
    // Predicated region
    $region9: #{vae_forward.15} parent=5 // pred_check
      _
    $region10: #{vae_forward.15} parent=5 // pred_check_branch
      %116 = sbr.rel (%p113) target = $region12
    $region11: #{vae_forward.15} parent=5 // pred_region
      %s117 = ssub.s32 %s9, 1
      // Predicated region
      $region13: #{vae_forward.15} parent=11 // pred_check
        %p118 = pneg %p56
      $region14: #{vae_forward.15} parent=11 // pred_check_branch
        %120 = sbr.rel (%p118) target = $region16
      $region15: #{vae_forward.15} parent=11 // pred_region
        _
      $region16: #{vae_forward.15} parent=11 // pred_fallthru
        _
      // Predicated region
      $region17: #{vae_forward.15} parent=11 // pred_check
        %p121 = pneg %p77
      $region18: #{vae_forward.15} parent=11 // pred_check_branch
        %123 = sbr.rel (%p121) target = $region20
      $region19: #{vae_forward.15} parent=11 // pred_region
        _
      $region20: #{vae_forward.15} parent=11 // pred_fallthru
        _
    $region12: #{vae_forward.15} parent=5 // pred_fallthru
      _
    %p124 = scmp.lt.s32.totalorder %s9, 2
    // Predicated region
    $region21: #{vae_forward.15} parent=5 // pred_check
      %p125 = pneg %p124
    $region22: #{vae_forward.15} parent=5 // pred_check_branch
      %127 = sbr.rel (%p125) target = $region24
    $region23: #{vae_forward.15} parent=5 // pred_region
      // Predicated region
      $region25: #{vae_forward.15} parent=23 // pred_check
        %p128 = pneg %p29
      $region26: #{vae_forward.15} parent=23 // pred_check_branch
        %130 = sbr.rel (%p128) target = $region28
      $region27: #{vae_forward.15} parent=23 // pred_region
        %s131 = smul.u32 32, %s9
        %p132 = scmp.lt.s32.totalorder %s131, 63
        %s133 = scalar_select %p132, %s131, 63
        %s134 = smul.addr %s133, 4
        %s135 = scalar_lea.vmem %s0, %s134
        %s136 = smul.u32 32, %s9
      $region28: #{vae_forward.15} parent=23 // pred_fallthru
        _
    $region24: #{vae_forward.15} parent=5 // pred_fallthru
      _
    %p137 = scmp.le.s32.totalorder 1, %s9
    %p138 = scmp.lt.s32.totalorder %s9, 3
    %p139 = pnand %p137, %p138
    %p140 = pneg %p139
    // Predicated region
    $region29: #{vae_forward.15} parent=5 // pred_check
      _
    $region30: #{vae_forward.15} parent=5 // pred_check_branch
      %142 = sbr.rel (%p139) target = $region32
    $region31: #{vae_forward.15} parent=5 // pred_region
      %s143 = ssub.s32 %s9, 1
      %s144 = smul.u32 32, %s14
      %p145 = scmp.lt.s32.totalorder %s144, 63
      %s146 = scalar_select %p145, %s144, 63
      %s147 = smul.addr %s146, 4
      %s148 = scalar_lea.vmem %s0, %s147
      %p149 = pneg %p35
      %p150 = pneg %p32
      %p151 = pneg %p56
      %p152 = pneg %p53
      %p153 = pneg %p77
      %p154 = pneg %p74
      %p155 = pneg %p103
      %p156 = pneg %p100
      %s157 = smul.u32 32, %s14
      %p158 = scmp.lt.s32.totalorder %s157, 63
      %s159 = scalar_select %p158, %s157, 63
      %s160 = smul.addr %s159, 8
      %s161 = scalar_lea.vmem %s3, %s160
      %s162 = smul.u32 32, %s14
      %p163 = scmp.lt.s32.totalorder %s162, 63
      %s164 = scalar_select %p163, %s162, 63
      %s165 = smul.addr %s164, 4
      %s166 = scalar_lea.vmem %s0, %s165
      %s167 = smul.u32 32, %s14
      %s168 = smul.u32 32, %s14
      %p169 = scmp.lt.s32.totalorder %s168, 63
      %s170 = scalar_select %p169, %s168, 63
      %s171 = smul.addr %s170, 8
      %s172 = scalar_lea.vmem %s3, %s171
      %s173 = smul.u32 32, %s14
      %v175 = vld [vmem:[%s166] sm:$0xf]
      %v176 = vld [vmem:[%s166 + $0x4] sm:$0xf]
      %v177 = vld [vmem:[%s166 + $0x8] sm:$0xf]
      %v178 = vld [vmem:[%s166 + $0xc] sm:$0xf]
      %v179 = vld [vmem:[%s166 + $0x10] sm:$0xf]
      %v180 = vld [vmem:[%s166 + $0x14] sm:$0xf]
      %v181 = vld [vmem:[%s166 + $0x18] sm:$0xf]
      %v182 = vld [vmem:[%s166 + $0x1c] sm:$0xf]
      %v183 = vld [vmem:[%s166 + $0x20] sm:$0xf]
      %v184 = vld [vmem:[%s166 + $0x24] sm:$0xf]
      %v185 = vld [vmem:[%s166 + $0x28] sm:$0xf]
      %v186 = vld [vmem:[%s166 + $0x2c] sm:$0xf]
      %v187 = vld [vmem:[%s166 + $0x30] sm:$0xf]
      %v188 = vld [vmem:[%s166 + $0x34] sm:$0xf]
      %v189 = vld [vmem:[%s166 + $0x38] sm:$0xf]
      %v190 = vld [vmem:[%s166 + $0x3c] sm:$0xf]
      %v191 = vld [vmem:[%s166 + $0x40] sm:$0xf]
      %v192 = vld [vmem:[%s166 + $0x44] sm:$0xf]
      %v193 = vld [vmem:[%s166 + $0x48] sm:$0xf]
      %v194 = vld [vmem:[%s166 + $0x4c] sm:$0xf]
      %v195 = vld [vmem:[%s166 + $0x50] sm:$0xf]
      %v196 = vld [vmem:[%s166 + $0x54] sm:$0xf]
      %v197 = vld [vmem:[%s166 + $0x58] sm:$0xf]
      %v198 = vld [vmem:[%s166 + $0x5c] sm:$0xf]
      %v199 = vld [vmem:[%s166 + $0x60] sm:$0xf]
      %v200 = vld [vmem:[%s166 + $0x64] sm:$0xf]
      %v201 = vld [vmem:[%s166 + $0x68] sm:$0xf]
      %v202 = vld [vmem:[%s166 + $0x6c] sm:$0xf]
      %v203 = vld [vmem:[%s166 + $0x70] sm:$0xf]
      %v204 = vld [vmem:[%s166 + $0x74] sm:$0xf]
      %v205 = vld [vmem:[%s166 + $0x78] sm:$0xf]
      %v206 = vld [vmem:[%s166 + $0x7c] sm:$0xf]
      %v207 = vld [vmem:[%s1] sm:$0xf]
      %v208 = vld [vmem:[%s1 + $0x4] sm:$0xf]
      %v209 = vld [vmem:[%s1 + $0x8] sm:$0xf]
      %v210 = vld [vmem:[%s1 + $0xc] sm:$0xf]
      %v211 = vld [vmem:[%s1 + $0x10] sm:$0xf]
      %v212 = vld [vmem:[%s1 + $0x14] sm:$0xf]
      %v213 = vld [vmem:[%s1 + $0x18] sm:$0xf]
      %v214 = vld [vmem:[%s1 + $0x1c] sm:$0xf]
      %v215 = vld [vmem:[%s1 + $0x20] sm:$0xf]
      %v216 = vld [vmem:[%s1 + $0x24] sm:$0xf]
      %v217 = vld [vmem:[%s1 + $0x28] sm:$0xf]
      %v218 = vld [vmem:[%s1 + $0x2c] sm:$0xf]
      %v219 = vld [vmem:[%s1 + $0x30] sm:$0xf]
      %v220 = vld [vmem:[%s1 + $0x34] sm:$0xf]
      %v221 = vld [vmem:[%s1 + $0x38] sm:$0xf]
      %v222 = vld [vmem:[%s1 + $0x3c] sm:$0xf]
      %v223 = vld [vmem:[%s2] sm:$0x1]
      %v225 = vlaneseq
      %v226 = vshrl.u32 %v225, 7
      %v227 = vsub.s32 0, %v226
      %v228 = vrot.slane %v223, %v227
      %v262 = vunpack.c.l.b16 %v175
      %v263 = vunpack.c.l.b16 %v176
      %v264 = vunpack.c.l.b16 %v177
      %v265 = vunpack.c.l.b16 %v178
      %v266 = vunpack.c.l.b16 %v179
      %v267 = vunpack.c.l.b16 %v180
      %v268 = vunpack.c.l.b16 %v181
      %v269 = vunpack.c.l.b16 %v182
      %v270 = vunpack.c.l.b16 %v183
      %v271 = vunpack.c.l.b16 %v184
      %v272 = vunpack.c.l.b16 %v185
      %v273 = vunpack.c.l.b16 %v186
      %v274 = vunpack.c.l.b16 %v187
      %v275 = vunpack.c.l.b16 %v188
      %v276 = vunpack.c.l.b16 %v189
      %v277 = vunpack.c.l.b16 %v190
      %v278 = vunpack.c.l.b16 %v191
      %v279 = vunpack.c.l.b16 %v192
      %v280 = vunpack.c.l.b16 %v193
      %v281 = vunpack.c.l.b16 %v194
      %v282 = vunpack.c.l.b16 %v195
      %v283 = vunpack.c.l.b16 %v196
      %v284 = vunpack.c.l.b16 %v197
      %v285 = vunpack.c.l.b16 %v198
      %v286 = vunpack.c.l.b16 %v199
      %v287 = vunpack.c.l.b16 %v200
      %v288 = vunpack.c.l.b16 %v201
      %v289 = vunpack.c.l.b16 %v202
      %v290 = vunpack.c.l.b16 %v203
      %v291 = vunpack.c.l.b16 %v204
      %v292 = vunpack.c.l.b16 %v205
      %v293 = vunpack.c.l.b16 %v206
      %v294 = vpack.c.b16 %v263, %v262
      %v295 = vpack.c.b16 %v265, %v264
      %v296 = vpack.c.b16 %v267, %v266
      %v297 = vpack.c.b16 %v269, %v268
      %v298 = vpack.c.b16 %v271, %v270
      %v299 = vpack.c.b16 %v273, %v272
      %v300 = vpack.c.b16 %v275, %v274
      %v301 = vpack.c.b16 %v277, %v276
      %v302 = vpack.c.b16 %v279, %v278
      %v303 = vpack.c.b16 %v281, %v280
      %v304 = vpack.c.b16 %v283, %v282
      %v305 = vpack.c.b16 %v285, %v284
      %v306 = vpack.c.b16 %v287, %v286
      %v307 = vpack.c.b16 %v289, %v288
      %v308 = vpack.c.b16 %v291, %v290
      %v309 = vpack.c.b16 %v293, %v292
      %v342 = vunpack.c.l.b16 %v207
      %v343 = vunpack.c.l.b16 %v208
      %v344 = vunpack.c.l.b16 %v209
      %v345 = vunpack.c.l.b16 %v210
      %v346 = vunpack.c.l.b16 %v211
      %v347 = vunpack.c.l.b16 %v212
      %v348 = vunpack.c.l.b16 %v213
      %v349 = vunpack.c.l.b16 %v214
      %v350 = vunpack.c.l.b16 %v215
      %v351 = vunpack.c.l.b16 %v216
      %v352 = vunpack.c.l.b16 %v217
      %v353 = vunpack.c.l.b16 %v218
      %v354 = vunpack.c.l.b16 %v219
      %v355 = vunpack.c.l.b16 %v220
      %v356 = vunpack.c.l.b16 %v221
      %v357 = vunpack.c.l.b16 %v222
      %v358 = vpack.c.b16 %v343, %v342
      %v359 = vpack.c.b16 %v345, %v344
      %v360 = vpack.c.b16 %v347, %v346
      %v361 = vpack.c.b16 %v349, %v348
      %v362 = vpack.c.b16 %v351, %v350
      %v363 = vpack.c.b16 %v353, %v352
      %v364 = vpack.c.b16 %v355, %v354
      %v365 = vpack.c.b16 %v357, %v356
      %374 = vmatprep.subr.bf16.mxu0 0
      %375 = vmatpush1.bf16.msra.mxu0 %v358
      %376 = vmatprep.subr.bf16.mxu0 0
      %377 = vmatpush1.bf16.msra.mxu0 %v359
      %378 = vmatprep.subr.bf16.mxu0 0
      %379 = vmatpush1.bf16.msra.mxu0 %v360
      %380 = vmatprep.subr.bf16.mxu0 0
      %381 = vmatpush1.bf16.msra.mxu0 %v361
      %382 = vmatprep.subr.bf16.mxu0 0
      %383 = vmatpush1.bf16.msra.mxu0 %v362
      %384 = vmatprep.subr.bf16.mxu0 0
      %385 = vmatpush1.bf16.msra.mxu0 %v363
      %386 = vmatprep.subr.bf16.mxu0 0
      %387 = vmatpush1.bf16.msra.mxu0 %v364
      %388 = vmatprep.subr.bf16.mxu0 0
      %389 = vmatpush1.bf16.msra.mxu0 %v365
      %390 = vmatprep.subr.bf16.mxu0 0
      %391 = vmatpush1.bf16.msra.mxu0 0
      %392 = vmatprep.subr.bf16.mxu0 0
      %393 = vmatpush1.bf16.msra.mxu0 0
      %394 = vmatprep.subr.bf16.mxu0 0
      %395 = vmatpush1.bf16.msra.mxu0 0
      %396 = vmatprep.subr.bf16.mxu0 0
      %397 = vmatpush1.bf16.msra.mxu0 0
      %398 = vmatprep.subr.bf16.mxu0 0
      %399 = vmatpush1.bf16.msra.mxu0 0
      %400 = vmatprep.subr.bf16.mxu0 0
      %401 = vmatpush1.bf16.msra.mxu0 0
      %402 = vmatprep.subr.bf16.mxu0 0
      %403 = vmatpush1.bf16.msra.mxu0 0
      %404 = vmatprep.subr.bf16.mxu0 0
      %405 = vmatpush1.bf16.msra.mxu0 0
      %406 = vmatprep.mubr.bf16.mxu0 0
      %407 = vmatmul.mubr.bf16.gmra.mrb[0].mxu0 %v294
      %v408 = vpop.f32.mrb[0].mxu0
      %v409 = vadd.f32 %v228, %v408
      %v410 = vpop.f32.mrb[0].mxu0
      %v411 = vpop.f32.mrb[0].mxu0
      %v412 = vadd.f32 %v228, %v411
      %v413 = vpop.f32.mrb[0].mxu0
      %414 = vmatprep.mubr.bf16.mxu0 0
      %415 = vmatmul.mubr.bf16.gmra.mrb[0].mxu0 %v295
      %v416 = vpop.f32.mrb[0].mxu0
      %v417 = vadd.f32 %v228, %v416
      %v418 = vpop.f32.mrb[0].mxu0
      %v419 = vpop.f32.mrb[0].mxu0
      %v420 = vadd.f32 %v228, %v419
      %v421 = vpop.f32.mrb[0].mxu0
      %422 = vmatprep.mubr.bf16.mxu0 0
      %423 = vmatmul.mubr.bf16.gmra.mrb[0].mxu0 %v296
      %v424 = vpop.f32.mrb[0].mxu0
      %v425 = vadd.f32 %v228, %v424
      %v426 = vpop.f32.mrb[0].mxu0
      %v427 = vpop.f32.mrb[0].mxu0
      %v428 = vadd.f32 %v228, %v427
      %v429 = vpop.f32.mrb[0].mxu0
      %430 = vmatprep.mubr.bf16.mxu0 0
      %431 = vmatmul.mubr.bf16.gmra.mrb[0].mxu0 %v297
      %v432 = vpop.f32.mrb[0].mxu0
      %v433 = vadd.f32 %v228, %v432
      %v434 = vpop.f32.mrb[0].mxu0
      %v435 = vpop.f32.mrb[0].mxu0
      %v436 = vadd.f32 %v228, %v435
      %v437 = vpop.f32.mrb[0].mxu0
      %438 = vmatprep.mubr.bf16.mxu0 0
      %439 = vmatmul.mubr.bf16.gmra.mrb[0].mxu0 %v298
      %v440 = vpop.f32.mrb[0].mxu0
      %v441 = vadd.f32 %v228, %v440
      %v442 = vpop.f32.mrb[0].mxu0
      %v443 = vpop.f32.mrb[0].mxu0
      %v444 = vadd.f32 %v228, %v443
      %v445 = vpop.f32.mrb[0].mxu0
      %446 = vmatprep.mubr.bf16.mxu0 0
      %447 = vmatmul.mubr.bf16.gmra.mrb[0].mxu0 %v299
      %v448 = vpop.f32.mrb[0].mxu0
      %v449 = vadd.f32 %v228, %v448
      %v450 = vpop.f32.mrb[0].mxu0
      %v451 = vpop.f32.mrb[0].mxu0
      %v452 = vadd.f32 %v228, %v451
      %v453 = vpop.f32.mrb[0].mxu0
      %454 = vmatprep.mubr.bf16.mxu0 0
      %455 = vmatmul.mubr.bf16.gmra.mrb[0].mxu0 %v300
      %v456 = vpop.f32.mrb[0].mxu0
      %v457 = vadd.f32 %v228, %v456
      %v458 = vpop.f32.mrb[0].mxu0
      %v459 = vpop.f32.mrb[0].mxu0
      %v460 = vadd.f32 %v228, %v459
      %v461 = vpop.f32.mrb[0].mxu0
      %462 = vmatprep.mubr.bf16.mxu0 0
      %463 = vmatmul.mubr.bf16.gmra.mrb[0].mxu0 %v301
      %v464 = vpop.f32.mrb[0].mxu0
      %v465 = vadd.f32 %v228, %v464
      %v466 = vpop.f32.mrb[0].mxu0
      %v467 = vpop.f32.mrb[0].mxu0
      %v468 = vadd.f32 %v228, %v467
      %v469 = vpop.f32.mrb[0].mxu0
      %470 = vmatprep.mubr.bf16.mxu0 0
      %471 = vmatmul.mubr.bf16.gmra.mrb[0].mxu0 %v302
      %v472 = vpop.f32.mrb[0].mxu0
      %v473 = vadd.f32 %v228, %v472
      %v474 = vpop.f32.mrb[0].mxu0
      %v475 = vpop.f32.mrb[0].mxu0
      %v476 = vadd.f32 %v228, %v475
      %v477 = vpop.f32.mrb[0].mxu0
      %478 = vmatprep.mubr.bf16.mxu0 0
      %479 = vmatmul.mubr.bf16.gmra.mrb[0].mxu0 %v303
      %v480 = vpop.f32.mrb[0].mxu0
      %v481 = vadd.f32 %v228, %v480
      %v482 = vpop.f32.mrb[0].mxu0
      %v483 = vpop.f32.mrb[0].mxu0
      %v484 = vadd.f32 %v228, %v483
      %v485 = vpop.f32.mrb[0].mxu0
      %486 = vmatprep.mubr.bf16.mxu0 0
      %487 = vmatmul.mubr.bf16.gmra.mrb[0].mxu0 %v304
      %v488 = vpop.f32.mrb[0].mxu0
      %v489 = vadd.f32 %v228, %v488
      %v490 = vpop.f32.mrb[0].mxu0
      %v491 = vpop.f32.mrb[0].mxu0
      %v492 = vadd.f32 %v228, %v491
      %v493 = vpop.f32.mrb[0].mxu0
      %494 = vmatprep.mubr.bf16.mxu0 0
      %495 = vmatmul.mubr.bf16.gmra.mrb[0].mxu0 %v305
      %v496 = vpop.f32.mrb[0].mxu0
      %v497 = vadd.f32 %v228, %v496
      %v498 = vpop.f32.mrb[0].mxu0
      %v499 = vpop.f32.mrb[0].mxu0
      %v500 = vadd.f32 %v228, %v499
      %v501 = vpop.f32.mrb[0].mxu0
      %502 = vmatprep.mubr.bf16.mxu0 0
      %503 = vmatmul.mubr.bf16.gmra.mrb[0].mxu0 %v306
      %v504 = vpop.f32.mrb[0].mxu0
      %v505 = vadd.f32 %v228, %v504
      %v506 = vpop.f32.mrb[0].mxu0
      %v507 = vpop.f32.mrb[0].mxu0
      %v508 = vadd.f32 %v228, %v507
      %v509 = vpop.f32.mrb[0].mxu0
      %510 = vmatprep.mubr.bf16.mxu0 0
      %511 = vmatmul.mubr.bf16.gmra.mrb[0].mxu0 %v307
      %v512 = vpop.f32.mrb[0].mxu0
      %v513 = vadd.f32 %v228, %v512
      %v514 = vpop.f32.mrb[0].mxu0
      %v515 = vpop.f32.mrb[0].mxu0
      %v516 = vadd.f32 %v228, %v515
      %v517 = vpop.f32.mrb[0].mxu0
      %518 = vmatprep.mubr.bf16.mxu0 0
      %519 = vmatmul.mubr.bf16.gmra.mrb[0].mxu0 %v308
      %v520 = vpop.f32.mrb[0].mxu0
      %v521 = vadd.f32 %v228, %v520
      %v522 = vpop.f32.mrb[0].mxu0
      %v523 = vpop.f32.mrb[0].mxu0
      %v524 = vadd.f32 %v228, %v523
      %v525 = vpop.f32.mrb[0].mxu0
      %526 = vmatprep.mubr.bf16.mxu0 0
      %527 = vmatmul.mubr.bf16.gmra.mrb[0].mxu0 %v309
      %v528 = vpop.f32.mrb[0].mxu0
      %v529 = vadd.f32 %v228, %v528
      %v530 = vpop.f32.mrb[0].mxu0
      %v531 = vpop.f32.mrb[0].mxu0
      %v532 = vadd.f32 %v228, %v531
      %v533 = vpop.f32.mrb[0].mxu0
      %534 = vdwg.mxu0
      %v535 = vtanh.pop %v409
      %v536 = vtanh.pop %v412
      %v537 = vtanh.pop %v417
      %v538 = vtanh.pop %v420
      %v539 = vtanh.pop %v425
      %v540 = vtanh.pop %v428
      %v541 = vtanh.pop %v433
      %v542 = vtanh.pop %v436
      %v543 = vtanh.pop %v441
      %v544 = vtanh.pop %v444
      %v545 = vtanh.pop %v449
      %v546 = vtanh.pop %v452
      %v547 = vtanh.pop %v457
      %v548 = vtanh.pop %v460
      %v549 = vtanh.pop %v465
      %v550 = vtanh.pop %v468
      %v551 = vtanh.pop %v473
      %v552 = vtanh.pop %v476
      %v553 = vtanh.pop %v481
      %v554 = vtanh.pop %v484
      %v555 = vtanh.pop %v489
      %v556 = vtanh.pop %v492
      %v557 = vtanh.pop %v497
      %v558 = vtanh.pop %v500
      %v559 = vtanh.pop %v505
      %v560 = vtanh.pop %v508
      %v561 = vtanh.pop %v513
      %v562 = vtanh.pop %v516
      %v563 = vtanh.pop %v521
      %v564 = vtanh.pop %v524
      %v565 = vtanh.pop %v529
      %v566 = vtanh.pop %v532
      %vm567 = vcmask 97280
      %568 = vst.msk [vmem:[%s172] sm:$0xff] %vm567, %v535
      %569 = vst.msk [vmem:[%s172 + $0x8] sm:$0xff] %vm567, %v536
      %570 = vst.msk [vmem:[%s172 + $0x10] sm:$0xff] %vm567, %v537
      %571 = vst.msk [vmem:[%s172 + $0x18] sm:$0xff] %vm567, %v538
      %572 = vst.msk [vmem:[%s172 + $0x20] sm:$0xff] %vm567, %v539
      %573 = vst.msk [vmem:[%s172 + $0x28] sm:$0xff] %vm567, %v540
      %574 = vst.msk [vmem:[%s172 + $0x30] sm:$0xff] %vm567, %v541
      %575 = vst.msk [vmem:[%s172 + $0x38] sm:$0xff] %vm567, %v542
      %576 = vst.msk [vmem:[%s172 + $0x40] sm:$0xff] %vm567, %v543
      %577 = vst.msk [vmem:[%s172 + $0x48] sm:$0xff] %vm567, %v544
      %578 = vst.msk [vmem:[%s172 + $0x50] sm:$0xff] %vm567, %v545
      %579 = vst.msk [vmem:[%s172 + $0x58] sm:$0xff] %vm567, %v546
      %580 = vst.msk [vmem:[%s172 + $0x60] sm:$0xff] %vm567, %v547
      %581 = vst.msk [vmem:[%s172 + $0x68] sm:$0xff] %vm567, %v548
      %582 = vst.msk [vmem:[%s172 + $0x70] sm:$0xff] %vm567, %v549
      %583 = vst.msk [vmem:[%s172 + $0x78] sm:$0xff] %vm567, %v550
      %584 = vst.msk [vmem:[%s172 + $0x80] sm:$0xff] %vm567, %v551
      %585 = vst.msk [vmem:[%s172 + $0x88] sm:$0xff] %vm567, %v552
      %586 = vst.msk [vmem:[%s172 + $0x90] sm:$0xff] %vm567, %v553
      %587 = vst.msk [vmem:[%s172 + $0x98] sm:$0xff] %vm567, %v554
      %588 = vst.msk [vmem:[%s172 + $0xa0] sm:$0xff] %vm567, %v555
      %589 = vst.msk [vmem:[%s172 + $0xa8] sm:$0xff] %vm567, %v556
      %590 = vst.msk [vmem:[%s172 + $0xb0] sm:$0xff] %vm567, %v557
      %591 = vst.msk [vmem:[%s172 + $0xb8] sm:$0xff] %vm567, %v558
      %592 = vst.msk [vmem:[%s172 + $0xc0] sm:$0xff] %vm567, %v559
      %593 = vst.msk [vmem:[%s172 + $0xc8] sm:$0xff] %vm567, %v560
      %594 = vst.msk [vmem:[%s172 + $0xd0] sm:$0xff] %vm567, %v561
      %595 = vst.msk [vmem:[%s172 + $0xd8] sm:$0xff] %vm567, %v562
      %596 = vst.msk [vmem:[%s172 + $0xe0] sm:$0xff] %vm567, %v563
      %597 = vst.msk [vmem:[%s172 + $0xe8] sm:$0xff] %vm567, %v564
      %598 = vst.msk [vmem:[%s172 + $0xf0] sm:$0xff] %vm567, %v565
      %599 = vst.msk [vmem:[%s172 + $0xf8] sm:$0xff] %vm567, %v566
      %s600 = smul.u32 32, %s14
      %p601 = scmp.lt.s32.totalorder %s600, 63
      %s602 = scalar_select %p601, %s600, 63
      %s603 = smul.addr %s602, 8
      %s604 = scalar_lea.vmem %s3, %s603
      // Predicated region
      $region33: #{vae_forward.15} parent=31 // pred_check
        %p605 = pneg %p100
      $region34: #{vae_forward.15} parent=31 // pred_check_branch
        %607 = sbr.rel (%p605) target = $region36
      $region35: #{vae_forward.15} parent=31 // pred_region
        %s608 = smul.u32 32, %s14
      $region36: #{vae_forward.15} parent=31 // pred_fallthru
        _
    $region32: #{vae_forward.15} parent=5 // pred_fallthru
      _
    %p609 = scmp.le.s32.totalorder 2, %s9
    // Predicated region
    $region37: #{vae_forward.15} parent=5 // pred_check
      %p610 = pneg %p609
    $region38: #{vae_forward.15} parent=5 // pred_check_branch
      %612 = sbr.rel (%p610) target = $region40
    $region39: #{vae_forward.15} parent=5 // pred_region
      %s613 = ssub.s32 %s9, 2
      // Predicated region
      $region41: #{vae_forward.15} parent=39 // pred_check
        %p614 = pneg %p106
      $region42: #{vae_forward.15} parent=39 // pred_check_branch
        %616 = sbr.rel (%p614) target = $region44
      $region43: #{vae_forward.15} parent=39 // pred_region
        %s617 = smul.u32 32, %s15
        %p618 = scmp.lt.s32.totalorder %s617, 63
        %s619 = scalar_select %p618, %s617, 63
        %s620 = smul.addr %s619, 8
        %s621 = scalar_lea.vmem %s3, %s620
      $region44: #{vae_forward.15} parent=39 // pred_fallthru
        _
    $region40: #{vae_forward.15} parent=5 // pred_fallthru
      _
  $region6: #{vae_forward.15} parent=0 // loop_footer
    %s13 = sadd.s32 1, %s9
  $region7: #{vae_forward.15} parent=0 // loop_footer_branch
    %8 = sbr.rel target = $region3
  $region8: #{vae_forward.15} parent=0 // loop_exit
    _

</llo_original>
